<compile_context>
chip_gen: v5e
topology: v5e:2x2
jax: 0.10.0
libtpu: 0.0.40
codegen_flags: <defaults>
</compile_context>

<pallas_src>
import functools
import math

import jax
import jax.numpy as jnp
import numpy as np
from jax.experimental import pallas as pl
from jax.experimental.pallas import tpu as pltpu


def encoder_layer_kernel(q_in, k_in, v_in,
                         wq, bq, wk, bk, wv, bv, wo, bo,
                         ln1_g, ln1_b,
                         w1, b1, w2, b2,
                         ln2_g, ln2_b,
                         out_ref,
                         kT_ref, v_ref,
                         *, h, d_k, d_v, eps, mm_dtype, approx_recip):
    f32 = jnp.float32
    x_q = q_in[0]                                    # (TQ, D) query-row tile

    # ---- K/V projections: computed once per batch element (first row tile) and
    # cached in persistent VMEM scratch.
    # CORRECTNESS INVARIANT: this caching relies on grid axis 1 (query-row tiles)
    # being the innermost, sequentially iterated ("arbitrary") axis, so every
    # (b, i>0) step runs on the same core after (b, 0).  Do not mark axis 1
    # "parallel" or reorder the grid without removing this cache.
    @pl.when(pl.program_id(1) == 0)
    def _():
        kk = jnp.dot(k_in[0].astype(mm_dtype), wk[...],
                     preferred_element_type=f32) + bk[...]          # (Nk, h*d_k)
        vv = jnp.dot(v_in[0].astype(mm_dtype), wv[...],
                     preferred_element_type=f32) + bv[...]          # (Nk, h*d_v)
        for i in range(h):
            # K stored pre-transposed -> lane-dense (d_k, Nk) slabs; one XLU
            # transpose per head per batch element (not per query tile).
            kT_ref[i] = kk[:, i * d_k:(i + 1) * d_k].T.astype(mm_dtype)
            v_ref[i] = vv[:, i * d_v:(i + 1) * d_v].astype(mm_dtype)

    # ---- Q projection (1/sqrt(d_k) pre-folded into wq/bq by the wrapper).
    q = jnp.dot(x_q.astype(mm_dtype), wq[...],
                preferred_element_type=f32) + bq[...]               # (TQ, h*d_k)

    # ---- per-head attention; per-head Q stays as register lane slices
    # (no VMEM scratch round trip).
    ctx = []
    for i in range(h):
        q_h = q[:, i * d_k:(i + 1) * d_k].astype(mm_dtype)          # (TQ, d_k)
        s = jnp.dot(q_h, kT_ref[i], preferred_element_type=f32)     # (TQ, Nk)
        s = s - jnp.max(s, axis=-1, keepdims=True)
        p = jnp.exp(s)
        denom = jnp.sum(p, axis=-1, keepdims=True)
        if approx_recip:
            # Deviation from exact softmax (rel err ~1e-3..1e-4); opt-in only.
            p = p * pl.reciprocal(denom, approx=True)
        else:
            p = p / denom
        ctx.append(jnp.dot(p.astype(mm_dtype), v_ref[i],
                           preferred_element_type=f32))             # (TQ, d_v)

    # ---- fused output projection: single K = h*d_v full-depth matmul.
    o_cat = jnp.concatenate(ctx, axis=-1)                           # (TQ, h*d_v)
    att = jnp.dot(o_cat.astype(mm_dtype), wo[...],
                  preferred_element_type=f32) + bo[...]             # (TQ, D)

    # ---- residual + LayerNorm 1 (dropout == identity in eval mode)
    y = x_q.astype(f32) + att
    mu = jnp.mean(y, axis=-1, keepdims=True)
    yc = y - mu
    var = jnp.mean(yc * yc, axis=-1, keepdims=True)
    y = yc * jax.lax.rsqrt(var + eps) * ln1_g[...] + ln1_b[...]

    # ---- position-wise feed-forward
    hid = jnp.dot(y.astype(mm_dtype), w1[...],
                  preferred_element_type=f32) + b1[...]
    hid = jnp.maximum(hid, 0.0)                                     # ReLU
    ff = jnp.dot(hid.astype(mm_dtype), w2[...],
                 preferred_element_type=f32) + b2[...]

    # ---- residual + LayerNorm 2
    z = y + ff
    mu2 = jnp.mean(z, axis=-1, keepdims=True)
    zc = z - mu2
    var2 = jnp.mean(zc * zc, axis=-1, keepdims=True)
    z = zc * jax.lax.rsqrt(var2 + eps) * ln2_g[...] + ln2_b[...]

    out_ref[0] = z.astype(out_ref.dtype)


def _padded_nbytes(shape, dtype):
    """Rough VMEM footprint with (8, 128) tile padding of the last two dims."""
    s = list(shape) if shape else [1]
    s[-1] = -(-s[-1] // 128) * 128
    if len(s) >= 2:
        s[-2] = -(-s[-2] // 8) * 8
    return int(np.prod(s)) * jnp.dtype(dtype).itemsize


def encoder_layer(queries, keys, values, params, *, h, d_k, d_v,
                  eps=1e-5, q_tile=None, matmul_dtype=jnp.bfloat16,
                  approx_softmax_recip=False):
    B, Nq, D = queries.shape
    Nk = keys.shape[1]
    assert values.shape[1] == Nk

    (wq, bq, wk, bk, wv, bv, wo, bo,
     g1, be1, w1, b1, w2, b2, g2, be2) = params

    f32 = jnp.float32
    mm = matmul_dtype

    # Fold the attention scale into the query projection (free at kernel time),
    # then cast matmul weights to the MXU operand dtype.  Biases / LN params stay
    # f32 (applied after f32 accumulation).
    scale = 1.0 / math.sqrt(d_k)
    wq_c = (wq.astype(f32) * scale).astype(mm)
    bq_c = bq.astype(f32) * scale
    wk_c, wv_c, wo_c = wk.astype(mm), wv.astype(mm), wo.astype(mm)
    w1_c, w2_c = w1.astype(mm), w2.astype(mm)
    bk_c, bv_c, bo_c = bk.astype(f32), bv.astype(f32), bo.astype(f32)
    b1_c, b2_c = b1.astype(f32), b2.astype(f32)
    g1_c, be1_c = g1.astype(f32), be1.astype(f32)
    g2_c, be2_c = g2.astype(f32), be2.astype(f32)

    tq = q_tile or min(Nq, 128)
    assert Nq % tq == 0, "sequence length must be divisible by the query tile"

    kernel = functools.partial(encoder_layer_kernel, h=h, d_k=d_k, d_v=d_v,
                               eps=eps, mm_dtype=mm,
                               approx_recip=approx_softmax_recip)

    # Activations: queries/output tiled over (batch, query-rows); keys/values
    # fetched once per batch element (index_map ignores the row-tile index).
    q_spec = pl.BlockSpec((1, tq, D), lambda b, i: (b, i, 0))
    kv_spec = pl.BlockSpec((1, Nk, D), lambda b, i: (b, 0, 0))
    out_spec = pl.BlockSpec((1, tq, D), lambda b, i: (b, i, 0))

    # Weights/biases: whole arrays resident in VMEM (Pallas may still buffer
    # them; the VMEM budget below leaves headroom for that).
    w_spec = pl.BlockSpec(memory_space=pltpu.MemorySpace.VMEM)

    weight_args = (wq_c, bq_c, wk_c, bk_c, wv_c, bv_c, wo_c, bo_c,
                   g1_c, be1_c, w1_c, b1_c, w2_c, b2_c, g2_c, be2_c)
    in_specs = [q_spec, kv_spec, kv_spec] + [w_spec] * len(weight_args)

    scratch_shapes = [
        pltpu.VMEM((h, d_k, Nk), mm),   # K^T cached per batch element (lane-dense)
        pltpu.VMEM((h, Nk, d_v), mm),   # V cached per batch element
    ]

    # Explicit VMEM budget (floor at 32 MiB so we never go below the default).
    act_dt = queries.dtype
    vmem_est = 2 * (_padded_nbytes((1, tq, D), act_dt)
                    + 2 * _padded_nbytes((1, Nk, D), act_dt)
                    + _padded_nbytes((1, tq, D), act_dt))
    vmem_est += sum(2 * _padded_nbytes(a.shape, a.dtype) for a in weight_args)
    vmem_est += _padded_nbytes((h, d_k, Nk), mm) + _padded_nbytes((h, Nk, d_v), mm)
    vmem_est += 4 * 1024 * 1024  # slack for compiler-internal scratch
    vmem_limit = int(min(max(vmem_est, 32 * 1024 * 1024), 128 * 1024 * 1024))

    # Advisory cost estimate for the XLA scheduler.
    d_ff = w1.shape[-1]
    flops = 2 * B * (
        Nq * D * h * d_k + Nk * D * h * d_k + Nk * D * h * d_v   # projections
        + h * Nq * Nk * (d_k + d_v)                              # attention
        + Nq * h * d_v * D                                       # output proj
        + 2 * Nq * D * d_ff                                      # FFN
    )
    bytes_acc = sum(int(np.prod(a.shape)) * a.dtype.itemsize
                    for a in (queries, keys, values) + weight_args)
    bytes_acc += int(np.prod(queries.shape)) * queries.dtype.itemsize  # output
    cost = pl.CostEstimate(flops=flops,
                           transcendentals=B * h * Nq * Nk,
                           bytes_accessed=bytes_acc)

    return pl.pallas_call(
        kernel,
        out_shape=jax.ShapeDtypeStruct((B, Nq, D), queries.dtype),
        grid=(B, Nq // tq),
        in_specs=in_specs,
        out_specs=out_spec,
        scratch_shapes=scratch_shapes,
        compiler_params=pltpu.CompilerParams(
            # Axis 1 MUST stay "arbitrary": the K/V cache in persistent scratch
            # assumes row tiles of one batch element run sequentially on one core.
            dimension_semantics=("parallel", "arbitrary"),
            vmem_limit_bytes=vmem_limit),
        cost_estimate=cost,
    )(queries, keys, values, *weight_args)


def ref_encoder_layer(q, k, v, params, *, h, d_k, d_v, eps=1e-5):
    """Pure-JAX f32 reference (mirrors the PyTorch module in eval mode)."""
    (wq, bq, wk, bk, wv, bv, wo, bo,
     g1, be1, w1, b1, w2, b2, g2, be2) = params
    B, N, D = q.shape
    qq = (q @ wq + bq[0]).reshape(B, N, h, d_k).transpose(0, 2, 1, 3)
    kk = (k @ wk + bk[0]).reshape(B, k.shape[1], h, d_k).transpose(0, 2, 1, 3)
    vv = (v @ wv + bv[0]).reshape(B, v.shape[1], h, d_v).transpose(0, 2, 1, 3)
    s = jnp.einsum("bhqd,bhkd->bhqk", qq, kk) / math.sqrt(d_k)
    p = jax.nn.softmax(s, axis=-1)
    o = jnp.einsum("bhqk,bhkd->bhqd", p, vv).transpose(0, 2, 1, 3).reshape(B, N, h * d_v)
    o = o @ wo + bo[0]

    def ln(x, g, b):
        mu = jnp.mean(x, axis=-1, keepdims=True)
        var = jnp.mean((x - mu) ** 2, axis=-1, keepdims=True)
        return (x - mu) * jax.lax.rsqrt(var + eps) * g[0] + b[0]

    y = ln(q + o, g1, be1)
    ff = jnp.maximum(y @ w1 + b1[0], 0.0) @ w2 + b2[0]
    return ln(y + ff, g2, be2)


if __name__ == "__main__":
    # Small, lane-dense shapes consistent with EncoderLayer's forward.
    B, N = 2, 128
    d_model, d_k, d_v, h, d_ff = 128, 32, 32, 4, 256

    key = jax.random.PRNGKey(0)
    ks = jax.random.split(key, 16)

    def w(k_, shape, s=0.05):
        return (s * jax.random.normal(k_, shape)).astype(jnp.float32)

    params = (
        w(ks[0], (d_model, h * d_k)), jnp.full((1, h * d_k), 0.01, jnp.float32),   # fc_q
        w(ks[1], (d_model, h * d_k)), jnp.full((1, h * d_k), -0.02, jnp.float32),  # fc_k
        w(ks[2], (d_model, h * d_v)), jnp.full((1, h * d_v), 0.03, jnp.float32),   # fc_v
        w(ks[3], (h * d_v, d_model)), jnp.full((1, d_model), 0.0, jnp.float32),    # fc_o
        jnp.ones((1, d_model), jnp.float32), jnp.zeros((1, d_model), jnp.float32), # LN1
        w(ks[4], (d_model, d_ff)), jnp.full((1, d_ff), 0.01, jnp.float32),         # ffn fc1
        w(ks[5], (d_ff, d_model)), jnp.full((1, d_model), -0.01, jnp.float32),     # ffn fc2
        jnp.ones((1, d_model), jnp.float32), jnp.zeros((1, d_model), jnp.float32), # LN2
    )

    queries = jax.random.normal(ks[6], (B, N, d_model), jnp.float32)
    keys_ = jax.random.normal(ks[7], (B, N, d_model), jnp.float32)
    values = jax.random.normal(ks[8], (B, N, d_model), jnp.float32)

    ref = ref_encoder_layer(queries, keys_, values, params, h=h, d_k=d_k, d_v=d_v)

    # f32-operand path: bit-for-bit close to the PyTorch semantics.
    out_f32 = encoder_layer(queries, keys_, values, params, h=h, d_k=d_k, d_v=d_v,
                            matmul_dtype=jnp.float32)
    out_f32 = jax.block_until_ready(out_f32)
    np.testing.assert_allclose(np.asarray(out_f32), np.asarray(ref),
                               rtol=2e-3, atol=2e-3)

    # bf16 MXU-operand path (default, perf config on v6e/v7x); f32 accumulation.
    out_bf16 = encoder_layer(queries, keys_, values, params, h=h, d_k=d_k, d_v=d_v)
    out_bf16 = jax.block_until_ready(out_bf16)
    np.testing.assert_allclose(np.asarray(out_bf16), np.asarray(ref),
                               rtol=2e-2, atol=2e-2)

    print("KERNEL_OK")
</pallas_src>

<mosaic_0001>
module attributes {stable_mosaic.version = 11 : i64} {
  func.func @encoder_layer_kernel(%arg0: i32, %arg1: i32, %arg2: memref<1x128x128xf32, #tpu.memory_space<vmem>>, %arg3: memref<1x128x128xf32, #tpu.memory_space<vmem>>, %arg4: memref<1x128x128xf32, #tpu.memory_space<vmem>>, %arg5: memref<128x128xf32, #tpu.memory_space<vmem>>, %arg6: memref<1x128xf32, #tpu.memory_space<vmem>>, %arg7: memref<128x128xf32, #tpu.memory_space<vmem>>, %arg8: memref<1x128xf32, #tpu.memory_space<vmem>>, %arg9: memref<128x128xf32, #tpu.memory_space<vmem>>, %arg10: memref<1x128xf32, #tpu.memory_space<vmem>>, %arg11: memref<128x128xf32, #tpu.memory_space<vmem>>, %arg12: memref<1x128xf32, #tpu.memory_space<vmem>>, %arg13: memref<1x128xf32, #tpu.memory_space<vmem>>, %arg14: memref<1x128xf32, #tpu.memory_space<vmem>>, %arg15: memref<128x256xf32, #tpu.memory_space<vmem>>, %arg16: memref<1x256xf32, #tpu.memory_space<vmem>>, %arg17: memref<256x128xf32, #tpu.memory_space<vmem>>, %arg18: memref<1x128xf32, #tpu.memory_space<vmem>>, %arg19: memref<1x128xf32, #tpu.memory_space<vmem>>, %arg20: memref<1x128xf32, #tpu.memory_space<vmem>>, %arg21: memref<1x128x128xf32, #tpu.memory_space<vmem>>, %arg22: memref<4x32x128xf32, #tpu.memory_space<vmem>>, %arg23: memref<4x128x32xf32, #tpu.memory_space<vmem>>) attributes {dimension_semantics = [#tpu.dimension_semantics<parallel>, #tpu.dimension_semantics<arbitrary>], iteration_bounds = array<i64: 2, 1>, scalar_prefetch = 0 : i64, scratch_operands = 2 : i64, tpu.core_type = #tpu.core_type<tc>, window_params = [{transform_indices = @transform_0, window_bounds = array<i64: 1, 128, 128>}, {transform_indices = @transform_1, window_bounds = array<i64: 1, 128, 128>}, {transform_indices = @transform_2, window_bounds = array<i64: 1, 128, 128>}, {pipeline_mode = #tpu.pipeline_mode<synchronous>, transform_indices = @transform_3, window_bounds = array<i64: 128, 128>}, {pipeline_mode = #tpu.pipeline_mode<synchronous>, transform_indices = @transform_4, window_bounds = array<i64: 1, 128>}, {pipeline_mode = #tpu.pipeline_mode<synchronous>, transform_indices = @transform_5, window_bounds = array<i64: 128, 128>}, {pipeline_mode = #tpu.pipeline_mode<synchronous>, transform_indices = @transform_6, window_bounds = array<i64: 1, 128>}, {pipeline_mode = #tpu.pipeline_mode<synchronous>, transform_indices = @transform_7, window_bounds = array<i64: 128, 128>}, {pipeline_mode = #tpu.pipeline_mode<synchronous>, transform_indices = @transform_8, window_bounds = array<i64: 1, 128>}, {pipeline_mode = #tpu.pipeline_mode<synchronous>, transform_indices = @transform_9, window_bounds = array<i64: 128, 128>}, {pipeline_mode = #tpu.pipeline_mode<synchronous>, transform_indices = @transform_10, window_bounds = array<i64: 1, 128>}, {pipeline_mode = #tpu.pipeline_mode<synchronous>, transform_indices = @transform_11, window_bounds = array<i64: 1, 128>}, {pipeline_mode = #tpu.pipeline_mode<synchronous>, transform_indices = @transform_12, window_bounds = array<i64: 1, 128>}, {pipeline_mode = #tpu.pipeline_mode<synchronous>, transform_indices = @transform_13, window_bounds = array<i64: 128, 256>}, {pipeline_mode = #tpu.pipeline_mode<synchronous>, transform_indices = @transform_14, window_bounds = array<i64: 1, 256>}, {pipeline_mode = #tpu.pipeline_mode<synchronous>, transform_indices = @transform_15, window_bounds = array<i64: 256, 128>}, {pipeline_mode = #tpu.pipeline_mode<synchronous>, transform_indices = @transform_16, window_bounds = array<i64: 1, 128>}, {pipeline_mode = #tpu.pipeline_mode<synchronous>, transform_indices = @transform_17, window_bounds = array<i64: 1, 128>}, {pipeline_mode = #tpu.pipeline_mode<synchronous>, transform_indices = @transform_18, window_bounds = array<i64: 1, 128>}, {transform_indices = @transform_19, window_bounds = array<i64: 1, 128, 128>}]} {
    %c0 = arith.constant 0 : index
    %c0_0 = arith.constant 0 : index
    %c0_1 = arith.constant 0 : index
    %0 = vector.load %arg2[%c0, %c0_0, %c0_1] : memref<1x128x128xf32, #tpu.memory_space<vmem>>, vector<1x128x128xf32>
    %1 = vector.shape_cast %0 : vector<1x128x128xf32> to vector<128x128xf32>
    %c0_i32 = arith.constant 0 : i32
    %2 = arith.cmpi eq, %arg1, %c0_i32 : i32
    %3 = arith.extui %2 : i1 to i32
    %c0_i32_2 = arith.constant 0 : i32
    %4 = arith.cmpi ne, %3, %c0_i32_2 : i32
    scf.if %4 {
      %c0_81 = arith.constant 0 : index
      %c0_82 = arith.constant 0 : index
      %c0_83 = arith.constant 0 : index
      %141 = vector.load %arg3[%c0_81, %c0_82, %c0_83] : memref<1x128x128xf32, #tpu.memory_space<vmem>>, vector<1x128x128xf32>
      %142 = vector.shape_cast %141 : vector<1x128x128xf32> to vector<128x128xf32>
      %c0_84 = arith.constant 0 : index
      %c0_85 = arith.constant 0 : index
      %143 = vector.load %arg7[%c0_84, %c0_85] : memref<128x128xf32, #tpu.memory_space<vmem>>, vector<128x128xf32>
      %cst_86 = arith.constant dense<0.000000e+00> : vector<128x128xf32>
      %144 = tpu.matmul %142, %143, %cst_86 {dimension_numbers = #tpu.dot_dimension_numbers<[1], [0], [0], [1], [0, 0, 1, 1], [], []>} : vector<128x128xf32>, vector<128x128xf32>, vector<128x128xf32> -> vector<128x128xf32>
      %c0_87 = arith.constant 0 : index
      %c0_88 = arith.constant 0 : index
      %145 = vector.load %arg8[%c0_87, %c0_88] : memref<1x128xf32, #tpu.memory_space<vmem>>, vector<1x128xf32>
      %146 = vector.broadcast %145 : vector<1x128xf32> to vector<128x128xf32>
      %147 = arith.addf %144, %146 : vector<128x128xf32>
      %c0_89 = arith.constant 0 : index
      %c0_90 = arith.constant 0 : index
      %c0_91 = arith.constant 0 : index
      %148 = vector.load %arg4[%c0_89, %c0_90, %c0_91] : memref<1x128x128xf32, #tpu.memory_space<vmem>>, vector<1x128x128xf32>
      %149 = vector.shape_cast %148 : vector<1x128x128xf32> to vector<128x128xf32>
      %c0_92 = arith.constant 0 : index
      %c0_93 = arith.constant 0 : index
      %150 = vector.load %arg9[%c0_92, %c0_93] : memref<128x128xf32, #tpu.memory_space<vmem>>, vector<128x128xf32>
      %cst_94 = arith.constant dense<0.000000e+00> : vector<128x128xf32>
      %151 = tpu.matmul %149, %150, %cst_94 {dimension_numbers = #tpu.dot_dimension_numbers<[1], [0], [0], [1], [0, 0, 1, 1], [], []>} : vector<128x128xf32>, vector<128x128xf32>, vector<128x128xf32> -> vector<128x128xf32>
      %c0_95 = arith.constant 0 : index
      %c0_96 = arith.constant 0 : index
      %152 = vector.load %arg10[%c0_95, %c0_96] : memref<1x128xf32, #tpu.memory_space<vmem>>, vector<1x128xf32>
      %153 = vector.broadcast %152 : vector<1x128xf32> to vector<128x128xf32>
      %154 = arith.addf %151, %153 : vector<128x128xf32>
      %155 = vector.extract_strided_slice %147 {offsets = [0, 0], sizes = [128, 32], strides = [1, 1]} : vector<128x128xf32> to vector<128x32xf32>
      %156 = tpu.transpose %155, [1, 0] : vector<128x32xf32> -> vector<32x128xf32>
      %c0_97 = arith.constant 0 : index
      %c0_98 = arith.constant 0 : index
      %c0_99 = arith.constant 0 : index
      %157 = vector.load %arg22[%c0_97, %c0_98, %c0_99] : memref<4x32x128xf32, #tpu.memory_space<vmem>>, vector<1x32x128xf32>
      %158 = vector.shape_cast %157 : vector<1x32x128xf32> to vector<32x128xf32>
      %159 = vector.shape_cast %156 : vector<32x128xf32> to vector<1x32x128xf32>
      tpu.vector_store %arg22[%c0_97, %c0_98, %c0_99], %159 {strides = array<i32>} : memref<4x32x128xf32, #tpu.memory_space<vmem>>, vector<1x32x128xf32>,
      %160 = vector.extract_strided_slice %154 {offsets = [0, 0], sizes = [128, 32], strides = [1, 1]} : vector<128x128xf32> to vector<128x32xf32>
      %c0_100 = arith.constant 0 : index
      %c0_101 = arith.constant 0 : index
      %c0_102 = arith.constant 0 : index
      %161 = vector.load %arg23[%c0_100, %c0_101, %c0_102] : memref<4x128x32xf32, #tpu.memory_space<vmem>>, vector<1x128x32xf32>
      %162 = vector.shape_cast %161 : vector<1x128x32xf32> to vector<128x32xf32>
      %163 = vector.shape_cast %160 : vector<128x32xf32> to vector<1x128x32xf32>
      tpu.vector_store %arg23[%c0_100, %c0_101, %c0_102], %163 {strides = array<i32>} : memref<4x128x32xf32, #tpu.memory_space<vmem>>, vector<1x128x32xf32>,
      %164 = vector.extract_strided_slice %147 {offsets = [0, 32], sizes = [128, 32], strides = [1, 1]} : vector<128x128xf32> to vector<128x32xf32>
      %165 = tpu.transpose %164, [1, 0] : vector<128x32xf32> -> vector<32x128xf32>
      %c1_103 = arith.constant 1 : index
      %c0_104 = arith.constant 0 : index
      %c0_105 = arith.constant 0 : index
      %166 = vector.load %arg22[%c1_103, %c0_104, %c0_105] : memref<4x32x128xf32, #tpu.memory_space<vmem>>, vector<1x32x128xf32>
      %167 = vector.shape_cast %166 : vector<1x32x128xf32> to vector<32x128xf32>
      %168 = vector.shape_cast %165 : vector<32x128xf32> to vector<1x32x128xf32>
      tpu.vector_store %arg22[%c1_103, %c0_104, %c0_105], %168 {strides = array<i32>} : memref<4x32x128xf32, #tpu.memory_space<vmem>>, vector<1x32x128xf32>,
      %169 = vector.extract_strided_slice %154 {offsets = [0, 32], sizes = [128, 32], strides = [1, 1]} : vector<128x128xf32> to vector<128x32xf32>
      %c1_106 = arith.constant 1 : index
      %c0_107 = arith.constant 0 : index
      %c0_108 = arith.constant 0 : index
      %170 = vector.load %arg23[%c1_106, %c0_107, %c0_108] : memref<4x128x32xf32, #tpu.memory_space<vmem>>, vector<1x128x32xf32>
      %171 = vector.shape_cast %170 : vector<1x128x32xf32> to vector<128x32xf32>
      %172 = vector.shape_cast %169 : vector<128x32xf32> to vector<1x128x32xf32>
      tpu.vector_store %arg23[%c1_106, %c0_107, %c0_108], %172 {strides = array<i32>} : memref<4x128x32xf32, #tpu.memory_space<vmem>>, vector<1x128x32xf32>,
      %173 = vector.extract_strided_slice %147 {offsets = [0, 64], sizes = [128, 32], strides = [1, 1]} : vector<128x128xf32> to vector<128x32xf32>
      %174 = tpu.transpose %173, [1, 0] : vector<128x32xf32> -> vector<32x128xf32>
      %c2_109 = arith.constant 2 : index
      %c0_110 = arith.constant 0 : index
      %c0_111 = arith.constant 0 : index
      %175 = vector.load %arg22[%c2_109, %c0_110, %c0_111] : memref<4x32x128xf32, #tpu.memory_space<vmem>>, vector<1x32x128xf32>
      %176 = vector.shape_cast %175 : vector<1x32x128xf32> to vector<32x128xf32>
      %177 = vector.shape_cast %174 : vector<32x128xf32> to vector<1x32x128xf32>
      tpu.vector_store %arg22[%c2_109, %c0_110, %c0_111], %177 {strides = array<i32>} : memref<4x32x128xf32, #tpu.memory_space<vmem>>, vector<1x32x128xf32>,
      %178 = vector.extract_strided_slice %154 {offsets = [0, 64], sizes = [128, 32], strides = [1, 1]} : vector<128x128xf32> to vector<128x32xf32>
      %c2_112 = arith.constant 2 : index
      %c0_113 = arith.constant 0 : index
      %c0_114 = arith.constant 0 : index
      %179 = vector.load %arg23[%c2_112, %c0_113, %c0_114] : memref<4x128x32xf32, #tpu.memory_space<vmem>>, vector<1x128x32xf32>
      %180 = vector.shape_cast %179 : vector<1x128x32xf32> to vector<128x32xf32>
      %181 = vector.shape_cast %178 : vector<128x32xf32> to vector<1x128x32xf32>
      tpu.vector_store %arg23[%c2_112, %c0_113, %c0_114], %181 {strides = array<i32>} : memref<4x128x32xf32, #tpu.memory_space<vmem>>, vector<1x128x32xf32>,
      %182 = vector.extract_strided_slice %147 {offsets = [0, 96], sizes = [128, 32], strides = [1, 1]} : vector<128x128xf32> to vector<128x32xf32>
      %183 = tpu.transpose %182, [1, 0] : vector<128x32xf32> -> vector<32x128xf32>
      %c3_115 = arith.constant 3 : index
      %c0_116 = arith.constant 0 : index
      %c0_117 = arith.constant 0 : index
      %184 = vector.load %arg22[%c3_115, %c0_116, %c0_117] : memref<4x32x128xf32, #tpu.memory_space<vmem>>, vector<1x32x128xf32>
      %185 = vector.shape_cast %184 : vector<1x32x128xf32> to vector<32x128xf32>
      %186 = vector.shape_cast %183 : vector<32x128xf32> to vector<1x32x128xf32>
      tpu.vector_store %arg22[%c3_115, %c0_116, %c0_117], %186 {strides = array<i32>} : memref<4x32x128xf32, #tpu.memory_space<vmem>>, vector<1x32x128xf32>,
      %187 = vector.extract_strided_slice %154 {offsets = [0, 96], sizes = [128, 32], strides = [1, 1]} : vector<128x128xf32> to vector<128x32xf32>
      %c3_118 = arith.constant 3 : index
      %c0_119 = arith.constant 0 : index
      %c0_120 = arith.constant 0 : index
      %188 = vector.load %arg23[%c3_118, %c0_119, %c0_120] : memref<4x128x32xf32, #tpu.memory_space<vmem>>, vector<1x128x32xf32>
      %189 = vector.shape_cast %188 : vector<1x128x32xf32> to vector<128x32xf32>
      %190 = vector.shape_cast %187 : vector<128x32xf32> to vector<1x128x32xf32>
      tpu.vector_store %arg23[%c3_118, %c0_119, %c0_120], %190 {strides = array<i32>} : memref<4x128x32xf32, #tpu.memory_space<vmem>>, vector<1x128x32xf32>,
    } else {
    }
    %c0_3 = arith.constant 0 : index
    %c0_4 = arith.constant 0 : index
    %5 = vector.load %arg5[%c0_3, %c0_4] : memref<128x128xf32, #tpu.memory_space<vmem>>, vector<128x128xf32>
    %cst = arith.constant dense<0.000000e+00> : vector<128x128xf32>
    %6 = tpu.matmul %1, %5, %cst {dimension_numbers = #tpu.dot_dimension_numbers<[1], [0], [0], [1], [0, 0, 1, 1], [], []>} : vector<128x128xf32>, vector<128x128xf32>, vector<128x128xf32> -> vector<128x128xf32>
    %c0_5 = arith.constant 0 : index
    %c0_6 = arith.constant 0 : index
    %7 = vector.load %arg6[%c0_5, %c0_6] : memref<1x128xf32, #tpu.memory_space<vmem>>, vector<1x128xf32>
    %8 = vector.broadcast %7 : vector<1x128xf32> to vector<128x128xf32>
    %9 = arith.addf %6, %8 : vector<128x128xf32>
    %10 = vector.extract_strided_slice %9 {offsets = [0, 0], sizes = [128, 32], strides = [1, 1]} : vector<128x128xf32> to vector<128x32xf32>
    %c0_7 = arith.constant 0 : index
    %c0_8 = arith.constant 0 : index
    %c0_9 = arith.constant 0 : index
    %11 = vector.load %arg22[%c0_7, %c0_8, %c0_9] : memref<4x32x128xf32, #tpu.memory_space<vmem>>, vector<1x32x128xf32>
    %12 = vector.shape_cast %11 : vector<1x32x128xf32> to vector<32x128xf32>
    %cst_10 = arith.constant dense<0.000000e+00> : vector<128x128xf32>
    %13 = tpu.matmul %10, %12, %cst_10 {dimension_numbers = #tpu.dot_dimension_numbers<[1], [0], [0], [1], [0, 0, 1, 1], [], []>} : vector<128x32xf32>, vector<32x128xf32>, vector<128x128xf32> -> vector<128x128xf32>
    %cst_11 = arith.constant dense<0xFF800000> : vector<128xf32>
    %14 = vector.multi_reduction <maximumf>, %13, %cst_11 [1] : vector<128x128xf32> to vector<128xf32>
    %15 = vector.shape_cast %14 : vector<128xf32> to vector<128x1xf32>
    %16 = vector.broadcast %15 : vector<128x1xf32> to vector<128x128xf32>
    %17 = arith.subf %13, %16 : vector<128x128xf32>
    %18 = math.exp %17 : vector<128x128xf32>
    %cst_12 = arith.constant dense<0.000000e+00> : vector<128xf32>
    %19 = vector.multi_reduction <add>, %18, %cst_12 [1] : vector<128x128xf32> to vector<128xf32>
    %20 = vector.shape_cast %19 : vector<128xf32> to vector<128x1xf32>
    %21 = vector.broadcast %20 : vector<128x1xf32> to vector<128x128xf32>
    %22 = arith.divf %18, %21 : vector<128x128xf32>
    %c0_13 = arith.constant 0 : index
    %c0_14 = arith.constant 0 : index
    %c0_15 = arith.constant 0 : index
    %23 = vector.load %arg23[%c0_13, %c0_14, %c0_15] : memref<4x128x32xf32, #tpu.memory_space<vmem>>, vector<1x128x32xf32>
    %24 = vector.shape_cast %23 : vector<1x128x32xf32> to vector<128x32xf32>
    %cst_16 = arith.constant dense<0.000000e+00> : vector<128x32xf32>
    %25 = tpu.matmul %22, %24, %cst_16 {dimension_numbers = #tpu.dot_dimension_numbers<[1], [0], [0], [1], [0, 0, 1, 1], [], []>} : vector<128x128xf32>, vector<128x32xf32>, vector<128x32xf32> -> vector<128x32xf32>
    %26 = vector.extract_strided_slice %9 {offsets = [0, 32], sizes = [128, 32], strides = [1, 1]} : vector<128x128xf32> to vector<128x32xf32>
    %c1 = arith.constant 1 : index
    %c0_17 = arith.constant 0 : index
    %c0_18 = arith.constant 0 : index
    %27 = vector.load %arg22[%c1, %c0_17, %c0_18] : memref<4x32x128xf32, #tpu.memory_space<vmem>>, vector<1x32x128xf32>
    %28 = vector.shape_cast %27 : vector<1x32x128xf32> to vector<32x128xf32>
    %cst_19 = arith.constant dense<0.000000e+00> : vector<128x128xf32>
    %29 = tpu.matmul %26, %28, %cst_19 {dimension_numbers = #tpu.dot_dimension_numbers<[1], [0], [0], [1], [0, 0, 1, 1], [], []>} : vector<128x32xf32>, vector<32x128xf32>, vector<128x128xf32> -> vector<128x128xf32>
    %cst_20 = arith.constant dense<0xFF800000> : vector<128xf32>
    %30 = vector.multi_reduction <maximumf>, %29, %cst_20 [1] : vector<128x128xf32> to vector<128xf32>
    %31 = vector.shape_cast %30 : vector<128xf32> to vector<128x1xf32>
    %32 = vector.broadcast %31 : vector<128x1xf32> to vector<128x128xf32>
    %33 = arith.subf %29, %32 : vector<128x128xf32>
    %34 = math.exp %33 : vector<128x128xf32>
    %cst_21 = arith.constant dense<0.000000e+00> : vector<128xf32>
    %35 = vector.multi_reduction <add>, %34, %cst_21 [1] : vector<128x128xf32> to vector<128xf32>
    %36 = vector.shape_cast %35 : vector<128xf32> to vector<128x1xf32>
    %37 = vector.broadcast %36 : vector<128x1xf32> to vector<128x128xf32>
    %38 = arith.divf %34, %37 : vector<128x128xf32>
    %c1_22 = arith.constant 1 : index
    %c0_23 = arith.constant 0 : index
    %c0_24 = arith.constant 0 : index
    %39 = vector.load %arg23[%c1_22, %c0_23, %c0_24] : memref<4x128x32xf32, #tpu.memory_space<vmem>>, vector<1x128x32xf32>
    %40 = vector.shape_cast %39 : vector<1x128x32xf32> to vector<128x32xf32>
    %cst_25 = arith.constant dense<0.000000e+00> : vector<128x32xf32>
    %41 = tpu.matmul %38, %40, %cst_25 {dimension_numbers = #tpu.dot_dimension_numbers<[1], [0], [0], [1], [0, 0, 1, 1], [], []>} : vector<128x128xf32>, vector<128x32xf32>, vector<128x32xf32> -> vector<128x32xf32>
    %42 = vector.extract_strided_slice %9 {offsets = [0, 64], sizes = [128, 32], strides = [1, 1]} : vector<128x128xf32> to vector<128x32xf32>
    %c2 = arith.constant 2 : index
    %c0_26 = arith.constant 0 : index
    %c0_27 = arith.constant 0 : index
    %43 = vector.load %arg22[%c2, %c0_26, %c0_27] : memref<4x32x128xf32, #tpu.memory_space<vmem>>, vector<1x32x128xf32>
    %44 = vector.shape_cast %43 : vector<1x32x128xf32> to vector<32x128xf32>
    %cst_28 = arith.constant dense<0.000000e+00> : vector<128x128xf32>
    %45 = tpu.matmul %42, %44, %cst_28 {dimension_numbers = #tpu.dot_dimension_numbers<[1], [0], [0], [1], [0, 0, 1, 1], [], []>} : vector<128x32xf32>, vector<32x128xf32>, vector<128x128xf32> -> vector<128x128xf32>
    %cst_29 = arith.constant dense<0xFF800000> : vector<128xf32>
    %46 = vector.multi_reduction <maximumf>, %45, %cst_29 [1] : vector<128x128xf32> to vector<128xf32>
    %47 = vector.shape_cast %46 : vector<128xf32> to vector<128x1xf32>
    %48 = vector.broadcast %47 : vector<128x1xf32> to vector<128x128xf32>
    %49 = arith.subf %45, %48 : vector<128x128xf32>
    %50 = math.exp %49 : vector<128x128xf32>
    %cst_30 = arith.constant dense<0.000000e+00> : vector<128xf32>
    %51 = vector.multi_reduction <add>, %50, %cst_30 [1] : vector<128x128xf32> to vector<128xf32>
    %52 = vector.shape_cast %51 : vector<128xf32> to vector<128x1xf32>
    %53 = vector.broadcast %52 : vector<128x1xf32> to vector<128x128xf32>
    %54 = arith.divf %50, %53 : vector<128x128xf32>
    %c2_31 = arith.constant 2 : index
    %c0_32 = arith.constant 0 : index
    %c0_33 = arith.constant 0 : index
    %55 = vector.load %arg23[%c2_31, %c0_32, %c0_33] : memref<4x128x32xf32, #tpu.memory_space<vmem>>, vector<1x128x32xf32>
    %56 = vector.shape_cast %55 : vector<1x128x32xf32> to vector<128x32xf32>
    %cst_34 = arith.constant dense<0.000000e+00> : vector<128x32xf32>
    %57 = tpu.matmul %54, %56, %cst_34 {dimension_numbers = #tpu.dot_dimension_numbers<[1], [0], [0], [1], [0, 0, 1, 1], [], []>} : vector<128x128xf32>, vector<128x32xf32>, vector<128x32xf32> -> vector<128x32xf32>
    %58 = vector.extract_strided_slice %9 {offsets = [0, 96], sizes = [128, 32], strides = [1, 1]} : vector<128x128xf32> to vector<128x32xf32>
    %c3 = arith.constant 3 : index
    %c0_35 = arith.constant 0 : index
    %c0_36 = arith.constant 0 : index
    %59 = vector.load %arg22[%c3, %c0_35, %c0_36] : memref<4x32x128xf32, #tpu.memory_space<vmem>>, vector<1x32x128xf32>
    %60 = vector.shape_cast %59 : vector<1x32x128xf32> to vector<32x128xf32>
    %cst_37 = arith.constant dense<0.000000e+00> : vector<128x128xf32>
    %61 = tpu.matmul %58, %60, %cst_37 {dimension_numbers = #tpu.dot_dimension_numbers<[1], [0], [0], [1], [0, 0, 1, 1], [], []>} : vector<128x32xf32>, vector<32x128xf32>, vector<128x128xf32> -> vector<128x128xf32>
    %cst_38 = arith.constant dense<0xFF800000> : vector<128xf32>
    %62 = vector.multi_reduction <maximumf>, %61, %cst_38 [1] : vector<128x128xf32> to vector<128xf32>
    %63 = vector.shape_cast %62 : vector<128xf32> to vector<128x1xf32>
    %64 = vector.broadcast %63 : vector<128x1xf32> to vector<128x128xf32>
    %65 = arith.subf %61, %64 : vector<128x128xf32>
    %66 = math.exp %65 : vector<128x128xf32>
    %cst_39 = arith.constant dense<0.000000e+00> : vector<128xf32>
    %67 = vector.multi_reduction <add>, %66, %cst_39 [1] : vector<128x128xf32> to vector<128xf32>
    %68 = vector.shape_cast %67 : vector<128xf32> to vector<128x1xf32>
    %69 = vector.broadcast %68 : vector<128x1xf32> to vector<128x128xf32>
    %70 = arith.divf %66, %69 : vector<128x128xf32>
    %c3_40 = arith.constant 3 : index
    %c0_41 = arith.constant 0 : index
    %c0_42 = arith.constant 0 : index
    %71 = vector.load %arg23[%c3_40, %c0_41, %c0_42] : memref<4x128x32xf32, #tpu.memory_space<vmem>>, vector<1x128x32xf32>
    %72 = vector.shape_cast %71 : vector<1x128x32xf32> to vector<128x32xf32>
    %cst_43 = arith.constant dense<0.000000e+00> : vector<128x32xf32>
    %73 = tpu.matmul %70, %72, %cst_43 {dimension_numbers = #tpu.dot_dimension_numbers<[1], [0], [0], [1], [0, 0, 1, 1], [], []>} : vector<128x128xf32>, vector<128x32xf32>, vector<128x32xf32> -> vector<128x32xf32>
    %74 = tpu.concatenate %25, %41, %57, %73 in 1 : vector<128x32xf32>, vector<128x32xf32>, vector<128x32xf32>, vector<128x32xf32> -> vector<128x128xf32>
    %c0_44 = arith.constant 0 : index
    %c0_45 = arith.constant 0 : index
    %75 = vector.load %arg11[%c0_44, %c0_45] : memref<128x128xf32, #tpu.memory_space<vmem>>, vector<128x128xf32>
    %cst_46 = arith.constant dense<0.000000e+00> : vector<128x128xf32>
    %76 = tpu.matmul %74, %75, %cst_46 {dimension_numbers = #tpu.dot_dimension_numbers<[1], [0], [0], [1], [0, 0, 1, 1], [], []>} : vector<128x128xf32>, vector<128x128xf32>, vector<128x128xf32> -> vector<128x128xf32>
    %c0_47 = arith.constant 0 : index
    %c0_48 = arith.constant 0 : index
    %77 = vector.load %arg12[%c0_47, %c0_48] : memref<1x128xf32, #tpu.memory_space<vmem>>, vector<1x128xf32>
    %78 = vector.broadcast %77 : vector<1x128xf32> to vector<128x128xf32>
    %79 = arith.addf %76, %78 : vector<128x128xf32>
    %80 = arith.addf %1, %79 : vector<128x128xf32>
    %cst_49 = arith.constant dense<0.000000e+00> : vector<128xf32>
    %81 = vector.multi_reduction <add>, %80, %cst_49 [1] : vector<128x128xf32> to vector<128xf32>
    %82 = vector.shape_cast %81 : vector<128xf32> to vector<128x1xf32>
    %cst_50 = arith.constant 1.280000e+02 : f32
    %83 = vector.broadcast %cst_50 : f32 to vector<128x1xf32>
    %84 = arith.divf %82, %83 : vector<128x1xf32>
    %85 = vector.broadcast %84 : vector<128x1xf32> to vector<128x128xf32>
    %86 = arith.subf %80, %85 : vector<128x128xf32>
    %87 = arith.mulf %86, %86 : vector<128x128xf32>
    %cst_51 = arith.constant dense<0.000000e+00> : vector<128xf32>
    %88 = vector.multi_reduction <add>, %87, %cst_51 [1] : vector<128x128xf32> to vector<128xf32>
    %89 = vector.shape_cast %88 : vector<128xf32> to vector<128x1xf32>
    %cst_52 = arith.constant 1.280000e+02 : f32
    %90 = vector.broadcast %cst_52 : f32 to vector<128x1xf32>
    %91 = arith.divf %89, %90 : vector<128x1xf32>
    %cst_53 = arith.constant 9.99999974E-6 : f32
    %92 = vector.broadcast %cst_53 : f32 to vector<128x1xf32>
    %93 = arith.addf %91, %92 : vector<128x1xf32>
    %94 = math.rsqrt %93 : vector<128x1xf32>
    %95 = vector.broadcast %94 : vector<128x1xf32> to vector<128x128xf32>
    %96 = arith.mulf %86, %95 : vector<128x128xf32>
    %c0_54 = arith.constant 0 : index
    %c0_55 = arith.constant 0 : index
    %97 = vector.load %arg13[%c0_54, %c0_55] : memref<1x128xf32, #tpu.memory_space<vmem>>, vector<1x128xf32>
    %98 = vector.broadcast %97 : vector<1x128xf32> to vector<128x128xf32>
    %99 = arith.mulf %96, %98 : vector<128x128xf32>
    %c0_56 = arith.constant 0 : index
    %c0_57 = arith.constant 0 : index
    %100 = vector.load %arg14[%c0_56, %c0_57] : memref<1x128xf32, #tpu.memory_space<vmem>>, vector<1x128xf32>
    %101 = vector.broadcast %100 : vector<1x128xf32> to vector<128x128xf32>
    %102 = arith.addf %99, %101 : vector<128x128xf32>
    %c0_58 = arith.constant 0 : index
    %c0_59 = arith.constant 0 : index
    %103 = vector.load %arg15[%c0_58, %c0_59] : memref<128x256xf32, #tpu.memory_space<vmem>>, vector<128x256xf32>
    %cst_60 = arith.constant dense<0.000000e+00> : vector<128x256xf32>
    %104 = tpu.matmul %102, %103, %cst_60 {dimension_numbers = #tpu.dot_dimension_numbers<[1], [0], [0], [1], [0, 0, 1, 1], [], []>} : vector<128x128xf32>, vector<128x256xf32>, vector<128x256xf32> -> vector<128x256xf32>
    %c0_61 = arith.constant 0 : index
    %c0_62 = arith.constant 0 : index
    %105 = vector.load %arg16[%c0_61, %c0_62] : memref<1x256xf32, #tpu.memory_space<vmem>>, vector<1x256xf32>
    %106 = vector.broadcast %105 : vector<1x256xf32> to vector<128x256xf32>
    %107 = arith.addf %104, %106 : vector<128x256xf32>
    %cst_63 = arith.constant 0.000000e+00 : f32
    %108 = vector.broadcast %cst_63 : f32 to vector<128x256xf32>
    %109 = arith.maximumf %107, %108 : vector<128x256xf32>
    %c0_64 = arith.constant 0 : index
    %c0_65 = arith.constant 0 : index
    %110 = vector.load %arg17[%c0_64, %c0_65] : memref<256x128xf32, #tpu.memory_space<vmem>>, vector<256x128xf32>
    %cst_66 = arith.constant dense<0.000000e+00> : vector<128x128xf32>
    %111 = tpu.matmul %109, %110, %cst_66 {dimension_numbers = #tpu.dot_dimension_numbers<[1], [0], [0], [1], [0, 0, 1, 1], [], []>} : vector<128x256xf32>, vector<256x128xf32>, vector<128x128xf32> -> vector<128x128xf32>
    %c0_67 = arith.constant 0 : index
    %c0_68 = arith.constant 0 : index
    %112 = vector.load %arg18[%c0_67, %c0_68] : memref<1x128xf32, #tpu.memory_space<vmem>>, vector<1x128xf32>
    %113 = vector.broadcast %112 : vector<1x128xf32> to vector<128x128xf32>
    %114 = arith.addf %111, %113 : vector<128x128xf32>
    %115 = arith.addf %102, %114 : vector<128x128xf32>
    %cst_69 = arith.constant dense<0.000000e+00> : vector<128xf32>
    %116 = vector.multi_reduction <add>, %115, %cst_69 [1] : vector<128x128xf32> to vector<128xf32>
    %117 = vector.shape_cast %116 : vector<128xf32> to vector<128x1xf32>
    %cst_70 = arith.constant 1.280000e+02 : f32
    %118 = vector.broadcast %cst_70 : f32 to vector<128x1xf32>
    %119 = arith.divf %117, %118 : vector<128x1xf32>
    %120 = vector.broadcast %119 : vector<128x1xf32> to vector<128x128xf32>
    %121 = arith.subf %115, %120 : vector<128x128xf32>
    %122 = arith.mulf %121, %121 : vector<128x128xf32>
    %cst_71 = arith.constant dense<0.000000e+00> : vector<128xf32>
    %123 = vector.multi_reduction <add>, %122, %cst_71 [1] : vector<128x128xf32> to vector<128xf32>
    %124 = vector.shape_cast %123 : vector<128xf32> to vector<128x1xf32>
    %cst_72 = arith.constant 1.280000e+02 : f32
    %125 = vector.broadcast %cst_72 : f32 to vector<128x1xf32>
    %126 = arith.divf %124, %125 : vector<128x1xf32>
    %cst_73 = arith.constant 9.99999974E-6 : f32
    %127 = vector.broadcast %cst_73 : f32 to vector<128x1xf32>
    %128 = arith.addf %126, %127 : vector<128x1xf32>
    %129 = math.rsqrt %128 : vector<128x1xf32>
    %130 = vector.broadcast %129 : vector<128x1xf32> to vector<128x128xf32>
    %131 = arith.mulf %121, %130 : vector<128x128xf32>
    %c0_74 = arith.constant 0 : index
    %c0_75 = arith.constant 0 : index
    %132 = vector.load %arg19[%c0_74, %c0_75] : memref<1x128xf32, #tpu.memory_space<vmem>>, vector<1x128xf32>
    %133 = vector.broadcast %132 : vector<1x128xf32> to vector<128x128xf32>
    %134 = arith.mulf %131, %133 : vector<128x128xf32>
    %c0_76 = arith.constant 0 : index
    %c0_77 = arith.constant 0 : index
    %135 = vector.load %arg20[%c0_76, %c0_77] : memref<1x128xf32, #tpu.memory_space<vmem>>, vector<1x128xf32>
    %136 = vector.broadcast %135 : vector<1x128xf32> to vector<128x128xf32>
    %137 = arith.addf %134, %136 : vector<128x128xf32>
    %c0_78 = arith.constant 0 : index
    %c0_79 = arith.constant 0 : index
    %c0_80 = arith.constant 0 : index
    %138 = vector.load %arg21[%c0_78, %c0_79, %c0_80] : memref<1x128x128xf32, #tpu.memory_space<vmem>>, vector<1x128x128xf32>
    %139 = vector.shape_cast %138 : vector<1x128x128xf32> to vector<128x128xf32>
    %140 = vector.shape_cast %137 : vector<128x128xf32> to vector<1x128x128xf32>
    tpu.vector_store %arg21[%c0_78, %c0_79, %c0_80], %140 {strides = array<i32>} : memref<1x128x128xf32, #tpu.memory_space<vmem>>, vector<1x128x128xf32>,
    return
  }
  func.func @transform_0(%arg0: i32, %arg1: i32) -> (i32, i32, i32) {
    %c0_i32 = arith.constant 0 : i32
    %c0_i32_0 = arith.constant 0 : i32
    return %arg0, %arg1, %c0_i32 : i32, i32, i32
  }
  func.func @transform_1(%arg0: i32, %arg1: i32) -> (i32, i32, i32) {
    %c0_i32 = arith.constant 0 : i32
    %c0_i32_0 = arith.constant 0 : i32
    %c0_i32_1 = arith.constant 0 : i32
    return %arg0, %c0_i32, %c0_i32_0 : i32, i32, i32
  }
  func.func @transform_2(%arg0: i32, %arg1: i32) -> (i32, i32, i32) {
    %c0_i32 = arith.constant 0 : i32
    %c0_i32_0 = arith.constant 0 : i32
    %c0_i32_1 = arith.constant 0 : i32
    return %arg0, %c0_i32, %c0_i32_0 : i32, i32, i32
  }
  func.func @transform_3(%arg0: i32, %arg1: i32) -> (i32, i32) {
    %c0_i32 = arith.constant 0 : i32
    %c0_i32_0 = arith.constant 0 : i32
    %c0_i32_1 = arith.constant 0 : i32
    return %c0_i32, %c0_i32_0 : i32, i32
  }
  func.func @transform_4(%arg0: i32, %arg1: i32) -> (i32, i32) {
    %c0_i32 = arith.constant 0 : i32
    %c0_i32_0 = arith.constant 0 : i32
    %c0_i32_1 = arith.constant 0 : i32
    return %c0_i32, %c0_i32_0 : i32, i32
  }
  func.func @transform_5(%arg0: i32, %arg1: i32) -> (i32, i32) {
    %c0_i32 = arith.constant 0 : i32
    %c0_i32_0 = arith.constant 0 : i32
    %c0_i32_1 = arith.constant 0 : i32
    return %c0_i32, %c0_i32_0 : i32, i32
  }
  func.func @transform_6(%arg0: i32, %arg1: i32) -> (i32, i32) {
    %c0_i32 = arith.constant 0 : i32
    %c0_i32_0 = arith.constant 0 : i32
    %c0_i32_1 = arith.constant 0 : i32
    return %c0_i32, %c0_i32_0 : i32, i32
  }
  func.func @transform_7(%arg0: i32, %arg1: i32) -> (i32, i32) {
    %c0_i32 = arith.constant 0 : i32
    %c0_i32_0 = arith.constant 0 : i32
    %c0_i32_1 = arith.constant 0 : i32
    return %c0_i32, %c0_i32_0 : i32, i32
  }
  func.func @transform_8(%arg0: i32, %arg1: i32) -> (i32, i32) {
    %c0_i32 = arith.constant 0 : i32
    %c0_i32_0 = arith.constant 0 : i32
    %c0_i32_1 = arith.constant 0 : i32
    return %c0_i32, %c0_i32_0 : i32, i32
  }
  func.func @transform_9(%arg0: i32, %arg1: i32) -> (i32, i32) {
    %c0_i32 = arith.constant 0 : i32
    %c0_i32_0 = arith.constant 0 : i32
    %c0_i32_1 = arith.constant 0 : i32
    return %c0_i32, %c0_i32_0 : i32, i32
  }
  func.func @transform_10(%arg0: i32, %arg1: i32) -> (i32, i32) {
    %c0_i32 = arith.constant 0 : i32
    %c0_i32_0 = arith.constant 0 : i32
    %c0_i32_1 = arith.constant 0 : i32
    return %c0_i32, %c0_i32_0 : i32, i32
  }
  func.func @transform_11(%arg0: i32, %arg1: i32) -> (i32, i32) {
    %c0_i32 = arith.constant 0 : i32
    %c0_i32_0 = arith.constant 0 : i32
    %c0_i32_1 = arith.constant 0 : i32
    return %c0_i32, %c0_i32_0 : i32, i32
  }
  func.func @transform_12(%arg0: i32, %arg1: i32) -> (i32, i32) {
    %c0_i32 = arith.constant 0 : i32
    %c0_i32_0 = arith.constant 0 : i32
    %c0_i32_1 = arith.constant 0 : i32
    return %c0_i32, %c0_i32_0 : i32, i32
  }
  func.func @transform_13(%arg0: i32, %arg1: i32) -> (i32, i32) {
    %c0_i32 = arith.constant 0 : i32
    %c0_i32_0 = arith.constant 0 : i32
    %c0_i32_1 = arith.constant 0 : i32
    return %c0_i32, %c0_i32_0 : i32, i32
  }
  func.func @transform_14(%arg0: i32, %arg1: i32) -> (i32, i32) {
    %c0_i32 = arith.constant 0 : i32
    %c0_i32_0 = arith.constant 0 : i32
    %c0_i32_1 = arith.constant 0 : i32
    return %c0_i32, %c0_i32_0 : i32, i32
  }
  func.func @transform_15(%arg0: i32, %arg1: i32) -> (i32, i32) {
    %c0_i32 = arith.constant 0 : i32
    %c0_i32_0 = arith.constant 0 : i32
    %c0_i32_1 = arith.constant 0 : i32
    return %c0_i32, %c0_i32_0 : i32, i32
  }
  func.func @transform_16(%arg0: i32, %arg1: i32) -> (i32, i32) {
    %c0_i32 = arith.constant 0 : i32
    %c0_i32_0 = arith.constant 0 : i32
    %c0_i32_1 = arith.constant 0 : i32
    return %c0_i32, %c0_i32_0 : i32, i32
  }
  func.func @transform_17(%arg0: i32, %arg1: i32) -> (i32, i32) {
    %c0_i32 = arith.constant 0 : i32
    %c0_i32_0 = arith.constant 0 : i32
    %c0_i32_1 = arith.constant 0 : i32
    return %c0_i32, %c0_i32_0 : i32, i32
  }
  func.func @transform_18(%arg0: i32, %arg1: i32) -> (i32, i32) {
    %c0_i32 = arith.constant 0 : i32
    %c0_i32_0 = arith.constant 0 : i32
    %c0_i32_1 = arith.constant 0 : i32
    return %c0_i32, %c0_i32_0 : i32, i32
  }
  func.func @transform_19(%arg0: i32, %arg1: i32) -> (i32, i32, i32) {
    %c0_i32 = arith.constant 0 : i32
    %c0_i32_0 = arith.constant 0 : i32
    return %arg0, %arg1, %c0_i32 : i32, i32, i32
  }
}

</mosaic_0001>

<llo_original>
// kernel: tpu_custom_call.1
$region0: #{tpu_custom_call.1}
  #allocation0 [shape = 'u32[]', space=smem, size = 0x4, offset = 0x4, fixed_abs, tag = 'smem constant byte address 0x4 - core index']
  #allocation1 [shape = 'u32[72,128]{1,0:T(1,128)}', space=vmem, size = 0x9000, scoped, tag = 'internal scratch']
  #allocation2 [shape = 'f32[4,32,128]{2,1,0:T(8,128)}', space=vmem, size = 0x10000, scoped, tag = 'scratch operand']
  #allocation3 [shape = 'f32[4,128,32]{2,1,0:T(8,128)}', space=vmem, size = 0x40000, scoped, tag = 'scratch operand']
  %s0 = inlined_call_operand.hbm [shape: f32[2,128,128], index: 0, kind: input, shape index: {}]
  %s1 = inlined_call_operand.hbm [shape: f32[2,128,128], index: 1, kind: input, shape index: {}]
  %s2 = inlined_call_operand.hbm [shape: f32[2,128,128], index: 2, kind: input, shape index: {}]
  %s3 = inlined_call_operand.hbm [shape: f32[128,128], index: 3, kind: input, shape index: {}]
  %s4 = inlined_call_operand.vmem [shape: f32[1,128], index: 4, kind: input, shape index: {}]
  %s5 = inlined_call_operand.hbm [shape: f32[128,128], index: 5, kind: input, shape index: {}]
  %s6 = inlined_call_operand.vmem [shape: f32[1,128], index: 6, kind: input, shape index: {}]
  %s7 = inlined_call_operand.hbm [shape: f32[128,128], index: 7, kind: input, shape index: {}]
  %s8 = inlined_call_operand.vmem [shape: f32[1,128], index: 8, kind: input, shape index: {}]
  %s9 = inlined_call_operand.hbm [shape: f32[128,128], index: 9, kind: input, shape index: {}]
  %s10 = inlined_call_operand.vmem [shape: f32[1,128], index: 10, kind: input, shape index: {}]
  %s11 = inlined_call_operand.vmem [shape: f32[1,128], index: 11, kind: input, shape index: {}]
  %s12 = inlined_call_operand.vmem [shape: f32[1,128], index: 12, kind: input, shape index: {}]
  %s13 = inlined_call_operand.hbm [shape: f32[128,256], index: 13, kind: input, shape index: {}]
  %s14 = inlined_call_operand.vmem [shape: f32[1,256], index: 14, kind: input, shape index: {}]
  %s15 = inlined_call_operand.hbm [shape: f32[256,128], index: 15, kind: input, shape index: {}]
  %s16 = inlined_call_operand.vmem [shape: f32[1,128], index: 16, kind: input, shape index: {}]
  %s17 = inlined_call_operand.vmem [shape: f32[1,128], index: 17, kind: input, shape index: {}]
  %s18 = inlined_call_operand.vmem [shape: f32[1,128], index: 18, kind: input, shape index: {}]
  %s19 = inlined_call_operand.hbm [shape: f32[2,128,128], index: 19, kind: output, shape index: {}]
  %s20 = sld [smem:[#allocation0]]
  $region149: #{tpu_custom_call.1} parent=0
    _
  %s22 = ssub.s32 1, %s20
  %s23 = scalar_select 0, %s22, %s20
  $region1: #{tpu_custom_call.1} parent=0
    #allocation4 [shape = 'u8[131072]{0}', space=vmem, size = 0x20000, scoped, tag = 'input window, operand 0']
    #allocation5 [shape = 's32[2]{0}', space=sflag, size = 0x8, scoped, tag = 'scoped memory for tpu_custom_call.1']
    #allocation6 [shape = 's32[2]{0}', space=sflag, size = 0x8, scoped, tag = 'scoped memory for tpu_custom_call.1']
    #allocation7 [shape = 'u8[131072]{0}', space=vmem, size = 0x20000, scoped, tag = 'input window, operand 1']
    #allocation8 [shape = 's32[2]{0}', space=sflag, size = 0x8, scoped, tag = 'scoped memory for tpu_custom_call.1']
    #allocation9 [shape = 'u8[131072]{0}', space=vmem, size = 0x20000, scoped, tag = 'input window, operand 2']
    #allocation10 [shape = 'u8[65536]{0}', space=vmem, size = 0x10000, scoped, tag = 'input window, operand 3, single buffered']
    #allocation11 [shape = 's32[1]{0}', space=sflag, size = 0x4, scoped, tag = 'scoped memory for tpu_custom_call.1']
    #allocation12 [shape = 'u8[65536]{0}', space=vmem, size = 0x10000, scoped, tag = 'input window, operand 5, single buffered']
    #allocation13 [shape = 'u8[65536]{0}', space=vmem, size = 0x10000, scoped, tag = 'input window, operand 7, single buffered']
    #allocation14 [shape = 's32[1]{0}', space=sflag, size = 0x4, scoped, tag = 'scoped memory for tpu_custom_call.1']
    #allocation15 [shape = 'u8[65536]{0}', space=vmem, size = 0x10000, scoped, tag = 'input window, operand 9, single buffered']
    #allocation16 [shape = 'u8[131072]{0}', space=vmem, size = 0x20000, scoped, tag = 'input window, operand 13, single buffered']
    #allocation17 [shape = 's32[1]{0}', space=sflag, size = 0x4, scoped, tag = 'scoped memory for tpu_custom_call.1']
    #allocation18 [shape = 'u8[131072]{0}', space=vmem, size = 0x20000, scoped, tag = 'input window, operand 15, single buffered']
    #allocation19 [shape = 'u8[131072]{0}', space=vmem, size = 0x20000, scoped, tag = 'output window, operand 0']
    %24 = vsyncpa [#allocation5], 0
    %s25 = scalar_lea.sflag [#allocation5], 1
    %26 = vsyncpa %s25, 0
    %27 = vsyncpa [#allocation8], 0
    %s28 = scalar_lea.sflag [#allocation8], 1
    %29 = vsyncpa %s28, 0
    %30 = vsyncpa [#allocation11], 0
    %31 = vsyncpa [#allocation14], 0
    %32 = vsyncpa [#allocation17], 0
    %33 = vsyncpa [#allocation6], 0
    %s34 = scalar_lea.sflag [#allocation6], 1
    %35 = vsyncpa %s34, 0
    loop: start=0, step=1, limit=4
    $region2: #{tpu_custom_call.1} parent=1 // loop_pre_header
      _
    $region3: #{tpu_custom_call.1} parent=1 // loop_header
      %s37 = sphi 0, %s41
      %p38 = scmp.ge.s32.totalorder %s37, 4
      %s44 = sphi 0, %s56
      %s45 = sphi 0, %s52
      %s46 = sphi 0, %s44
      %s47 = sphi 0, %s45
      %s48 = sphi 0, %s46
      %s49 = sphi 0, %s47
      %s61 = sphi 0, %s63
      %s64 = sphi 0, %s61
      %s65 = sphi 0, %s64
      %s81 = sphi 0, %s65
      %s87 = sphi 0, %s89
      %s90 = sphi 0, %s87
      %s91 = sphi 0, %s90
      %s107 = sphi 0, %s91
      %s113 = sphi 0, %s115
      %s116 = sphi 0, %s113
      %s117 = sphi 0, %s116
      %s133 = sphi 0, %s117
      %s137 = sphi 0, %s137
      %s139 = sphi 0, %s137
      %s140 = sphi 0, %s139
      %s154 = sphi 0, %s140
      %s158 = sphi 0, %s158
      %s160 = sphi 0, %s158
      %s161 = sphi 0, %s160
      %s175 = sphi 0, %s161
      %s179 = sphi 0, %s179
      %s181 = sphi 0, %s179
      %s182 = sphi 0, %s181
      %s196 = sphi 0, %s182
      %s200 = sphi 0, %s200
      %s202 = sphi 0, %s200
      %s203 = sphi 0, %s202
      %s217 = sphi 0, %s203
      %s221 = sphi 0, %s221
      %s223 = sphi 0, %s221
      %s224 = sphi 0, %s223
      %s238 = sphi 0, %s224
      %s242 = sphi 0, %s242
      %s244 = sphi 0, %s242
      %s245 = sphi 0, %s244
      %s259 = sphi 0, %s245
      %s263 = sphi 0, %s263
      %s265 = sphi 0, %s263
      %s266 = sphi 0, %s265
      %s280 = sphi 0, %s266
      %s284 = sphi 0, %s284
      %s286 = sphi 0, %s284
      %s287 = sphi 0, %s286
      %s301 = sphi 0, %s287
      %s305 = sphi 0, %s305
      %s307 = sphi 0, %s305
      %s308 = sphi 0, %s307
      %s322 = sphi 0, %s308
      %s326 = sphi 0, %s326
      %s328 = sphi 0, %s326
      %s329 = sphi 0, %s328
      %s343 = sphi 0, %s329
      %s347 = sphi 0, %s347
      %s349 = sphi 0, %s347
      %s350 = sphi 0, %s349
      %s364 = sphi 0, %s350
      %s368 = sphi 0, %s368
      %s370 = sphi 0, %s368
      %s371 = sphi 0, %s370
      %s385 = sphi 0, %s371
      %s389 = sphi 0, %s389
      %s391 = sphi 0, %s389
      %s392 = sphi 0, %s391
      %s406 = sphi 0, %s392
      %s410 = sphi 0, %s410
      %s412 = sphi 0, %s410
      %s413 = sphi 0, %s412
      %s427 = sphi 0, %s413
      %s431 = sphi 0, %s431
      %s433 = sphi 0, %s431
      %s434 = sphi 0, %s433
      %s448 = sphi 0, %s434
      %s452 = sphi 0, %s452
      %s454 = sphi 0, %s452
      %s455 = sphi 0, %s454
      %s469 = sphi 0, %s455
      %s477 = sphi 0, %s479
      %s480 = sphi 0, %s477
      %s481 = sphi 0, %s480
      %s497 = sphi 0, %s481
    $region4: #{tpu_custom_call.1} parent=1 // loop_header_branch
      %40 = sbr.rel (%p38) target = $region8
    $region5: #{tpu_custom_call.1} parent=1 // loop_body
      %s42 = ssub.s32 %s37, 1
      %s43 = ssub.s32 %s37, 2
      %s50 = sadd.s32 1, %s45
      %p51 = scmp.ge.s32.totalorder %s50, 1
      %s52 = scalar_select %p51, 0, %s50
      %s53 = sadd.s32 1, %s44
      %s54 = scalar_select %p51, %s53, %s44
      %p55 = scmp.ge.s32.totalorder %s54, 2
      %s56 = scalar_select %p55, 0, %s54
      %s57 = ssub.s32 %s44, %s56
      %s58 = ssub.s32 %s45, %s52
      %s59 = sor.u32 %s57, %s58
      %p60 = scmp.eq.s32.totalorder %s59, 0
      %s62 = sadd.s32 %s61, 1
      %s63 = scalar_select %p60, %s61, %s62
      %p66 = pneg %p60
      %p67 = scmp.eq.s32.totalorder %s37, 1
      %p68 = por %p66, %p67
      %p69 = scmp.ne.s32.totalorder %s61, %s64
      %p70 = scmp.eq.s32.totalorder %s37, 0
      %p71 = por %p69, %p70
      %p72 = scmp.ne.s32.totalorder %s61, %s64
      %p73 = scmp.eq.s32.totalorder %s42, 1
      %p74 = por %p72, %p73
      %p75 = scmp.ne.s32.totalorder %s64, %s65
      %p76 = scmp.eq.s32.totalorder %s42, 0
      %p77 = por %p75, %p76
      %p78 = scmp.ne.s32.totalorder %s64, %s65
      %p79 = scmp.eq.s32.totalorder %s43, 1
      %p80 = por %p78, %p79
      %p82 = scmp.ne.s32.totalorder %s65, %s81
      %p83 = scmp.eq.s32.totalorder %s43, 0
      %p84 = por %p82, %p83
      %s85 = ssub.s32 %s44, %s56
      %p86 = scmp.eq.s32.totalorder %s85, 0
      %s88 = sadd.s32 %s87, 1
      %s89 = scalar_select %p86, %s87, %s88
      %p92 = pneg %p86
      %p93 = scmp.eq.s32.totalorder %s37, 1
      %p94 = por %p92, %p93
      %p95 = scmp.ne.s32.totalorder %s87, %s90
      %p96 = scmp.eq.s32.totalorder %s37, 0
      %p97 = por %p95, %p96
      %p98 = scmp.ne.s32.totalorder %s87, %s90
      %p99 = scmp.eq.s32.totalorder %s42, 1
      %p100 = por %p98, %p99
      %p101 = scmp.ne.s32.totalorder %s90, %s91
      %p102 = scmp.eq.s32.totalorder %s42, 0
      %p103 = por %p101, %p102
      %p104 = scmp.ne.s32.totalorder %s90, %s91
      %p105 = scmp.eq.s32.totalorder %s43, 1
      %p106 = por %p104, %p105
      %p108 = scmp.ne.s32.totalorder %s91, %s107
      %p109 = scmp.eq.s32.totalorder %s43, 0
      %p110 = por %p108, %p109
      %s111 = ssub.s32 %s44, %s56
      %p112 = scmp.eq.s32.totalorder %s111, 0
      %s114 = sadd.s32 %s113, 1
      %s115 = scalar_select %p112, %s113, %s114
      %p118 = pneg %p112
      %p119 = scmp.eq.s32.totalorder %s37, 1
      %p120 = por %p118, %p119
      %p121 = scmp.ne.s32.totalorder %s113, %s116
      %p122 = scmp.eq.s32.totalorder %s37, 0
      %p123 = por %p121, %p122
      %p124 = scmp.ne.s32.totalorder %s113, %s116
      %p125 = scmp.eq.s32.totalorder %s42, 1
      %p126 = por %p124, %p125
      %p127 = scmp.ne.s32.totalorder %s116, %s117
      %p128 = scmp.eq.s32.totalorder %s42, 0
      %p129 = por %p127, %p128
      %p130 = scmp.ne.s32.totalorder %s116, %s117
      %p131 = scmp.eq.s32.totalorder %s43, 1
      %p132 = por %p130, %p131
      %p134 = scmp.ne.s32.totalorder %s117, %s133
      %p135 = scmp.eq.s32.totalorder %s43, 0
      %p136 = por %p134, %p135
      %s138 = sadd.s32 %s137, 1
      %p141 = scmp.eq.s32.totalorder %s37, 1
      %p142 = scmp.ne.s32.totalorder %s137, %s139
      %p143 = scmp.eq.s32.totalorder %s37, 0
      %p144 = por %p142, %p143
      %p145 = scmp.ne.s32.totalorder %s137, %s139
      %p146 = scmp.eq.s32.totalorder %s42, 1
      %p147 = por %p145, %p146
      %p148 = scmp.ne.s32.totalorder %s139, %s140
      %p149 = scmp.eq.s32.totalorder %s42, 0
      %p150 = por %p148, %p149
      %p151 = scmp.ne.s32.totalorder %s139, %s140
      %p152 = scmp.eq.s32.totalorder %s43, 1
      %p153 = por %p151, %p152
      %p155 = scmp.ne.s32.totalorder %s140, %s154
      %p156 = scmp.eq.s32.totalorder %s43, 0
      %p157 = por %p155, %p156
      %s159 = sadd.s32 %s158, 1
      %p162 = scmp.eq.s32.totalorder %s37, 1
      %p163 = scmp.ne.s32.totalorder %s158, %s160
      %p164 = scmp.eq.s32.totalorder %s37, 0
      %p165 = por %p163, %p164
      %p166 = scmp.ne.s32.totalorder %s158, %s160
      %p167 = scmp.eq.s32.totalorder %s42, 1
      %p168 = por %p166, %p167
      %p169 = scmp.ne.s32.totalorder %s160, %s161
      %p170 = scmp.eq.s32.totalorder %s42, 0
      %p171 = por %p169, %p170
      %p172 = scmp.ne.s32.totalorder %s160, %s161
      %p173 = scmp.eq.s32.totalorder %s43, 1
      %p174 = por %p172, %p173
      %p176 = scmp.ne.s32.totalorder %s161, %s175
      %p177 = scmp.eq.s32.totalorder %s43, 0
      %p178 = por %p176, %p177
      %s180 = sadd.s32 %s179, 1
      %p183 = scmp.eq.s32.totalorder %s37, 1
      %p184 = scmp.ne.s32.totalorder %s179, %s181
      %p185 = scmp.eq.s32.totalorder %s37, 0
      %p186 = por %p184, %p185
      %p187 = scmp.ne.s32.totalorder %s179, %s181
      %p188 = scmp.eq.s32.totalorder %s42, 1
      %p189 = por %p187, %p188
      %p190 = scmp.ne.s32.totalorder %s181, %s182
      %p191 = scmp.eq.s32.totalorder %s42, 0
      %p192 = por %p190, %p191
      %p193 = scmp.ne.s32.totalorder %s181, %s182
      %p194 = scmp.eq.s32.totalorder %s43, 1
      %p195 = por %p193, %p194
      %p197 = scmp.ne.s32.totalorder %s182, %s196
      %p198 = scmp.eq.s32.totalorder %s43, 0
      %p199 = por %p197, %p198
      %s201 = sadd.s32 %s200, 1
      %p204 = scmp.eq.s32.totalorder %s37, 1
      %p205 = scmp.ne.s32.totalorder %s200, %s202
      %p206 = scmp.eq.s32.totalorder %s37, 0
      %p207 = por %p205, %p206
      %p208 = scmp.ne.s32.totalorder %s200, %s202
      %p209 = scmp.eq.s32.totalorder %s42, 1
      %p210 = por %p208, %p209
      %p211 = scmp.ne.s32.totalorder %s202, %s203
      %p212 = scmp.eq.s32.totalorder %s42, 0
      %p213 = por %p211, %p212
      %p214 = scmp.ne.s32.totalorder %s202, %s203
      %p215 = scmp.eq.s32.totalorder %s43, 1
      %p216 = por %p214, %p215
      %p218 = scmp.ne.s32.totalorder %s203, %s217
      %p219 = scmp.eq.s32.totalorder %s43, 0
      %p220 = por %p218, %p219
      %s222 = sadd.s32 %s221, 1
      %p225 = scmp.eq.s32.totalorder %s37, 1
      %p226 = scmp.ne.s32.totalorder %s221, %s223
      %p227 = scmp.eq.s32.totalorder %s37, 0
      %p228 = por %p226, %p227
      %p229 = scmp.ne.s32.totalorder %s221, %s223
      %p230 = scmp.eq.s32.totalorder %s42, 1
      %p231 = por %p229, %p230
      %p232 = scmp.ne.s32.totalorder %s223, %s224
      %p233 = scmp.eq.s32.totalorder %s42, 0
      %p234 = por %p232, %p233
      %p235 = scmp.ne.s32.totalorder %s223, %s224
      %p236 = scmp.eq.s32.totalorder %s43, 1
      %p237 = por %p235, %p236
      %p239 = scmp.ne.s32.totalorder %s224, %s238
      %p240 = scmp.eq.s32.totalorder %s43, 0
      %p241 = por %p239, %p240
      %s243 = sadd.s32 %s242, 1
      %p246 = scmp.eq.s32.totalorder %s37, 1
      %p247 = scmp.ne.s32.totalorder %s242, %s244
      %p248 = scmp.eq.s32.totalorder %s37, 0
      %p249 = por %p247, %p248
      %p250 = scmp.ne.s32.totalorder %s242, %s244
      %p251 = scmp.eq.s32.totalorder %s42, 1
      %p252 = por %p250, %p251
      %p253 = scmp.ne.s32.totalorder %s244, %s245
      %p254 = scmp.eq.s32.totalorder %s42, 0
      %p255 = por %p253, %p254
      %p256 = scmp.ne.s32.totalorder %s244, %s245
      %p257 = scmp.eq.s32.totalorder %s43, 1
      %p258 = por %p256, %p257
      %p260 = scmp.ne.s32.totalorder %s245, %s259
      %p261 = scmp.eq.s32.totalorder %s43, 0
      %p262 = por %p260, %p261
      %s264 = sadd.s32 %s263, 1
      %p267 = scmp.eq.s32.totalorder %s37, 1
      %p268 = scmp.ne.s32.totalorder %s263, %s265
      %p269 = scmp.eq.s32.totalorder %s37, 0
      %p270 = por %p268, %p269
      %p271 = scmp.ne.s32.totalorder %s263, %s265
      %p272 = scmp.eq.s32.totalorder %s42, 1
      %p273 = por %p271, %p272
      %p274 = scmp.ne.s32.totalorder %s265, %s266
      %p275 = scmp.eq.s32.totalorder %s42, 0
      %p276 = por %p274, %p275
      %p277 = scmp.ne.s32.totalorder %s265, %s266
      %p278 = scmp.eq.s32.totalorder %s43, 1
      %p279 = por %p277, %p278
      %p281 = scmp.ne.s32.totalorder %s266, %s280
      %p282 = scmp.eq.s32.totalorder %s43, 0
      %p283 = por %p281, %p282
      %s285 = sadd.s32 %s284, 1
      %p288 = scmp.eq.s32.totalorder %s37, 1
      %p289 = scmp.ne.s32.totalorder %s284, %s286
      %p290 = scmp.eq.s32.totalorder %s37, 0
      %p291 = por %p289, %p290
      %p292 = scmp.ne.s32.totalorder %s284, %s286
      %p293 = scmp.eq.s32.totalorder %s42, 1
      %p294 = por %p292, %p293
      %p295 = scmp.ne.s32.totalorder %s286, %s287
      %p296 = scmp.eq.s32.totalorder %s42, 0
      %p297 = por %p295, %p296
      %p298 = scmp.ne.s32.totalorder %s286, %s287
      %p299 = scmp.eq.s32.totalorder %s43, 1
      %p300 = por %p298, %p299
      %p302 = scmp.ne.s32.totalorder %s287, %s301
      %p303 = scmp.eq.s32.totalorder %s43, 0
      %p304 = por %p302, %p303
      %s306 = sadd.s32 %s305, 1
      %p309 = scmp.eq.s32.totalorder %s37, 1
      %p310 = scmp.ne.s32.totalorder %s305, %s307
      %p311 = scmp.eq.s32.totalorder %s37, 0
      %p312 = por %p310, %p311
      %p313 = scmp.ne.s32.totalorder %s305, %s307
      %p314 = scmp.eq.s32.totalorder %s42, 1
      %p315 = por %p313, %p314
      %p316 = scmp.ne.s32.totalorder %s307, %s308
      %p317 = scmp.eq.s32.totalorder %s42, 0
      %p318 = por %p316, %p317
      %p319 = scmp.ne.s32.totalorder %s307, %s308
      %p320 = scmp.eq.s32.totalorder %s43, 1
      %p321 = por %p319, %p320
      %p323 = scmp.ne.s32.totalorder %s308, %s322
      %p324 = scmp.eq.s32.totalorder %s43, 0
      %p325 = por %p323, %p324
      %s327 = sadd.s32 %s326, 1
      %p330 = scmp.eq.s32.totalorder %s37, 1
      %p331 = scmp.ne.s32.totalorder %s326, %s328
      %p332 = scmp.eq.s32.totalorder %s37, 0
      %p333 = por %p331, %p332
      %p334 = scmp.ne.s32.totalorder %s326, %s328
      %p335 = scmp.eq.s32.totalorder %s42, 1
      %p336 = por %p334, %p335
      %p337 = scmp.ne.s32.totalorder %s328, %s329
      %p338 = scmp.eq.s32.totalorder %s42, 0
      %p339 = por %p337, %p338
      %p340 = scmp.ne.s32.totalorder %s328, %s329
      %p341 = scmp.eq.s32.totalorder %s43, 1
      %p342 = por %p340, %p341
      %p344 = scmp.ne.s32.totalorder %s329, %s343
      %p345 = scmp.eq.s32.totalorder %s43, 0
      %p346 = por %p344, %p345
      %s348 = sadd.s32 %s347, 1
      %p351 = scmp.eq.s32.totalorder %s37, 1
      %p352 = scmp.ne.s32.totalorder %s347, %s349
      %p353 = scmp.eq.s32.totalorder %s37, 0
      %p354 = por %p352, %p353
      %p355 = scmp.ne.s32.totalorder %s347, %s349
      %p356 = scmp.eq.s32.totalorder %s42, 1
      %p357 = por %p355, %p356
      %p358 = scmp.ne.s32.totalorder %s349, %s350
      %p359 = scmp.eq.s32.totalorder %s42, 0
      %p360 = por %p358, %p359
      %p361 = scmp.ne.s32.totalorder %s349, %s350
      %p362 = scmp.eq.s32.totalorder %s43, 1
      %p363 = por %p361, %p362
      %p365 = scmp.ne.s32.totalorder %s350, %s364
      %p366 = scmp.eq.s32.totalorder %s43, 0
      %p367 = por %p365, %p366
      %s369 = sadd.s32 %s368, 1
      %p372 = scmp.eq.s32.totalorder %s37, 1
      %p373 = scmp.ne.s32.totalorder %s368, %s370
      %p374 = scmp.eq.s32.totalorder %s37, 0
      %p375 = por %p373, %p374
      %p376 = scmp.ne.s32.totalorder %s368, %s370
      %p377 = scmp.eq.s32.totalorder %s42, 1
      %p378 = por %p376, %p377
      %p379 = scmp.ne.s32.totalorder %s370, %s371
      %p380 = scmp.eq.s32.totalorder %s42, 0
      %p381 = por %p379, %p380
      %p382 = scmp.ne.s32.totalorder %s370, %s371
      %p383 = scmp.eq.s32.totalorder %s43, 1
      %p384 = por %p382, %p383
      %p386 = scmp.ne.s32.totalorder %s371, %s385
      %p387 = scmp.eq.s32.totalorder %s43, 0
      %p388 = por %p386, %p387
      %s390 = sadd.s32 %s389, 1
      %p393 = scmp.eq.s32.totalorder %s37, 1
      %p394 = scmp.ne.s32.totalorder %s389, %s391
      %p395 = scmp.eq.s32.totalorder %s37, 0
      %p396 = por %p394, %p395
      %p397 = scmp.ne.s32.totalorder %s389, %s391
      %p398 = scmp.eq.s32.totalorder %s42, 1
      %p399 = por %p397, %p398
      %p400 = scmp.ne.s32.totalorder %s391, %s392
      %p401 = scmp.eq.s32.totalorder %s42, 0
      %p402 = por %p400, %p401
      %p403 = scmp.ne.s32.totalorder %s391, %s392
      %p404 = scmp.eq.s32.totalorder %s43, 1
      %p405 = por %p403, %p404
      %p407 = scmp.ne.s32.totalorder %s392, %s406
      %p408 = scmp.eq.s32.totalorder %s43, 0
      %p409 = por %p407, %p408
      %s411 = sadd.s32 %s410, 1
      %p414 = scmp.eq.s32.totalorder %s37, 1
      %p415 = scmp.ne.s32.totalorder %s410, %s412
      %p416 = scmp.eq.s32.totalorder %s37, 0
      %p417 = por %p415, %p416
      %p418 = scmp.ne.s32.totalorder %s410, %s412
      %p419 = scmp.eq.s32.totalorder %s42, 1
      %p420 = por %p418, %p419
      %p421 = scmp.ne.s32.totalorder %s412, %s413
      %p422 = scmp.eq.s32.totalorder %s42, 0
      %p423 = por %p421, %p422
      %p424 = scmp.ne.s32.totalorder %s412, %s413
      %p425 = scmp.eq.s32.totalorder %s43, 1
      %p426 = por %p424, %p425
      %p428 = scmp.ne.s32.totalorder %s413, %s427
      %p429 = scmp.eq.s32.totalorder %s43, 0
      %p430 = por %p428, %p429
      %s432 = sadd.s32 %s431, 1
      %p435 = scmp.eq.s32.totalorder %s37, 1
      %p436 = scmp.ne.s32.totalorder %s431, %s433
      %p437 = scmp.eq.s32.totalorder %s37, 0
      %p438 = por %p436, %p437
      %p439 = scmp.ne.s32.totalorder %s431, %s433
      %p440 = scmp.eq.s32.totalorder %s42, 1
      %p441 = por %p439, %p440
      %p442 = scmp.ne.s32.totalorder %s433, %s434
      %p443 = scmp.eq.s32.totalorder %s42, 0
      %p444 = por %p442, %p443
      %p445 = scmp.ne.s32.totalorder %s433, %s434
      %p446 = scmp.eq.s32.totalorder %s43, 1
      %p447 = por %p445, %p446
      %p449 = scmp.ne.s32.totalorder %s434, %s448
      %p450 = scmp.eq.s32.totalorder %s43, 0
      %p451 = por %p449, %p450
      %s453 = sadd.s32 %s452, 1
      %p456 = scmp.eq.s32.totalorder %s37, 1
      %p457 = scmp.ne.s32.totalorder %s452, %s454
      %p458 = scmp.eq.s32.totalorder %s37, 0
      %p459 = por %p457, %p458
      %p460 = scmp.ne.s32.totalorder %s452, %s454
      %p461 = scmp.eq.s32.totalorder %s42, 1
      %p462 = por %p460, %p461
      %p463 = scmp.ne.s32.totalorder %s454, %s455
      %p464 = scmp.eq.s32.totalorder %s42, 0
      %p465 = por %p463, %p464
      %p466 = scmp.ne.s32.totalorder %s454, %s455
      %p467 = scmp.eq.s32.totalorder %s43, 1
      %p468 = por %p466, %p467
      %p470 = scmp.ne.s32.totalorder %s455, %s469
      %p471 = scmp.eq.s32.totalorder %s43, 0
      %p472 = por %p470, %p471
      %s473 = ssub.s32 %s44, %s56
      %s474 = ssub.s32 %s45, %s52
      %s475 = sor.u32 %s473, %s474
      %p476 = scmp.eq.s32.totalorder %s475, 0
      %s478 = sadd.s32 %s477, 1
      %s479 = scalar_select %p476, %s477, %s478
      %p482 = pneg %p476
      %p483 = scmp.eq.s32.totalorder %s37, 1
      %p484 = por %p482, %p483
      %p485 = scmp.ne.s32.totalorder %s477, %s480
      %p486 = scmp.eq.s32.totalorder %s37, 0
      %p487 = por %p485, %p486
      %p488 = scmp.ne.s32.totalorder %s477, %s480
      %p489 = scmp.eq.s32.totalorder %s42, 1
      %p490 = por %p488, %p489
      %p491 = scmp.ne.s32.totalorder %s480, %s481
      %p492 = scmp.eq.s32.totalorder %s42, 0
      %p493 = por %p491, %p492
      %p494 = scmp.ne.s32.totalorder %s480, %s481
      %p495 = scmp.eq.s32.totalorder %s43, 1
      %p496 = por %p494, %p495
      %p498 = scmp.ne.s32.totalorder %s481, %s497
      %p499 = scmp.eq.s32.totalorder %s43, 0
      %p500 = por %p498, %p499
      %p501 = scmp.le.s32.totalorder 1, %s37
      %p502 = scmp.lt.s32.totalorder %s37, 3
      %p503 = pnand %p501, %p502
      %p504 = pneg %p503
      // Predicated region
      $region9: #{tpu_custom_call.1} parent=5 // pred_check
        _
      $region10: #{tpu_custom_call.1} parent=5 // pred_check_branch
        %506 = sbr.rel (%p503) target = $region12
      $region11: #{tpu_custom_call.1} parent=5 // pred_region
        %s507 = ssub.s32 %s37, 1
        // Predicated region
        $region13: #{tpu_custom_call.1} parent=11 // pred_check
          %p508 = pneg %p150
        $region14: #{tpu_custom_call.1} parent=11 // pred_check_branch
          %510 = sbr.rel (%p508) target = $region16
        $region15: #{tpu_custom_call.1} parent=11 // pred_region
          %512 = vsyncadd [#allocation11], 0
          %s513 = sshll.u32 %s3, 4
          %s514 = int_to_ptr.hbm [resolvable:$true] %s513
          %s515 = sshll.u32 [#allocation10], 4
          %s516 = int_to_ptr.vmem [resolvable:$true] %s515
          %521 = dma.hbm_to_vmem [thread:$0]  %s514, 2048, %s516, [#allocation11], 128, 128, 8
        $region16: #{tpu_custom_call.1} parent=11 // pred_fallthru
          _
        // Predicated region
        $region17: #{tpu_custom_call.1} parent=11 // pred_check
          %p522 = pneg %p171
        $region18: #{tpu_custom_call.1} parent=11 // pred_check_branch
          %524 = sbr.rel (%p522) target = $region20
        $region19: #{tpu_custom_call.1} parent=11 // pred_region
          _
        $region20: #{tpu_custom_call.1} parent=11 // pred_fallthru
          _
        // Predicated region
        $region21: #{tpu_custom_call.1} parent=11 // pred_check
          %p525 = pneg %p192
        $region22: #{tpu_custom_call.1} parent=11 // pred_check_branch
          %527 = sbr.rel (%p525) target = $region24
        $region23: #{tpu_custom_call.1} parent=11 // pred_region
          %529 = vsyncadd [#allocation11], 0
          %s530 = sshll.u32 %s5, 4
          %s531 = int_to_ptr.hbm [resolvable:$true] %s530
          %s532 = sshll.u32 [#allocation12], 4
          %s533 = int_to_ptr.vmem [resolvable:$true] %s532
          %538 = dma.hbm_to_vmem [thread:$0]  %s531, 2048, %s533, [#allocation11], 128, 128, 8
        $region24: #{tpu_custom_call.1} parent=11 // pred_fallthru
          _
        // Predicated region
        $region25: #{tpu_custom_call.1} parent=11 // pred_check
          %p539 = pneg %p213
        $region26: #{tpu_custom_call.1} parent=11 // pred_check_branch
          %541 = sbr.rel (%p539) target = $region28
        $region27: #{tpu_custom_call.1} parent=11 // pred_region
          _
        $region28: #{tpu_custom_call.1} parent=11 // pred_fallthru
          _
        // Predicated region
        $region29: #{tpu_custom_call.1} parent=11 // pred_check
          %p542 = pneg %p234
        $region30: #{tpu_custom_call.1} parent=11 // pred_check_branch
          %544 = sbr.rel (%p542) target = $region32
        $region31: #{tpu_custom_call.1} parent=11 // pred_region
          %546 = vsyncadd [#allocation14], 0
          %s547 = sshll.u32 %s7, 4
          %s548 = int_to_ptr.hbm [resolvable:$true] %s547
          %s549 = sshll.u32 [#allocation13], 4
          %s550 = int_to_ptr.vmem [resolvable:$true] %s549
          %555 = dma.hbm_to_vmem [thread:$0]  %s548, 2048, %s550, [#allocation14], 128, 128, 8
        $region32: #{tpu_custom_call.1} parent=11 // pred_fallthru
          _
        // Predicated region
        $region33: #{tpu_custom_call.1} parent=11 // pred_check
          %p556 = pneg %p255
        $region34: #{tpu_custom_call.1} parent=11 // pred_check_branch
          %558 = sbr.rel (%p556) target = $region36
        $region35: #{tpu_custom_call.1} parent=11 // pred_region
          _
        $region36: #{tpu_custom_call.1} parent=11 // pred_fallthru
          _
        // Predicated region
        $region37: #{tpu_custom_call.1} parent=11 // pred_check
          %p559 = pneg %p276
        $region38: #{tpu_custom_call.1} parent=11 // pred_check_branch
          %561 = sbr.rel (%p559) target = $region40
        $region39: #{tpu_custom_call.1} parent=11 // pred_region
          %563 = vsyncadd [#allocation14], 0
          %s564 = sshll.u32 %s9, 4
          %s565 = int_to_ptr.hbm [resolvable:$true] %s564
          %s566 = sshll.u32 [#allocation15], 4
          %s567 = int_to_ptr.vmem [resolvable:$true] %s566
          %572 = dma.hbm_to_vmem [thread:$0]  %s565, 2048, %s567, [#allocation14], 128, 128, 8
        $region40: #{tpu_custom_call.1} parent=11 // pred_fallthru
          _
        // Predicated region
        $region41: #{tpu_custom_call.1} parent=11 // pred_check
          %p573 = pneg %p297
        $region42: #{tpu_custom_call.1} parent=11 // pred_check_branch
          %575 = sbr.rel (%p573) target = $region44
        $region43: #{tpu_custom_call.1} parent=11 // pred_region
          _
        $region44: #{tpu_custom_call.1} parent=11 // pred_fallthru
          _
        // Predicated region
        $region45: #{tpu_custom_call.1} parent=11 // pred_check
          %p576 = pneg %p318
        $region46: #{tpu_custom_call.1} parent=11 // pred_check_branch
          %578 = sbr.rel (%p576) target = $region48
        $region47: #{tpu_custom_call.1} parent=11 // pred_region
          _
        $region48: #{tpu_custom_call.1} parent=11 // pred_fallthru
          _
        // Predicated region
        $region49: #{tpu_custom_call.1} parent=11 // pred_check
          %p579 = pneg %p339
        $region50: #{tpu_custom_call.1} parent=11 // pred_check_branch
          %581 = sbr.rel (%p579) target = $region52
        $region51: #{tpu_custom_call.1} parent=11 // pred_region
          _
        $region52: #{tpu_custom_call.1} parent=11 // pred_fallthru
          _
        // Predicated region
        $region53: #{tpu_custom_call.1} parent=11 // pred_check
          %p582 = pneg %p360
        $region54: #{tpu_custom_call.1} parent=11 // pred_check_branch
          %584 = sbr.rel (%p582) target = $region56
        $region55: #{tpu_custom_call.1} parent=11 // pred_region
          %586 = vsyncadd [#allocation17], 0
          %s587 = sshll.u32 %s13, 4
          %s588 = int_to_ptr.hbm [resolvable:$true] %s587
          %s589 = sshll.u32 [#allocation16], 4
          %s590 = int_to_ptr.vmem [resolvable:$true] %s589
          %595 = dma.hbm_to_vmem [thread:$0]  %s588, 4096, %s590, [#allocation17], 256, 256, 16
        $region56: #{tpu_custom_call.1} parent=11 // pred_fallthru
          _
        // Predicated region
        $region57: #{tpu_custom_call.1} parent=11 // pred_check
          %p596 = pneg %p381
        $region58: #{tpu_custom_call.1} parent=11 // pred_check_branch
          %598 = sbr.rel (%p596) target = $region60
        $region59: #{tpu_custom_call.1} parent=11 // pred_region
          _
        $region60: #{tpu_custom_call.1} parent=11 // pred_fallthru
          _
        // Predicated region
        $region61: #{tpu_custom_call.1} parent=11 // pred_check
          %p599 = pneg %p402
        $region62: #{tpu_custom_call.1} parent=11 // pred_check_branch
          %601 = sbr.rel (%p599) target = $region64
        $region63: #{tpu_custom_call.1} parent=11 // pred_region
          %603 = vsyncadd [#allocation17], 0
          %s604 = sshll.u32 %s15, 4
          %s605 = int_to_ptr.hbm [resolvable:$true] %s604
          %s606 = sshll.u32 [#allocation18], 4
          %s607 = int_to_ptr.vmem [resolvable:$true] %s606
          %612 = dma.hbm_to_vmem [thread:$0]  %s605, 4096, %s607, [#allocation17], 128, 128, 8
        $region64: #{tpu_custom_call.1} parent=11 // pred_fallthru
          _
        // Predicated region
        $region65: #{tpu_custom_call.1} parent=11 // pred_check
          %p613 = pneg %p423
        $region66: #{tpu_custom_call.1} parent=11 // pred_check_branch
          %615 = sbr.rel (%p613) target = $region68
        $region67: #{tpu_custom_call.1} parent=11 // pred_region
          _
        $region68: #{tpu_custom_call.1} parent=11 // pred_fallthru
          _
        // Predicated region
        $region69: #{tpu_custom_call.1} parent=11 // pred_check
          %p616 = pneg %p444
        $region70: #{tpu_custom_call.1} parent=11 // pred_check_branch
          %618 = sbr.rel (%p616) target = $region72
        $region71: #{tpu_custom_call.1} parent=11 // pred_region
          _
        $region72: #{tpu_custom_call.1} parent=11 // pred_fallthru
          _
        // Predicated region
        $region73: #{tpu_custom_call.1} parent=11 // pred_check
          %p619 = pneg %p465
        $region74: #{tpu_custom_call.1} parent=11 // pred_check_branch
          %621 = sbr.rel (%p619) target = $region76
        $region75: #{tpu_custom_call.1} parent=11 // pred_region
          _
        $region76: #{tpu_custom_call.1} parent=11 // pred_fallthru
          _
      $region12: #{tpu_custom_call.1} parent=5 // pred_fallthru
        _
      %p622 = scmp.lt.s32.totalorder %s37, 2
      // Predicated region
      $region77: #{tpu_custom_call.1} parent=5 // pred_check
        %p623 = pneg %p622
      $region78: #{tpu_custom_call.1} parent=5 // pred_check_branch
        %625 = sbr.rel (%p623) target = $region80
      $region79: #{tpu_custom_call.1} parent=5 // pred_region
        // Predicated region
        $region81: #{tpu_custom_call.1} parent=79 // pred_check
          %p626 = pneg %p71
        $region82: #{tpu_custom_call.1} parent=79 // pred_check_branch
          %628 = sbr.rel (%p626) target = $region84
        $region83: #{tpu_custom_call.1} parent=79 // pred_region
          %s629 = sand.u32 %s61, 1
          %s630 = scalar_lea.sflag [#allocation5], %s629
          %s631 = sand.u32 %s61, 1
          %s632 = smul.addr %s631, 128
          %s633 = scalar_lea.vmem [#allocation4], %s632
          %s634 = smul.u32 16, %s45
          %636 = vsyncadd %s630, 0
          %s637 = smul.addr %s44, 16
          %s638 = sadd.s32 %s634, %s637
          %s639 = smul.addr %s638, 8
          %s640 = scalar_lea.hbm %s0, %s639
          %s641 = sshll.u32 %s640, 4
          %s642 = int_to_ptr.hbm [resolvable:$true] %s641
          %s643 = sshll.u32 %s633, 4
          %s644 = int_to_ptr.vmem [resolvable:$true] %s643
          %649 = dma.hbm_to_vmem [thread:$0]  %s642, 2048, %s644, %s630, 128, 128, 8
        $region84: #{tpu_custom_call.1} parent=79 // pred_fallthru
          _
        // Predicated region
        $region85: #{tpu_custom_call.1} parent=79 // pred_check
          %p650 = pneg %p97
        $region86: #{tpu_custom_call.1} parent=79 // pred_check_branch
          %652 = sbr.rel (%p650) target = $region88
        $region87: #{tpu_custom_call.1} parent=79 // pred_region
          %s653 = sand.u32 %s37, 1
          %s654 = scalar_lea.sflag [#allocation8], %s653
          %s655 = sand.u32 %s87, 1
          %s656 = smul.addr %s655, 128
          %s657 = scalar_lea.vmem [#allocation7], %s656
          %659 = vsyncadd %s654, 0
          %s660 = smul.addr %s44, 16
          %s661 = smul.addr %s660, 8
          %s662 = scalar_lea.hbm %s1, %s661
          %s663 = sshll.u32 %s662, 4
          %s664 = int_to_ptr.hbm [resolvable:$true] %s663
          %s665 = sshll.u32 %s657, 4
          %s666 = int_to_ptr.vmem [resolvable:$true] %s665
          %671 = dma.hbm_to_vmem [thread:$0]  %s664, 2048, %s666, %s654, 128, 128, 8
        $region88: #{tpu_custom_call.1} parent=79 // pred_fallthru
          _
        // Predicated region
        $region89: #{tpu_custom_call.1} parent=79 // pred_check
          %p672 = pneg %p123
        $region90: #{tpu_custom_call.1} parent=79 // pred_check_branch
          %674 = sbr.rel (%p672) target = $region92
        $region91: #{tpu_custom_call.1} parent=79 // pred_region
          %s675 = sand.u32 %s37, 1
          %s676 = scalar_lea.sflag [#allocation8], %s675
          %s677 = sand.u32 %s113, 1
          %s678 = smul.addr %s677, 128
          %s679 = scalar_lea.vmem [#allocation9], %s678
          %681 = vsyncadd %s676, 0
          %s682 = smul.addr %s44, 16
          %s683 = smul.addr %s682, 8
          %s684 = scalar_lea.hbm %s2, %s683
          %s685 = sshll.u32 %s684, 4
          %s686 = int_to_ptr.hbm [resolvable:$true] %s685
          %s687 = sshll.u32 %s679, 4
          %s688 = int_to_ptr.vmem [resolvable:$true] %s687
          %693 = dma.hbm_to_vmem [thread:$0]  %s686, 2048, %s688, %s676, 128, 128, 8
        $region92: #{tpu_custom_call.1} parent=79 // pred_fallthru
          _
      $region80: #{tpu_custom_call.1} parent=5 // pred_fallthru
        _
      %p694 = scmp.le.s32.totalorder 1, %s37
      %p695 = scmp.lt.s32.totalorder %s37, 3
      %p696 = pnand %p694, %p695
      %p697 = pneg %p696
      // Predicated region
      $region93: #{tpu_custom_call.1} parent=5 // pred_check
        _
      $region94: #{tpu_custom_call.1} parent=5 // pred_check_branch
        %699 = sbr.rel (%p696) target = $region96
      $region95: #{tpu_custom_call.1} parent=5 // pred_region
        %s700 = ssub.s32 %s37, 1
        %s701 = sand.u32 %s64, 1
        %s702 = scalar_lea.sflag [#allocation5], %s701
        %s703 = sand.u32 %s64, 1
        %s704 = smul.addr %s703, 128
        %s705 = scalar_lea.vmem [#allocation4], %s704
        // Predicated region
        $region97: #{tpu_custom_call.1} parent=95 // pred_check
          %p706 = pneg %p77
        $region98: #{tpu_custom_call.1} parent=95 // pred_check_branch
          %708 = sbr.rel (%p706) target = $region100
        $region99: #{tpu_custom_call.1} parent=95 // pred_region
          %710 = dma.done %s702, 2048
        $region100: #{tpu_custom_call.1} parent=95 // pred_fallthru
          _
        %s711 = sand.u32 %s42, 1
        %s712 = scalar_lea.sflag [#allocation8], %s711
        %s713 = sand.u32 %s90, 1
        %s714 = smul.addr %s713, 128
        %s715 = scalar_lea.vmem [#allocation7], %s714
        // Predicated region
        $region101: #{tpu_custom_call.1} parent=95 // pred_check
          %p716 = pneg %p103
        $region102: #{tpu_custom_call.1} parent=95 // pred_check_branch
          %718 = sbr.rel (%p716) target = $region104
        $region103: #{tpu_custom_call.1} parent=95 // pred_region
          %720 = dma.done %s712, 2048
        $region104: #{tpu_custom_call.1} parent=95 // pred_fallthru
          _
        %s721 = sand.u32 %s42, 1
        %s722 = scalar_lea.sflag [#allocation8], %s721
        %s723 = sand.u32 %s116, 1
        %s724 = smul.addr %s723, 128
        %s725 = scalar_lea.vmem [#allocation9], %s724
        // Predicated region
        $region105: #{tpu_custom_call.1} parent=95 // pred_check
          %p726 = pneg %p129
        $region106: #{tpu_custom_call.1} parent=95 // pred_check_branch
          %728 = sbr.rel (%p726) target = $region108
        $region107: #{tpu_custom_call.1} parent=95 // pred_region
          %730 = dma.done %s722, 2048
        $region108: #{tpu_custom_call.1} parent=95 // pred_fallthru
          _
        // Predicated region
        $region109: #{tpu_custom_call.1} parent=95 // pred_check
          %p731 = pneg %p150
        $region110: #{tpu_custom_call.1} parent=95 // pred_check_branch
          %733 = sbr.rel (%p731) target = $region112
        $region111: #{tpu_custom_call.1} parent=95 // pred_region
          %735 = dma.done [#allocation11], 2048
        $region112: #{tpu_custom_call.1} parent=95 // pred_fallthru
          _
        // Predicated region
        $region113: #{tpu_custom_call.1} parent=95 // pred_check
          %p736 = pneg %p192
        $region114: #{tpu_custom_call.1} parent=95 // pred_check_branch
          %738 = sbr.rel (%p736) target = $region116
        $region115: #{tpu_custom_call.1} parent=95 // pred_region
          %740 = dma.done [#allocation11], 2048
        $region116: #{tpu_custom_call.1} parent=95 // pred_fallthru
          _
        // Predicated region
        $region117: #{tpu_custom_call.1} parent=95 // pred_check
          %p741 = pneg %p234
        $region118: #{tpu_custom_call.1} parent=95 // pred_check_branch
          %743 = sbr.rel (%p741) target = $region120
        $region119: #{tpu_custom_call.1} parent=95 // pred_region
          %745 = dma.done [#allocation14], 2048
        $region120: #{tpu_custom_call.1} parent=95 // pred_fallthru
          _
        // Predicated region
        $region121: #{tpu_custom_call.1} parent=95 // pred_check
          %p746 = pneg %p276
        $region122: #{tpu_custom_call.1} parent=95 // pred_check_branch
          %748 = sbr.rel (%p746) target = $region124
        $region123: #{tpu_custom_call.1} parent=95 // pred_region
          %750 = dma.done [#allocation14], 2048
        $region124: #{tpu_custom_call.1} parent=95 // pred_fallthru
          _
        // Predicated region
        $region125: #{tpu_custom_call.1} parent=95 // pred_check
          %p751 = pneg %p360
        $region126: #{tpu_custom_call.1} parent=95 // pred_check_branch
          %753 = sbr.rel (%p751) target = $region128
        $region127: #{tpu_custom_call.1} parent=95 // pred_region
          %755 = dma.done [#allocation17], 4096
        $region128: #{tpu_custom_call.1} parent=95 // pred_fallthru
          _
        // Predicated region
        $region129: #{tpu_custom_call.1} parent=95 // pred_check
          %p756 = pneg %p402
        $region130: #{tpu_custom_call.1} parent=95 // pred_check_branch
          %758 = sbr.rel (%p756) target = $region132
        $region131: #{tpu_custom_call.1} parent=95 // pred_region
          %760 = dma.done [#allocation17], 4096
        $region132: #{tpu_custom_call.1} parent=95 // pred_fallthru
          _
        %s761 = sand.u32 %s64, 1
        %s762 = scalar_lea.sflag [#allocation5], %s761
        %s763 = sand.u32 %s64, 1
        %s764 = smul.addr %s763, 128
        %s765 = scalar_lea.vmem [#allocation4], %s764
        %p766 = pneg %p77
        %p767 = pneg %p74
        %s768 = sand.u32 %s42, 1
        %s769 = scalar_lea.sflag [#allocation8], %s768
        %s770 = sand.u32 %s90, 1
        %s771 = smul.addr %s770, 128
        %s772 = scalar_lea.vmem [#allocation7], %s771
        %p773 = pneg %p103
        %p774 = pneg %p100
        %s775 = sand.u32 %s42, 1
        %s776 = scalar_lea.sflag [#allocation8], %s775
        %s777 = sand.u32 %s116, 1
        %s778 = smul.addr %s777, 128
        %s779 = scalar_lea.vmem [#allocation9], %s778
        %p780 = pneg %p129
        %p781 = pneg %p126
        %p782 = pneg %p150
        %p783 = pneg %p147
        %p784 = pneg %p171
        %p785 = pneg %p168
        %p786 = pneg %p192
        %p787 = pneg %p189
        %p788 = pneg %p213
        %p789 = pneg %p210
        %p790 = pneg %p234
        %p791 = pneg %p231
        %p792 = pneg %p255
        %p793 = pneg %p252
        %p794 = pneg %p276
        %p795 = pneg %p273
        %p796 = pneg %p297
        %p797 = pneg %p294
        %p798 = pneg %p318
        %p799 = pneg %p315
        %p800 = pneg %p339
        %p801 = pneg %p336
        %p802 = pneg %p360
        %p803 = pneg %p357
        %p804 = pneg %p381
        %p805 = pneg %p378
        %p806 = pneg %p402
        %p807 = pneg %p399
        %p808 = pneg %p423
        %p809 = pneg %p420
        %p810 = pneg %p444
        %p811 = pneg %p441
        %p812 = pneg %p465
        %p813 = pneg %p462
        %p814 = pneg %p493
        %p815 = pneg %p490
        %s816 = sand.u32 %s480, 1
        %s817 = scalar_lea.sflag [#allocation6], %s816
        %s818 = sand.u32 %s480, 1
        %s819 = smul.addr %s818, 128
        %s820 = scalar_lea.vmem [#allocation19], %s819
        %s821 = smul.u32 16, %s47
        %s822 = smul.u32 16, %s47
        %v823 = vld [vmem:[%s705] sm:$0xff]
        %v824 = vld [vmem:[%s705 + $0x8] sm:$0xff]
        %v825 = vld [vmem:[%s705 + $0x10] sm:$0xff]
        %v826 = vld [vmem:[%s705 + $0x18] sm:$0xff]
        %v827 = vld [vmem:[%s705 + $0x20] sm:$0xff]
        %v828 = vld [vmem:[%s705 + $0x28] sm:$0xff]
        %v829 = vld [vmem:[%s705 + $0x30] sm:$0xff]
        %v830 = vld [vmem:[%s705 + $0x38] sm:$0xff]
        %v831 = vld [vmem:[%s705 + $0x40] sm:$0xff]
        %v832 = vld [vmem:[%s705 + $0x48] sm:$0xff]
        %v833 = vld [vmem:[%s705 + $0x50] sm:$0xff]
        %v834 = vld [vmem:[%s705 + $0x58] sm:$0xff]
        %v835 = vld [vmem:[%s705 + $0x60] sm:$0xff]
        %v836 = vld [vmem:[%s705 + $0x68] sm:$0xff]
        %v837 = vld [vmem:[%s705 + $0x70] sm:$0xff]
        %v838 = vld [vmem:[%s705 + $0x78] sm:$0xff]
        %p839 = scmp.eq.s32.totalorder %s47, 0
        // Predicated region
        $region133: #{tpu_custom_call.1} parent=95 // pred_check
          %p840 = pneg %p839
        $region134: #{tpu_custom_call.1} parent=95 // pred_check_branch
          %842 = sbr.rel (%p840) target = $region136
        $region135: #{tpu_custom_call.1} parent=95 // pred_region
          %v843 = vld [vmem:[%s715] sm:$0xff]
          %v844 = vld [vmem:[%s715 + $0x8] sm:$0xff]
          %v845 = vld [vmem:[%s715 + $0x10] sm:$0xff]
          %v846 = vld [vmem:[%s715 + $0x18] sm:$0xff]
          %v847 = vld [vmem:[%s715 + $0x20] sm:$0xff]
          %v848 = vld [vmem:[%s715 + $0x28] sm:$0xff]
          %v849 = vld [vmem:[%s715 + $0x30] sm:$0xff]
          %v850 = vld [vmem:[%s715 + $0x38] sm:$0xff]
          %v851 = vld [vmem:[%s715 + $0x40] sm:$0xff]
          %v852 = vld [vmem:[%s715 + $0x48] sm:$0xff]
          %v853 = vld [vmem:[%s715 + $0x50] sm:$0xff]
          %v854 = vld [vmem:[%s715 + $0x58] sm:$0xff]
          %v855 = vld [vmem:[%s715 + $0x60] sm:$0xff]
          %v856 = vld [vmem:[%s715 + $0x68] sm:$0xff]
          %v857 = vld [vmem:[%s715 + $0x70] sm:$0xff]
          %v858 = vld [vmem:[%s715 + $0x78] sm:$0xff]
          %v859 = vld [vmem:[#allocation12] sm:$0xff]
          %v860 = vld [vmem:[#allocation12 + $0x8] sm:$0xff]
          %v861 = vld [vmem:[#allocation12 + $0x10] sm:$0xff]
          %v862 = vld [vmem:[#allocation12 + $0x18] sm:$0xff]
          %v863 = vld [vmem:[#allocation12 + $0x20] sm:$0xff]
          %v864 = vld [vmem:[#allocation12 + $0x28] sm:$0xff]
          %v865 = vld [vmem:[#allocation12 + $0x30] sm:$0xff]
          %v866 = vld [vmem:[#allocation12 + $0x38] sm:$0xff]
          %v867 = vld [vmem:[#allocation12 + $0x40] sm:$0xff]
          %v868 = vld [vmem:[#allocation12 + $0x48] sm:$0xff]
          %v869 = vld [vmem:[#allocation12 + $0x50] sm:$0xff]
          %v870 = vld [vmem:[#allocation12 + $0x58] sm:$0xff]
          %v871 = vld [vmem:[#allocation12 + $0x60] sm:$0xff]
          %v872 = vld [vmem:[#allocation12 + $0x68] sm:$0xff]
          %v873 = vld [vmem:[#allocation12 + $0x70] sm:$0xff]
          %v874 = vld [vmem:[#allocation12 + $0x78] sm:$0xff]
          %v875 = vld [vmem:[%s6] sm:$0x1]
          %v877 = vperm.slane %v875, 0
          %879 = vmatpush.msra.mxu0 %v874
          %880 = vmatpush.msra.mxu0 %v873
          %881 = vmatpush.msra.mxu0 %v872
          %882 = vmatpush.msra.mxu0 %v871
          %883 = vmatpush.msra.mxu0 %v870
          %884 = vmatpush.msra.mxu0 %v869
          %885 = vmatpush.msra.mxu0 %v868
          %886 = vmatpush.msra.mxu0 %v867
          %887 = vmatpush.msra.mxu0 %v866
          %888 = vmatpush.msra.mxu0 %v865
          %889 = vmatpush.msra.mxu0 %v864
          %890 = vmatpush.msra.mxu0 %v863
          %891 = vmatpush.msra.mxu0 %v862
          %892 = vmatpush.msra.mxu0 %v861
          %893 = vmatpush.msra.mxu0 %v860
          %894 = vmatpush.msra.mxu0 %v859
          %895 = vmatmul.f32.gmra.mxu0 %v843
          %v896 = vpop.f32.mrf.mxu0
          %v897 = vadd.f32 %v877, %v896
          %898 = vmatmul.f32.gmra.mxu0 %v844
          %v899 = vpop.f32.mrf.mxu0
          %v900 = vadd.f32 %v877, %v899
          %901 = vmatmul.f32.gmra.mxu0 %v845
          %v902 = vpop.f32.mrf.mxu0
          %v903 = vadd.f32 %v877, %v902
          %904 = vmatmul.f32.gmra.mxu0 %v846
          %v905 = vpop.f32.mrf.mxu0
          %v906 = vadd.f32 %v877, %v905
          %907 = vmatmul.f32.gmra.mxu0 %v847
          %v908 = vpop.f32.mrf.mxu0
          %v909 = vadd.f32 %v877, %v908
          %910 = vmatmul.f32.gmra.mxu0 %v848
          %v911 = vpop.f32.mrf.mxu0
          %v912 = vadd.f32 %v877, %v911
          %913 = vmatmul.f32.gmra.mxu0 %v849
          %v914 = vpop.f32.mrf.mxu0
          %v915 = vadd.f32 %v877, %v914
          %916 = vmatmul.f32.gmra.mxu0 %v850
          %v917 = vpop.f32.mrf.mxu0
          %v918 = vadd.f32 %v877, %v917
          %919 = vmatmul.f32.gmra.mxu0 %v851
          %v920 = vpop.f32.mrf.mxu0
          %v921 = vadd.f32 %v877, %v920
          %922 = vmatmul.f32.gmra.mxu0 %v852
          %v923 = vpop.f32.mrf.mxu0
          %v924 = vadd.f32 %v877, %v923
          %925 = vmatmul.f32.gmra.mxu0 %v853
          %v926 = vpop.f32.mrf.mxu0
          %v927 = vadd.f32 %v877, %v926
          %928 = vmatmul.f32.gmra.mxu0 %v854
          %v929 = vpop.f32.mrf.mxu0
          %v930 = vadd.f32 %v877, %v929
          %931 = vmatmul.f32.gmra.mxu0 %v855
          %v932 = vpop.f32.mrf.mxu0
          %v933 = vadd.f32 %v877, %v932
          %934 = vmatmul.f32.gmra.mxu0 %v856
          %v935 = vpop.f32.mrf.mxu0
          %v936 = vadd.f32 %v877, %v935
          %937 = vmatmul.f32.gmra.mxu0 %v857
          %v938 = vpop.f32.mrf.mxu0
          %v939 = vadd.f32 %v877, %v938
          %940 = vmatmul.f32.gmra.mxu0 %v858
          %v941 = vpop.f32.mrf.mxu0
          %v942 = vadd.f32 %v877, %v941
          %943 = vdwg.mxu0
          %v944 = vld [vmem:[%s725] sm:$0xff]
          %v945 = vld [vmem:[%s725 + $0x8] sm:$0xff]
          %v946 = vld [vmem:[%s725 + $0x10] sm:$0xff]
          %v947 = vld [vmem:[%s725 + $0x18] sm:$0xff]
          %v948 = vld [vmem:[%s725 + $0x20] sm:$0xff]
          %v949 = vld [vmem:[%s725 + $0x28] sm:$0xff]
          %v950 = vld [vmem:[%s725 + $0x30] sm:$0xff]
          %v951 = vld [vmem:[%s725 + $0x38] sm:$0xff]
          %v952 = vld [vmem:[%s725 + $0x40] sm:$0xff]
          %v953 = vld [vmem:[%s725 + $0x48] sm:$0xff]
          %v954 = vld [vmem:[%s725 + $0x50] sm:$0xff]
          %v955 = vld [vmem:[%s725 + $0x58] sm:$0xff]
          %v956 = vld [vmem:[%s725 + $0x60] sm:$0xff]
          %v957 = vld [vmem:[%s725 + $0x68] sm:$0xff]
          %v958 = vld [vmem:[%s725 + $0x70] sm:$0xff]
          %v959 = vld [vmem:[%s725 + $0x78] sm:$0xff]
          %v960 = vld [vmem:[#allocation13] sm:$0xff]
          %v961 = vld [vmem:[#allocation13 + $0x8] sm:$0xff]
          %v962 = vld [vmem:[#allocation13 + $0x10] sm:$0xff]
          %v963 = vld [vmem:[#allocation13 + $0x18] sm:$0xff]
          %v964 = vld [vmem:[#allocation13 + $0x20] sm:$0xff]
          %v965 = vld [vmem:[#allocation13 + $0x28] sm:$0xff]
          %v966 = vld [vmem:[#allocation13 + $0x30] sm:$0xff]
          %v967 = vld [vmem:[#allocation13 + $0x38] sm:$0xff]
          %v968 = vld [vmem:[#allocation13 + $0x40] sm:$0xff]
          %v969 = vld [vmem:[#allocation13 + $0x48] sm:$0xff]
          %v970 = vld [vmem:[#allocation13 + $0x50] sm:$0xff]
          %v971 = vld [vmem:[#allocation13 + $0x58] sm:$0xff]
          %v972 = vld [vmem:[#allocation13 + $0x60] sm:$0xff]
          %v973 = vld [vmem:[#allocation13 + $0x68] sm:$0xff]
          %v974 = vld [vmem:[#allocation13 + $0x70] sm:$0xff]
          %v975 = vld [vmem:[#allocation13 + $0x78] sm:$0xff]
          %v976 = vld [vmem:[%s8] sm:$0x1]
          %v978 = vperm.slane %v976, 0
          %980 = vmatpush.msra.mxu0 %v975
          %981 = vmatpush.msra.mxu0 %v974
          %982 = vmatpush.msra.mxu0 %v973
          %983 = vmatpush.msra.mxu0 %v972
          %984 = vmatpush.msra.mxu0 %v971
          %985 = vmatpush.msra.mxu0 %v970
          %986 = vmatpush.msra.mxu0 %v969
          %987 = vmatpush.msra.mxu0 %v968
          %988 = vmatpush.msra.mxu0 %v967
          %989 = vmatpush.msra.mxu0 %v966
          %990 = vmatpush.msra.mxu0 %v965
          %991 = vmatpush.msra.mxu0 %v964
          %992 = vmatpush.msra.mxu0 %v963
          %993 = vmatpush.msra.mxu0 %v962
          %994 = vmatpush.msra.mxu0 %v961
          %995 = vmatpush.msra.mxu0 %v960
          %996 = vmatmul.f32.gmra.mxu0 %v944
          %v997 = vpop.f32.mrf.mxu0
          %v998 = vadd.f32 %v978, %v997
          %999 = vmatmul.f32.gmra.mxu0 %v945
          %v1000 = vpop.f32.mrf.mxu0
          %v1001 = vadd.f32 %v978, %v1000
          %1002 = vmatmul.f32.gmra.mxu0 %v946
          %v1003 = vpop.f32.mrf.mxu0
          %v1004 = vadd.f32 %v978, %v1003
          %1005 = vmatmul.f32.gmra.mxu0 %v947
          %v1006 = vpop.f32.mrf.mxu0
          %v1007 = vadd.f32 %v978, %v1006
          %1008 = vmatmul.f32.gmra.mxu0 %v948
          %v1009 = vpop.f32.mrf.mxu0
          %v1010 = vadd.f32 %v978, %v1009
          %1011 = vmatmul.f32.gmra.mxu0 %v949
          %v1012 = vpop.f32.mrf.mxu0
          %v1013 = vadd.f32 %v978, %v1012
          %1014 = vmatmul.f32.gmra.mxu0 %v950
          %v1015 = vpop.f32.mrf.mxu0
          %v1016 = vadd.f32 %v978, %v1015
          %1017 = vmatmul.f32.gmra.mxu0 %v951
          %v1018 = vpop.f32.mrf.mxu0
          %v1019 = vadd.f32 %v978, %v1018
          %1020 = vmatmul.f32.gmra.mxu0 %v952
          %v1021 = vpop.f32.mrf.mxu0
          %v1022 = vadd.f32 %v978, %v1021
          %1023 = vmatmul.f32.gmra.mxu0 %v953
          %v1024 = vpop.f32.mrf.mxu0
          %v1025 = vadd.f32 %v978, %v1024
          %1026 = vmatmul.f32.gmra.mxu0 %v954
          %v1027 = vpop.f32.mrf.mxu0
          %v1028 = vadd.f32 %v978, %v1027
          %1029 = vmatmul.f32.gmra.mxu0 %v955
          %v1030 = vpop.f32.mrf.mxu0
          %v1031 = vadd.f32 %v978, %v1030
          %1032 = vmatmul.f32.gmra.mxu0 %v956
          %v1033 = vpop.f32.mrf.mxu0
          %v1034 = vadd.f32 %v978, %v1033
          %1035 = vmatmul.f32.gmra.mxu0 %v957
          %v1036 = vpop.f32.mrf.mxu0
          %v1037 = vadd.f32 %v978, %v1036
          %1038 = vmatmul.f32.gmra.mxu0 %v958
          %v1039 = vpop.f32.mrf.mxu0
          %v1040 = vadd.f32 %v978, %v1039
          %1041 = vmatmul.f32.gmra.mxu0 %v959
          %v1042 = vpop.f32.mrf.mxu0
          %v1043 = vadd.f32 %v978, %v1042
          %1044 = vdwg.mxu0
          %1045 = vxpose.xlu0.b32.start [1/16] %v897, 128
          %1046 = vxpose.xlu0.b32.cont [2/16] %v900, 128
          %1047 = vxpose.xlu0.b32.cont [3/16] %v903, 128
          %1048 = vxpose.xlu0.b32.cont [4/16] %v906, 128
          %1049 = vxpose.xlu0.b32.cont [5/16] %v909, 128
          %1050 = vxpose.xlu0.b32.cont [6/16] %v912, 128
          %1051 = vxpose.xlu0.b32.cont [7/16] %v915, 128
          %1052 = vxpose.xlu0.b32.cont [8/16] %v918, 128
          %1053 = vxpose.xlu0.b32.cont [9/16] %v921, 128
          %1054 = vxpose.xlu0.b32.cont [10/16] %v924, 128
          %1055 = vxpose.xlu0.b32.cont [11/16] %v927, 128
          %1056 = vxpose.xlu0.b32.cont [12/16] %v930, 128
          %1057 = vxpose.xlu0.b32.cont [13/16] %v933, 128
          %1058 = vxpose.xlu0.b32.cont [14/16] %v936, 128
          %1059 = vxpose.xlu0.b32.cont [15/16] %v939, 128
          %1060 = vxpose.xlu0.b32.end [16/16] %v942, 128
          %v1061 = vpop.trf.xlu0
          %v1062 = vpop.trf.xlu0
          %v1063 = vpop.trf.xlu0
          %v1064 = vpop.trf.xlu0
          %v1065 = vpop.trf.xlu0
          %v1066 = vpop.trf.xlu0
          %v1067 = vpop.trf.xlu0
          %v1068 = vpop.trf.xlu0
          %v1069 = vpop.trf.xlu0
          %v1070 = vpop.trf.xlu0
          %v1071 = vpop.trf.xlu0
          %v1072 = vpop.trf.xlu0
          %v1073 = vpop.trf.xlu0
          %v1074 = vpop.trf.xlu0
          %v1075 = vpop.trf.xlu0
          %v1076 = vpop.trf.xlu0
          %1077 = vst [vmem:[#allocation2] sm:$0xff] %v1061
          %1078 = vst [vmem:[#allocation2 + $0x8] sm:$0xff] %v1062
          %1079 = vst [vmem:[#allocation2 + $0x10] sm:$0xff] %v1063
          %1080 = vst [vmem:[#allocation2 + $0x18] sm:$0xff] %v1064
          %vm1081 = vcmask 261120
          %1082 = vst.msk [vmem:[#allocation3] sm:$0xff] %vm1081, %v998
          %1083 = vst.msk [vmem:[#allocation3 + $0x8] sm:$0xff] %vm1081, %v1001
          %1084 = vst.msk [vmem:[#allocation3 + $0x10] sm:$0xff] %vm1081, %v1004
          %1085 = vst.msk [vmem:[#allocation3 + $0x18] sm:$0xff] %vm1081, %v1007
          %1086 = vst.msk [vmem:[#allocation3 + $0x20] sm:$0xff] %vm1081, %v1010
          %1087 = vst.msk [vmem:[#allocation3 + $0x28] sm:$0xff] %vm1081, %v1013
          %1088 = vst.msk [vmem:[#allocation3 + $0x30] sm:$0xff] %vm1081, %v1016
          %1089 = vst.msk [vmem:[#allocation3 + $0x38] sm:$0xff] %vm1081, %v1019
          %1090 = vst.msk [vmem:[#allocation3 + $0x40] sm:$0xff] %vm1081, %v1022
          %1091 = vst.msk [vmem:[#allocation3 + $0x48] sm:$0xff] %vm1081, %v1025
          %1092 = vst.msk [vmem:[#allocation3 + $0x50] sm:$0xff] %vm1081, %v1028
          %1093 = vst.msk [vmem:[#allocation3 + $0x58] sm:$0xff] %vm1081, %v1031
          %1094 = vst.msk [vmem:[#allocation3 + $0x60] sm:$0xff] %vm1081, %v1034
          %1095 = vst.msk [vmem:[#allocation3 + $0x68] sm:$0xff] %vm1081, %v1037
          %1096 = vst.msk [vmem:[#allocation3 + $0x70] sm:$0xff] %vm1081, %v1040
          %1097 = vst.msk [vmem:[#allocation3 + $0x78] sm:$0xff] %vm1081, %v1043
          %1114 = vrot.lane.b32.xlu0 %v897, 96
          %v1115 = vpop.permute.xlu0 %1114
          %1116 = vrot.lane.b32.xlu0 %v900, 96
          %v1117 = vpop.permute.xlu0 %1116
          %1118 = vrot.lane.b32.xlu0 %v903, 96
          %v1119 = vpop.permute.xlu0 %1118
          %1120 = vrot.lane.b32.xlu0 %v906, 96
          %v1121 = vpop.permute.xlu0 %1120
          %1122 = vrot.lane.b32.xlu0 %v909, 96
          %v1123 = vpop.permute.xlu0 %1122
          %1124 = vrot.lane.b32.xlu0 %v912, 96
          %v1125 = vpop.permute.xlu0 %1124
          %1126 = vrot.lane.b32.xlu0 %v915, 96
          %v1127 = vpop.permute.xlu0 %1126
          %1128 = vrot.lane.b32.xlu0 %v918, 96
          %v1129 = vpop.permute.xlu0 %1128
          %1130 = vrot.lane.b32.xlu0 %v921, 96
          %v1131 = vpop.permute.xlu0 %1130
          %1132 = vrot.lane.b32.xlu0 %v924, 96
          %v1133 = vpop.permute.xlu0 %1132
          %1134 = vrot.lane.b32.xlu0 %v927, 96
          %v1135 = vpop.permute.xlu0 %1134
          %1136 = vrot.lane.b32.xlu0 %v930, 96
          %v1137 = vpop.permute.xlu0 %1136
          %1138 = vrot.lane.b32.xlu0 %v933, 96
          %v1139 = vpop.permute.xlu0 %1138
          %1140 = vrot.lane.b32.xlu0 %v936, 96
          %v1141 = vpop.permute.xlu0 %1140
          %1142 = vrot.lane.b32.xlu0 %v939, 96
          %v1143 = vpop.permute.xlu0 %1142
          %1144 = vrot.lane.b32.xlu0 %v942, 96
          %v1145 = vpop.permute.xlu0 %1144
          %1162 = vxpose.xlu0.b32.start [1/16] %v1115, 128
          %1163 = vxpose.xlu0.b32.cont [2/16] %v1117, 128
          %1164 = vxpose.xlu0.b32.cont [3/16] %v1119, 128
          %1165 = vxpose.xlu0.b32.cont [4/16] %v1121, 128
          %1166 = vxpose.xlu0.b32.cont [5/16] %v1123, 128
          %1167 = vxpose.xlu0.b32.cont [6/16] %v1125, 128
          %1168 = vxpose.xlu0.b32.cont [7/16] %v1127, 128
          %1169 = vxpose.xlu0.b32.cont [8/16] %v1129, 128
          %1170 = vxpose.xlu0.b32.cont [9/16] %v1131, 128
          %1171 = vxpose.xlu0.b32.cont [10/16] %v1133, 128
          %1172 = vxpose.xlu0.b32.cont [11/16] %v1135, 128
          %1173 = vxpose.xlu0.b32.cont [12/16] %v1137, 128
          %1174 = vxpose.xlu0.b32.cont [13/16] %v1139, 128
          %1175 = vxpose.xlu0.b32.cont [14/16] %v1141, 128
          %1176 = vxpose.xlu0.b32.cont [15/16] %v1143, 128
          %1177 = vxpose.xlu0.b32.end [16/16] %v1145, 128
          %v1178 = vpop.trf.xlu0
          %v1179 = vpop.trf.xlu0
          %v1180 = vpop.trf.xlu0
          %v1181 = vpop.trf.xlu0
          %v1182 = vpop.trf.xlu0
          %v1183 = vpop.trf.xlu0
          %v1184 = vpop.trf.xlu0
          %v1185 = vpop.trf.xlu0
          %v1186 = vpop.trf.xlu0
          %v1187 = vpop.trf.xlu0
          %v1188 = vpop.trf.xlu0
          %v1189 = vpop.trf.xlu0
          %v1190 = vpop.trf.xlu0
          %v1191 = vpop.trf.xlu0
          %v1192 = vpop.trf.xlu0
          %v1193 = vpop.trf.xlu0
          %s1194 = scalar_lea.vmem [#allocation2], 32
          %1195 = vst [vmem:[%s1194] sm:$0xff] %v1178
          %1196 = vst [vmem:[%s1194 + $0x8] sm:$0xff] %v1179
          %1197 = vst [vmem:[%s1194 + $0x10] sm:$0xff] %v1180
          %1198 = vst [vmem:[%s1194 + $0x18] sm:$0xff] %v1181
          %1215 = vrot.lane.b32.xlu0 %v998, 96
          %v1216 = vpop.permute.xlu0 %1215
          %1217 = vrot.lane.b32.xlu0 %v1001, 96
          %v1218 = vpop.permute.xlu0 %1217
          %1219 = vrot.lane.b32.xlu0 %v1004, 96
          %v1220 = vpop.permute.xlu0 %1219
          %1221 = vrot.lane.b32.xlu0 %v1007, 96
          %v1222 = vpop.permute.xlu0 %1221
          %1223 = vrot.lane.b32.xlu0 %v1010, 96
          %v1224 = vpop.permute.xlu0 %1223
          %1225 = vrot.lane.b32.xlu0 %v1013, 96
          %v1226 = vpop.permute.xlu0 %1225
          %1227 = vrot.lane.b32.xlu0 %v1016, 96
          %v1228 = vpop.permute.xlu0 %1227
          %1229 = vrot.lane.b32.xlu0 %v1019, 96
          %v1230 = vpop.permute.xlu0 %1229
          %1231 = vrot.lane.b32.xlu0 %v1022, 96
          %v1232 = vpop.permute.xlu0 %1231
          %1233 = vrot.lane.b32.xlu0 %v1025, 96
          %v1234 = vpop.permute.xlu0 %1233
          %1235 = vrot.lane.b32.xlu0 %v1028, 96
          %v1236 = vpop.permute.xlu0 %1235
          %1237 = vrot.lane.b32.xlu0 %v1031, 96
          %v1238 = vpop.permute.xlu0 %1237
          %1239 = vrot.lane.b32.xlu0 %v1034, 96
          %v1240 = vpop.permute.xlu0 %1239
          %1241 = vrot.lane.b32.xlu0 %v1037, 96
          %v1242 = vpop.permute.xlu0 %1241
          %1243 = vrot.lane.b32.xlu0 %v1040, 96
          %v1244 = vpop.permute.xlu0 %1243
          %1245 = vrot.lane.b32.xlu0 %v1043, 96
          %v1246 = vpop.permute.xlu0 %1245
          %s1263 = scalar_lea.vmem [#allocation3], 128
          %1264 = vst.msk [vmem:[%s1263] sm:$0xff] %vm1081, %v1216
          %1265 = vst.msk [vmem:[%s1263 + $0x8] sm:$0xff] %vm1081, %v1218
          %1266 = vst.msk [vmem:[%s1263 + $0x10] sm:$0xff] %vm1081, %v1220
          %1267 = vst.msk [vmem:[%s1263 + $0x18] sm:$0xff] %vm1081, %v1222
          %1268 = vst.msk [vmem:[%s1263 + $0x20] sm:$0xff] %vm1081, %v1224
          %1269 = vst.msk [vmem:[%s1263 + $0x28] sm:$0xff] %vm1081, %v1226
          %1270 = vst.msk [vmem:[%s1263 + $0x30] sm:$0xff] %vm1081, %v1228
          %1271 = vst.msk [vmem:[%s1263 + $0x38] sm:$0xff] %vm1081, %v1230
          %1272 = vst.msk [vmem:[%s1263 + $0x40] sm:$0xff] %vm1081, %v1232
          %1273 = vst.msk [vmem:[%s1263 + $0x48] sm:$0xff] %vm1081, %v1234
          %1274 = vst.msk [vmem:[%s1263 + $0x50] sm:$0xff] %vm1081, %v1236
          %1275 = vst.msk [vmem:[%s1263 + $0x58] sm:$0xff] %vm1081, %v1238
          %1276 = vst.msk [vmem:[%s1263 + $0x60] sm:$0xff] %vm1081, %v1240
          %1277 = vst.msk [vmem:[%s1263 + $0x68] sm:$0xff] %vm1081, %v1242
          %1278 = vst.msk [vmem:[%s1263 + $0x70] sm:$0xff] %vm1081, %v1244
          %1279 = vst.msk [vmem:[%s1263 + $0x78] sm:$0xff] %vm1081, %v1246
          %1280 = vrot.lane.b32.xlu0 %v897, 64
          %v1281 = vpop.permute.xlu0 %1280
          %1282 = vrot.lane.b32.xlu0 %v900, 64
          %v1283 = vpop.permute.xlu0 %1282
          %1284 = vrot.lane.b32.xlu0 %v903, 64
          %v1285 = vpop.permute.xlu0 %1284
          %1286 = vrot.lane.b32.xlu0 %v906, 64
          %v1287 = vpop.permute.xlu0 %1286
          %1288 = vrot.lane.b32.xlu0 %v909, 64
          %v1289 = vpop.permute.xlu0 %1288
          %1290 = vrot.lane.b32.xlu0 %v912, 64
          %v1291 = vpop.permute.xlu0 %1290
          %1292 = vrot.lane.b32.xlu0 %v915, 64
          %v1293 = vpop.permute.xlu0 %1292
          %1294 = vrot.lane.b32.xlu0 %v918, 64
          %v1295 = vpop.permute.xlu0 %1294
          %1296 = vrot.lane.b32.xlu0 %v921, 64
          %v1297 = vpop.permute.xlu0 %1296
          %1298 = vrot.lane.b32.xlu0 %v924, 64
          %v1299 = vpop.permute.xlu0 %1298
          %1300 = vrot.lane.b32.xlu0 %v927, 64
          %v1301 = vpop.permute.xlu0 %1300
          %1302 = vrot.lane.b32.xlu0 %v930, 64
          %v1303 = vpop.permute.xlu0 %1302
          %1304 = vrot.lane.b32.xlu0 %v933, 64
          %v1305 = vpop.permute.xlu0 %1304
          %1306 = vrot.lane.b32.xlu0 %v936, 64
          %v1307 = vpop.permute.xlu0 %1306
          %1308 = vrot.lane.b32.xlu0 %v939, 64
          %v1309 = vpop.permute.xlu0 %1308
          %1310 = vrot.lane.b32.xlu0 %v942, 64
          %v1311 = vpop.permute.xlu0 %1310
          %1328 = vxpose.xlu0.b32.start [1/16] %v1281, 128
          %1329 = vxpose.xlu0.b32.cont [2/16] %v1283, 128
          %1330 = vxpose.xlu0.b32.cont [3/16] %v1285, 128
          %1331 = vxpose.xlu0.b32.cont [4/16] %v1287, 128
          %1332 = vxpose.xlu0.b32.cont [5/16] %v1289, 128
          %1333 = vxpose.xlu0.b32.cont [6/16] %v1291, 128
          %1334 = vxpose.xlu0.b32.cont [7/16] %v1293, 128
          %1335 = vxpose.xlu0.b32.cont [8/16] %v1295, 128
          %1336 = vxpose.xlu0.b32.cont [9/16] %v1297, 128
          %1337 = vxpose.xlu0.b32.cont [10/16] %v1299, 128
          %1338 = vxpose.xlu0.b32.cont [11/16] %v1301, 128
          %1339 = vxpose.xlu0.b32.cont [12/16] %v1303, 128
          %1340 = vxpose.xlu0.b32.cont [13/16] %v1305, 128
          %1341 = vxpose.xlu0.b32.cont [14/16] %v1307, 128
          %1342 = vxpose.xlu0.b32.cont [15/16] %v1309, 128
          %1343 = vxpose.xlu0.b32.end [16/16] %v1311, 128
          %v1344 = vpop.trf.xlu0
          %v1345 = vpop.trf.xlu0
          %v1346 = vpop.trf.xlu0
          %v1347 = vpop.trf.xlu0
          %v1348 = vpop.trf.xlu0
          %v1349 = vpop.trf.xlu0
          %v1350 = vpop.trf.xlu0
          %v1351 = vpop.trf.xlu0
          %v1352 = vpop.trf.xlu0
          %v1353 = vpop.trf.xlu0
          %v1354 = vpop.trf.xlu0
          %v1355 = vpop.trf.xlu0
          %v1356 = vpop.trf.xlu0
          %v1357 = vpop.trf.xlu0
          %v1358 = vpop.trf.xlu0
          %v1359 = vpop.trf.xlu0
          %s1360 = scalar_lea.vmem [#allocation2], 64
          %1361 = vst [vmem:[%s1360] sm:$0xff] %v1344
          %1362 = vst [vmem:[%s1360 + $0x8] sm:$0xff] %v1345
          %1363 = vst [vmem:[%s1360 + $0x10] sm:$0xff] %v1346
          %1364 = vst [vmem:[%s1360 + $0x18] sm:$0xff] %v1347
          %1365 = vrot.lane.b32.xlu0 %v998, 64
          %v1366 = vpop.permute.xlu0 %1365
          %1367 = vrot.lane.b32.xlu0 %v1001, 64
          %v1368 = vpop.permute.xlu0 %1367
          %1369 = vrot.lane.b32.xlu0 %v1004, 64
          %v1370 = vpop.permute.xlu0 %1369
          %1371 = vrot.lane.b32.xlu0 %v1007, 64
          %v1372 = vpop.permute.xlu0 %1371
          %1373 = vrot.lane.b32.xlu0 %v1010, 64
          %v1374 = vpop.permute.xlu0 %1373
          %1375 = vrot.lane.b32.xlu0 %v1013, 64
          %v1376 = vpop.permute.xlu0 %1375
          %1377 = vrot.lane.b32.xlu0 %v1016, 64
          %v1378 = vpop.permute.xlu0 %1377
          %1379 = vrot.lane.b32.xlu0 %v1019, 64
          %v1380 = vpop.permute.xlu0 %1379
          %1381 = vrot.lane.b32.xlu0 %v1022, 64
          %v1382 = vpop.permute.xlu0 %1381
          %1383 = vrot.lane.b32.xlu0 %v1025, 64
          %v1384 = vpop.permute.xlu0 %1383
          %1385 = vrot.lane.b32.xlu0 %v1028, 64
          %v1386 = vpop.permute.xlu0 %1385
          %1387 = vrot.lane.b32.xlu0 %v1031, 64
          %v1388 = vpop.permute.xlu0 %1387
          %1389 = vrot.lane.b32.xlu0 %v1034, 64
          %v1390 = vpop.permute.xlu0 %1389
          %1391 = vrot.lane.b32.xlu0 %v1037, 64
          %v1392 = vpop.permute.xlu0 %1391
          %1393 = vrot.lane.b32.xlu0 %v1040, 64
          %v1394 = vpop.permute.xlu0 %1393
          %1395 = vrot.lane.b32.xlu0 %v1043, 64
          %v1396 = vpop.permute.xlu0 %1395
          %s1413 = scalar_lea.vmem [#allocation3], 256
          %1414 = vst.msk [vmem:[%s1413] sm:$0xff] %vm1081, %v1366
          %1415 = vst.msk [vmem:[%s1413 + $0x8] sm:$0xff] %vm1081, %v1368
          %1416 = vst.msk [vmem:[%s1413 + $0x10] sm:$0xff] %vm1081, %v1370
          %1417 = vst.msk [vmem:[%s1413 + $0x18] sm:$0xff] %vm1081, %v1372
          %1418 = vst.msk [vmem:[%s1413 + $0x20] sm:$0xff] %vm1081, %v1374
          %1419 = vst.msk [vmem:[%s1413 + $0x28] sm:$0xff] %vm1081, %v1376
          %1420 = vst.msk [vmem:[%s1413 + $0x30] sm:$0xff] %vm1081, %v1378
          %1421 = vst.msk [vmem:[%s1413 + $0x38] sm:$0xff] %vm1081, %v1380
          %1422 = vst.msk [vmem:[%s1413 + $0x40] sm:$0xff] %vm1081, %v1382
          %1423 = vst.msk [vmem:[%s1413 + $0x48] sm:$0xff] %vm1081, %v1384
          %1424 = vst.msk [vmem:[%s1413 + $0x50] sm:$0xff] %vm1081, %v1386
          %1425 = vst.msk [vmem:[%s1413 + $0x58] sm:$0xff] %vm1081, %v1388
          %1426 = vst.msk [vmem:[%s1413 + $0x60] sm:$0xff] %vm1081, %v1390
          %1427 = vst.msk [vmem:[%s1413 + $0x68] sm:$0xff] %vm1081, %v1392
          %1428 = vst.msk [vmem:[%s1413 + $0x70] sm:$0xff] %vm1081, %v1394
          %1429 = vst.msk [vmem:[%s1413 + $0x78] sm:$0xff] %vm1081, %v1396
          %1430 = vrot.lane.b32.xlu0 %v897, 32
          %v1431 = vpop.permute.xlu0 %1430
          %1432 = vrot.lane.b32.xlu0 %v900, 32
          %v1433 = vpop.permute.xlu0 %1432
          %1434 = vrot.lane.b32.xlu0 %v903, 32
          %v1435 = vpop.permute.xlu0 %1434
          %1436 = vrot.lane.b32.xlu0 %v906, 32
          %v1437 = vpop.permute.xlu0 %1436
          %1438 = vrot.lane.b32.xlu0 %v909, 32
          %v1439 = vpop.permute.xlu0 %1438
          %1440 = vrot.lane.b32.xlu0 %v912, 32
          %v1441 = vpop.permute.xlu0 %1440
          %1442 = vrot.lane.b32.xlu0 %v915, 32
          %v1443 = vpop.permute.xlu0 %1442
          %1444 = vrot.lane.b32.xlu0 %v918, 32
          %v1445 = vpop.permute.xlu0 %1444
          %1446 = vrot.lane.b32.xlu0 %v921, 32
          %v1447 = vpop.permute.xlu0 %1446
          %1448 = vrot.lane.b32.xlu0 %v924, 32
          %v1449 = vpop.permute.xlu0 %1448
          %1450 = vrot.lane.b32.xlu0 %v927, 32
          %v1451 = vpop.permute.xlu0 %1450
          %1452 = vrot.lane.b32.xlu0 %v930, 32
          %v1453 = vpop.permute.xlu0 %1452
          %1454 = vrot.lane.b32.xlu0 %v933, 32
          %v1455 = vpop.permute.xlu0 %1454
          %1456 = vrot.lane.b32.xlu0 %v936, 32
          %v1457 = vpop.permute.xlu0 %1456
          %1458 = vrot.lane.b32.xlu0 %v939, 32
          %v1459 = vpop.permute.xlu0 %1458
          %1460 = vrot.lane.b32.xlu0 %v942, 32
          %v1461 = vpop.permute.xlu0 %1460
          %1478 = vxpose.xlu0.b32.start [1/16] %v1431, 128
          %1479 = vxpose.xlu0.b32.cont [2/16] %v1433, 128
          %1480 = vxpose.xlu0.b32.cont [3/16] %v1435, 128
          %1481 = vxpose.xlu0.b32.cont [4/16] %v1437, 128
          %1482 = vxpose.xlu0.b32.cont [5/16] %v1439, 128
          %1483 = vxpose.xlu0.b32.cont [6/16] %v1441, 128
          %1484 = vxpose.xlu0.b32.cont [7/16] %v1443, 128
          %1485 = vxpose.xlu0.b32.cont [8/16] %v1445, 128
          %1486 = vxpose.xlu0.b32.cont [9/16] %v1447, 128
          %1487 = vxpose.xlu0.b32.cont [10/16] %v1449, 128
          %1488 = vxpose.xlu0.b32.cont [11/16] %v1451, 128
          %1489 = vxpose.xlu0.b32.cont [12/16] %v1453, 128
          %1490 = vxpose.xlu0.b32.cont [13/16] %v1455, 128
          %1491 = vxpose.xlu0.b32.cont [14/16] %v1457, 128
          %1492 = vxpose.xlu0.b32.cont [15/16] %v1459, 128
          %1493 = vxpose.xlu0.b32.end [16/16] %v1461, 128
          %v1494 = vpop.trf.xlu0
          %v1495 = vpop.trf.xlu0
          %v1496 = vpop.trf.xlu0
          %v1497 = vpop.trf.xlu0
          %v1498 = vpop.trf.xlu0
          %v1499 = vpop.trf.xlu0
          %v1500 = vpop.trf.xlu0
          %v1501 = vpop.trf.xlu0
          %v1502 = vpop.trf.xlu0
          %v1503 = vpop.trf.xlu0
          %v1504 = vpop.trf.xlu0
          %v1505 = vpop.trf.xlu0
          %v1506 = vpop.trf.xlu0
          %v1507 = vpop.trf.xlu0
          %v1508 = vpop.trf.xlu0
          %v1509 = vpop.trf.xlu0
          %s1510 = scalar_lea.vmem [#allocation2], 96
          %1511 = vst [vmem:[%s1510] sm:$0xff] %v1494
          %1512 = vst [vmem:[%s1510 + $0x8] sm:$0xff] %v1495
          %1513 = vst [vmem:[%s1510 + $0x10] sm:$0xff] %v1496
          %1514 = vst [vmem:[%s1510 + $0x18] sm:$0xff] %v1497
          %1515 = vrot.lane.b32.xlu0 %v998, 32
          %v1516 = vpop.permute.xlu0 %1515
          %1517 = vrot.lane.b32.xlu0 %v1001, 32
          %v1518 = vpop.permute.xlu0 %1517
          %1519 = vrot.lane.b32.xlu0 %v1004, 32
          %v1520 = vpop.permute.xlu0 %1519
          %1521 = vrot.lane.b32.xlu0 %v1007, 32
          %v1522 = vpop.permute.xlu0 %1521
          %1523 = vrot.lane.b32.xlu0 %v1010, 32
          %v1524 = vpop.permute.xlu0 %1523
          %1525 = vrot.lane.b32.xlu0 %v1013, 32
          %v1526 = vpop.permute.xlu0 %1525
          %1527 = vrot.lane.b32.xlu0 %v1016, 32
          %v1528 = vpop.permute.xlu0 %1527
          %1529 = vrot.lane.b32.xlu0 %v1019, 32
          %v1530 = vpop.permute.xlu0 %1529
          %1531 = vrot.lane.b32.xlu0 %v1022, 32
          %v1532 = vpop.permute.xlu0 %1531
          %1533 = vrot.lane.b32.xlu0 %v1025, 32
          %v1534 = vpop.permute.xlu0 %1533
          %1535 = vrot.lane.b32.xlu0 %v1028, 32
          %v1536 = vpop.permute.xlu0 %1535
          %1537 = vrot.lane.b32.xlu0 %v1031, 32
          %v1538 = vpop.permute.xlu0 %1537
          %1539 = vrot.lane.b32.xlu0 %v1034, 32
          %v1540 = vpop.permute.xlu0 %1539
          %1541 = vrot.lane.b32.xlu0 %v1037, 32
          %v1542 = vpop.permute.xlu0 %1541
          %1543 = vrot.lane.b32.xlu0 %v1040, 32
          %v1544 = vpop.permute.xlu0 %1543
          %1545 = vrot.lane.b32.xlu0 %v1043, 32
          %v1546 = vpop.permute.xlu0 %1545
          %s1563 = scalar_lea.vmem [#allocation3], 384
          %1564 = vst.msk [vmem:[%s1563] sm:$0xff] %vm1081, %v1516
          %1565 = vst.msk [vmem:[%s1563 + $0x8] sm:$0xff] %vm1081, %v1518
          %1566 = vst.msk [vmem:[%s1563 + $0x10] sm:$0xff] %vm1081, %v1520
          %1567 = vst.msk [vmem:[%s1563 + $0x18] sm:$0xff] %vm1081, %v1522
          %1568 = vst.msk [vmem:[%s1563 + $0x20] sm:$0xff] %vm1081, %v1524
          %1569 = vst.msk [vmem:[%s1563 + $0x28] sm:$0xff] %vm1081, %v1526
          %1570 = vst.msk [vmem:[%s1563 + $0x30] sm:$0xff] %vm1081, %v1528
          %1571 = vst.msk [vmem:[%s1563 + $0x38] sm:$0xff] %vm1081, %v1530
          %1572 = vst.msk [vmem:[%s1563 + $0x40] sm:$0xff] %vm1081, %v1532
          %1573 = vst.msk [vmem:[%s1563 + $0x48] sm:$0xff] %vm1081, %v1534
          %1574 = vst.msk [vmem:[%s1563 + $0x50] sm:$0xff] %vm1081, %v1536
          %1575 = vst.msk [vmem:[%s1563 + $0x58] sm:$0xff] %vm1081, %v1538
          %1576 = vst.msk [vmem:[%s1563 + $0x60] sm:$0xff] %vm1081, %v1540
          %1577 = vst.msk [vmem:[%s1563 + $0x68] sm:$0xff] %vm1081, %v1542
          %1578 = vst.msk [vmem:[%s1563 + $0x70] sm:$0xff] %vm1081, %v1544
          %1579 = vst.msk [vmem:[%s1563 + $0x78] sm:$0xff] %vm1081, %v1546
        $region136: #{tpu_custom_call.1} parent=95 // pred_fallthru
          _
        %v1580 = vld [vmem:[#allocation10] sm:$0xff]
        %v1581 = vld [vmem:[#allocation10 + $0x8] sm:$0xff]
        %v1582 = vld [vmem:[#allocation10 + $0x10] sm:$0xff]
        %v1583 = vld [vmem:[#allocation10 + $0x18] sm:$0xff]
        %v1584 = vld [vmem:[#allocation10 + $0x20] sm:$0xff]
        %v1585 = vld [vmem:[#allocation10 + $0x28] sm:$0xff]
        %v1586 = vld [vmem:[#allocation10 + $0x30] sm:$0xff]
        %v1587 = vld [vmem:[#allocation10 + $0x38] sm:$0xff]
        %v1588 = vld [vmem:[#allocation10 + $0x40] sm:$0xff]
        %v1589 = vld [vmem:[#allocation10 + $0x48] sm:$0xff]
        %v1590 = vld [vmem:[#allocation10 + $0x50] sm:$0xff]
        %v1591 = vld [vmem:[#allocation10 + $0x58] sm:$0xff]
        %v1592 = vld [vmem:[#allocation10 + $0x60] sm:$0xff]
        %v1593 = vld [vmem:[#allocation10 + $0x68] sm:$0xff]
        %v1594 = vld [vmem:[#allocation10 + $0x70] sm:$0xff]
        %v1595 = vld [vmem:[#allocation10 + $0x78] sm:$0xff]
        %v1596 = vld [vmem:[%s4] sm:$0x1]
        %v1598 = vperm.slane %v1596, 0
        %1600 = vmatpush.msra.mxu0 %v1595
        %1601 = vmatpush.msra.mxu0 %v1594
        %1602 = vmatpush.msra.mxu0 %v1593
        %1603 = vmatpush.msra.mxu0 %v1592
        %1604 = vmatpush.msra.mxu0 %v1591
        %1605 = vmatpush.msra.mxu0 %v1590
        %1606 = vmatpush.msra.mxu0 %v1589
        %1607 = vmatpush.msra.mxu0 %v1588
        %1608 = vmatpush.msra.mxu0 %v1587
        %1609 = vmatpush.msra.mxu0 %v1586
        %1610 = vmatpush.msra.mxu0 %v1585
        %1611 = vmatpush.msra.mxu0 %v1584
        %1612 = vmatpush.msra.mxu0 %v1583
        %1613 = vmatpush.msra.mxu0 %v1582
        %1614 = vmatpush.msra.mxu0 %v1581
        %1615 = vmatpush.msra.mxu0 %v1580
        %1616 = vmatmul.f32.gmra.mxu0 %v823
        %v1617 = vpop.f32.mrf.mxu0
        %v1618 = vadd.f32 %v1598, %v1617
        %1619 = vmatmul.f32.gmra.mxu0 %v824
        %v1620 = vpop.f32.mrf.mxu0
        %v1621 = vadd.f32 %v1598, %v1620
        %1622 = vmatmul.f32.gmra.mxu0 %v825
        %v1623 = vpop.f32.mrf.mxu0
        %v1624 = vadd.f32 %v1598, %v1623
        %1625 = vmatmul.f32.gmra.mxu0 %v826
        %v1626 = vpop.f32.mrf.mxu0
        %v1627 = vadd.f32 %v1598, %v1626
        %1628 = vmatmul.f32.gmra.mxu0 %v827
        %v1629 = vpop.f32.mrf.mxu0
        %v1630 = vadd.f32 %v1598, %v1629
        %1631 = vmatmul.f32.gmra.mxu0 %v828
        %v1632 = vpop.f32.mrf.mxu0
        %v1633 = vadd.f32 %v1598, %v1632
        %1634 = vmatmul.f32.gmra.mxu0 %v829
        %v1635 = vpop.f32.mrf.mxu0
        %v1636 = vadd.f32 %v1598, %v1635
        %1637 = vmatmul.f32.gmra.mxu0 %v830
        %v1638 = vpop.f32.mrf.mxu0
        %v1639 = vadd.f32 %v1598, %v1638
        %1640 = vmatmul.f32.gmra.mxu0 %v831
        %v1641 = vpop.f32.mrf.mxu0
        %v1642 = vadd.f32 %v1598, %v1641
        %1643 = vmatmul.f32.gmra.mxu0 %v832
        %v1644 = vpop.f32.mrf.mxu0
        %v1645 = vadd.f32 %v1598, %v1644
        %1646 = vmatmul.f32.gmra.mxu0 %v833
        %v1647 = vpop.f32.mrf.mxu0
        %v1648 = vadd.f32 %v1598, %v1647
        %1649 = vmatmul.f32.gmra.mxu0 %v834
        %v1650 = vpop.f32.mrf.mxu0
        %v1651 = vadd.f32 %v1598, %v1650
        %1652 = vmatmul.f32.gmra.mxu0 %v835
        %v1653 = vpop.f32.mrf.mxu0
        %v1654 = vadd.f32 %v1598, %v1653
        %1655 = vmatmul.f32.gmra.mxu0 %v836
        %v1656 = vpop.f32.mrf.mxu0
        %v1657 = vadd.f32 %v1598, %v1656
        %1658 = vmatmul.f32.gmra.mxu0 %v837
        %v1659 = vpop.f32.mrf.mxu0
        %v1660 = vadd.f32 %v1598, %v1659
        %1661 = vmatmul.f32.gmra.mxu0 %v838
        %v1662 = vpop.f32.mrf.mxu0
        %v1663 = vadd.f32 %v1598, %v1662
        %1664 = vdwg.mxu0
        %v1665 = vld [vmem:[#allocation2] sm:$0xff]
        %v1666 = vld [vmem:[#allocation2 + $0x8] sm:$0xff]
        %v1667 = vld [vmem:[#allocation2 + $0x10] sm:$0xff]
        %v1668 = vld [vmem:[#allocation2 + $0x18] sm:$0xff]
        %vm1669 = vcmask 261120
        %v1671 = vsel %vm1669, %v1618, 0
        %v1674 = vsel %vm1669, %v1621, 0
        %v1677 = vsel %vm1669, %v1624, 0
        %v1680 = vsel %vm1669, %v1627, 0
        %v1683 = vsel %vm1669, %v1630, 0
        %v1686 = vsel %vm1669, %v1633, 0
        %v1689 = vsel %vm1669, %v1636, 0
        %v1692 = vsel %vm1669, %v1639, 0
        %v1695 = vsel %vm1669, %v1642, 0
        %v1698 = vsel %vm1669, %v1645, 0
        %v1701 = vsel %vm1669, %v1648, 0
        %v1704 = vsel %vm1669, %v1651, 0
        %v1707 = vsel %vm1669, %v1654, 0
        %v1710 = vsel %vm1669, %v1657, 0
        %v1713 = vsel %vm1669, %v1660, 0
        %v1716 = vsel %vm1669, %v1663, 0
        %1718 = vmatpush.msra.mxu0 0.0
        %1719 = vmatpush.msra.mxu0 0.0
        %1720 = vmatpush.msra.mxu0 0.0
        %1721 = vmatpush.msra.mxu0 0.0
        %1722 = vmatpush.msra.mxu0 0.0
        %1723 = vmatpush.msra.mxu0 0.0
        %1724 = vmatpush.msra.mxu0 0.0
        %1725 = vmatpush.msra.mxu0 0.0
        %1726 = vmatpush.msra.mxu0 0.0
        %1727 = vmatpush.msra.mxu0 0.0
        %1728 = vmatpush.msra.mxu0 0.0
        %1729 = vmatpush.msra.mxu0 0.0
        %1730 = vmatpush.msra.mxu0 %v1668
        %1731 = vmatpush.msra.mxu0 %v1667
        %1732 = vmatpush.msra.mxu0 %v1666
        %1733 = vmatpush.msra.mxu0 %v1665
        %1734 = vmatmul.f32.gmra.mxu0 %v1671
        %v1735 = vpop.f32.mrf.mxu0
        %v1736 = vadd.f32 0.0, %v1735
        %1737 = vmatmul.f32.gmra.mxu0 %v1674
        %v1738 = vpop.f32.mrf.mxu0
        %v1739 = vadd.f32 0.0, %v1738
        %1740 = vmatmul.f32.gmra.mxu0 %v1677
        %v1741 = vpop.f32.mrf.mxu0
        %v1742 = vadd.f32 0.0, %v1741
        %1743 = vmatmul.f32.gmra.mxu0 %v1680
        %v1744 = vpop.f32.mrf.mxu0
        %v1745 = vadd.f32 0.0, %v1744
        %1746 = vmatmul.f32.gmra.mxu0 %v1683
        %v1747 = vpop.f32.mrf.mxu0
        %v1748 = vadd.f32 0.0, %v1747
        %1749 = vmatmul.f32.gmra.mxu0 %v1686
        %v1750 = vpop.f32.mrf.mxu0
        %v1751 = vadd.f32 0.0, %v1750
        %1752 = vmatmul.f32.gmra.mxu0 %v1689
        %v1753 = vpop.f32.mrf.mxu0
        %v1754 = vadd.f32 0.0, %v1753
        %1755 = vmatmul.f32.gmra.mxu0 %v1692
        %v1756 = vpop.f32.mrf.mxu0
        %v1757 = vadd.f32 0.0, %v1756
        %1758 = vmatmul.f32.gmra.mxu0 %v1695
        %v1759 = vpop.f32.mrf.mxu0
        %v1760 = vadd.f32 0.0, %v1759
        %1761 = vmatmul.f32.gmra.mxu0 %v1698
        %v1762 = vpop.f32.mrf.mxu0
        %v1763 = vadd.f32 0.0, %v1762
        %1764 = vmatmul.f32.gmra.mxu0 %v1701
        %v1765 = vpop.f32.mrf.mxu0
        %v1766 = vadd.f32 0.0, %v1765
        %1767 = vmatmul.f32.gmra.mxu0 %v1704
        %v1768 = vpop.f32.mrf.mxu0
        %v1769 = vadd.f32 0.0, %v1768
        %1770 = vmatmul.f32.gmra.mxu0 %v1707
        %v1771 = vpop.f32.mrf.mxu0
        %v1772 = vadd.f32 0.0, %v1771
        %1773 = vmatmul.f32.gmra.mxu0 %v1710
        %v1774 = vpop.f32.mrf.mxu0
        %v1775 = vadd.f32 0.0, %v1774
        %1776 = vmatmul.f32.gmra.mxu0 %v1713
        %v1777 = vpop.f32.mrf.mxu0
        %v1778 = vadd.f32 0.0, %v1777
        %1779 = vmatmul.f32.gmra.mxu0 %v1716
        %v1780 = vpop.f32.mrf.mxu0
        %v1781 = vadd.f32 0.0, %v1780
        %1782 = vdwg.mxu0
        %1783 = vmax.xlane.f32.xlu0 %v1736
        %v1784 = vpop.xlane.xlu0 %1783
        %1785 = vmax.xlane.f32.xlu0 %v1739
        %v1786 = vpop.xlane.xlu0 %1785
        %1787 = vmax.xlane.f32.xlu0 %v1742
        %v1788 = vpop.xlane.xlu0 %1787
        %1789 = vmax.xlane.f32.xlu0 %v1745
        %v1790 = vpop.xlane.xlu0 %1789
        %1791 = vmax.xlane.f32.xlu0 %v1748
        %v1792 = vpop.xlane.xlu0 %1791
        %1793 = vmax.xlane.f32.xlu0 %v1751
        %v1794 = vpop.xlane.xlu0 %1793
        %1795 = vmax.xlane.f32.xlu0 %v1754
        %v1796 = vpop.xlane.xlu0 %1795
        %1797 = vmax.xlane.f32.xlu0 %v1757
        %v1798 = vpop.xlane.xlu0 %1797
        %1799 = vmax.xlane.f32.xlu0 %v1760
        %v1800 = vpop.xlane.xlu0 %1799
        %1801 = vmax.xlane.f32.xlu0 %v1763
        %v1802 = vpop.xlane.xlu0 %1801
        %1803 = vmax.xlane.f32.xlu0 %v1766
        %v1804 = vpop.xlane.xlu0 %1803
        %1805 = vmax.xlane.f32.xlu0 %v1769
        %v1806 = vpop.xlane.xlu0 %1805
        %1807 = vmax.xlane.f32.xlu0 %v1772
        %v1808 = vpop.xlane.xlu0 %1807
        %1809 = vmax.xlane.f32.xlu0 %v1775
        %v1810 = vpop.xlane.xlu0 %1809
        %1811 = vmax.xlane.f32.xlu0 %v1778
        %v1812 = vpop.xlane.xlu0 %1811
        %1813 = vmax.xlane.f32.xlu0 %v1781
        %v1814 = vpop.xlane.xlu0 %1813
        %v1815 = vsub.f32 %v1736, %v1784
        %v1816 = vsub.f32 %v1739, %v1786
        %v1817 = vsub.f32 %v1742, %v1788
        %v1818 = vsub.f32 %v1745, %v1790
        %v1819 = vsub.f32 %v1748, %v1792
        %v1820 = vsub.f32 %v1751, %v1794
        %v1821 = vsub.f32 %v1754, %v1796
        %v1822 = vsub.f32 %v1757, %v1798
        %v1823 = vsub.f32 %v1760, %v1800
        %v1824 = vsub.f32 %v1763, %v1802
        %v1825 = vsub.f32 %v1766, %v1804
        %v1826 = vsub.f32 %v1769, %v1806
        %v1827 = vsub.f32 %v1772, %v1808
        %v1828 = vsub.f32 %v1775, %v1810
        %v1829 = vsub.f32 %v1778, %v1812
        %v1830 = vsub.f32 %v1781, %v1814
        %v1831 = vmul.f32 %v1815, 1.442695
        %v1832 = vpow.pop %v1831
        %v1833 = vmul.f32 %v1816, 1.442695
        %v1834 = vpow.pop %v1833
        %v1835 = vmul.f32 %v1817, 1.442695
        %v1836 = vpow.pop %v1835
        %v1837 = vmul.f32 %v1818, 1.442695
        %v1838 = vpow.pop %v1837
        %v1839 = vmul.f32 %v1819, 1.442695
        %v1840 = vpow.pop %v1839
        %v1841 = vmul.f32 %v1820, 1.442695
        %v1842 = vpow.pop %v1841
        %v1843 = vmul.f32 %v1821, 1.442695
        %v1844 = vpow.pop %v1843
        %v1845 = vmul.f32 %v1822, 1.442695
        %v1846 = vpow.pop %v1845
        %v1847 = vmul.f32 %v1823, 1.442695
        %v1848 = vpow.pop %v1847
        %v1849 = vmul.f32 %v1824, 1.442695
        %v1850 = vpow.pop %v1849
        %v1851 = vmul.f32 %v1825, 1.442695
        %v1852 = vpow.pop %v1851
        %v1853 = vmul.f32 %v1826, 1.442695
        %v1854 = vpow.pop %v1853
        %v1855 = vmul.f32 %v1827, 1.442695
        %v1856 = vpow.pop %v1855
        %v1857 = vmul.f32 %v1828, 1.442695
        %v1858 = vpow.pop %v1857
        %v1859 = vmul.f32 %v1829, 1.442695
        %v1860 = vpow.pop %v1859
        %v1861 = vmul.f32 %v1830, 1.442695
        %v1862 = vpow.pop %v1861
        %1863 = vadd.xlane.f32.xlu0 %v1832
        %v1864 = vpop.xlane.xlu0 %1863
        %1865 = vadd.xlane.f32.xlu0 %v1834
        %v1866 = vpop.xlane.xlu0 %1865
        %1867 = vadd.xlane.f32.xlu0 %v1836
        %v1868 = vpop.xlane.xlu0 %1867
        %1869 = vadd.xlane.f32.xlu0 %v1838
        %v1870 = vpop.xlane.xlu0 %1869
        %1871 = vadd.xlane.f32.xlu0 %v1840
        %v1872 = vpop.xlane.xlu0 %1871
        %1873 = vadd.xlane.f32.xlu0 %v1842
        %v1874 = vpop.xlane.xlu0 %1873
        %1875 = vadd.xlane.f32.xlu0 %v1844
        %v1876 = vpop.xlane.xlu0 %1875
        %1877 = vadd.xlane.f32.xlu0 %v1846
        %v1878 = vpop.xlane.xlu0 %1877
        %1879 = vadd.xlane.f32.xlu0 %v1848
        %v1880 = vpop.xlane.xlu0 %1879
        %1881 = vadd.xlane.f32.xlu0 %v1850
        %v1882 = vpop.xlane.xlu0 %1881
        %1883 = vadd.xlane.f32.xlu0 %v1852
        %v1884 = vpop.xlane.xlu0 %1883
        %1885 = vadd.xlane.f32.xlu0 %v1854
        %v1886 = vpop.xlane.xlu0 %1885
        %1887 = vadd.xlane.f32.xlu0 %v1856
        %v1888 = vpop.xlane.xlu0 %1887
        %1889 = vadd.xlane.f32.xlu0 %v1858
        %v1890 = vpop.xlane.xlu0 %1889
        %1891 = vadd.xlane.f32.xlu0 %v1860
        %v1892 = vpop.xlane.xlu0 %1891
        %1893 = vadd.xlane.f32.xlu0 %v1862
        %v1894 = vpop.xlane.xlu0 %1893
        %v1895 = vrcp.pop %v1864
        %v1896 = vmul.f32 %v1864, %v1895
        %v1897 = vsub.f32 1.0, %v1896
        %v1898 = vmul.f32 %v1895, %v1897
        %v1899 = vadd.f32 %v1895, %v1898
        %vm1900 = vweird.f32 %v1864
        %vm1901 = vweird.f32 %v1895
        %vm1902 = vmor %vm1900, %vm1901
        %v1903 = vsel %vm1902, %v1895, %v1899
        %v1904 = vand.u32 2147483647, %v1864
        %vm1905 = vcmp.eq.f32.partialorder %v1904, 8.507059e+37
        %v1906 = vand.u32 %v1864, 2147483648
        %v1907 = vor.u32 1.1754944e-38, %v1906
        %v1908 = vsel %vm1905, %v1907, %v1903
        %v1909 = vmul.f32 %v1832, %v1908
        %v1910 = vrcp.pop %v1866
        %v1911 = vmul.f32 %v1866, %v1910
        %v1912 = vsub.f32 1.0, %v1911
        %v1913 = vmul.f32 %v1910, %v1912
        %v1914 = vadd.f32 %v1910, %v1913
        %vm1915 = vweird.f32 %v1866
        %vm1916 = vweird.f32 %v1910
        %vm1917 = vmor %vm1915, %vm1916
        %v1918 = vsel %vm1917, %v1910, %v1914
        %v1919 = vand.u32 2147483647, %v1866
        %vm1920 = vcmp.eq.f32.partialorder %v1919, 8.507059e+37
        %v1921 = vand.u32 %v1866, 2147483648
        %v1922 = vor.u32 1.1754944e-38, %v1921
        %v1923 = vsel %vm1920, %v1922, %v1918
        %v1924 = vmul.f32 %v1834, %v1923
        %v1925 = vrcp.pop %v1868
        %v1926 = vmul.f32 %v1868, %v1925
        %v1927 = vsub.f32 1.0, %v1926
        %v1928 = vmul.f32 %v1925, %v1927
        %v1929 = vadd.f32 %v1925, %v1928
        %vm1930 = vweird.f32 %v1868
        %vm1931 = vweird.f32 %v1925
        %vm1932 = vmor %vm1930, %vm1931
        %v1933 = vsel %vm1932, %v1925, %v1929
        %v1934 = vand.u32 2147483647, %v1868
        %vm1935 = vcmp.eq.f32.partialorder %v1934, 8.507059e+37
        %v1936 = vand.u32 %v1868, 2147483648
        %v1937 = vor.u32 1.1754944e-38, %v1936
        %v1938 = vsel %vm1935, %v1937, %v1933
        %v1939 = vmul.f32 %v1836, %v1938
        %v1940 = vrcp.pop %v1870
        %v1941 = vmul.f32 %v1870, %v1940
        %v1942 = vsub.f32 1.0, %v1941
        %v1943 = vmul.f32 %v1940, %v1942
        %v1944 = vadd.f32 %v1940, %v1943
        %vm1945 = vweird.f32 %v1870
        %vm1946 = vweird.f32 %v1940
        %vm1947 = vmor %vm1945, %vm1946
        %v1948 = vsel %vm1947, %v1940, %v1944
        %v1949 = vand.u32 2147483647, %v1870
        %vm1950 = vcmp.eq.f32.partialorder %v1949, 8.507059e+37
        %v1951 = vand.u32 %v1870, 2147483648
        %v1952 = vor.u32 1.1754944e-38, %v1951
        %v1953 = vsel %vm1950, %v1952, %v1948
        %v1954 = vmul.f32 %v1838, %v1953
        %v1955 = vrcp.pop %v1872
        %v1956 = vmul.f32 %v1872, %v1955
        %v1957 = vsub.f32 1.0, %v1956
        %v1958 = vmul.f32 %v1955, %v1957
        %v1959 = vadd.f32 %v1955, %v1958
        %vm1960 = vweird.f32 %v1872
        %vm1961 = vweird.f32 %v1955
        %vm1962 = vmor %vm1960, %vm1961
        %v1963 = vsel %vm1962, %v1955, %v1959
        %v1964 = vand.u32 2147483647, %v1872
        %vm1965 = vcmp.eq.f32.partialorder %v1964, 8.507059e+37
        %v1966 = vand.u32 %v1872, 2147483648
        %v1967 = vor.u32 1.1754944e-38, %v1966
        %v1968 = vsel %vm1965, %v1967, %v1963
        %v1969 = vmul.f32 %v1840, %v1968
        %v1970 = vrcp.pop %v1874
        %v1971 = vmul.f32 %v1874, %v1970
        %v1972 = vsub.f32 1.0, %v1971
        %v1973 = vmul.f32 %v1970, %v1972
        %v1974 = vadd.f32 %v1970, %v1973
        %vm1975 = vweird.f32 %v1874
        %vm1976 = vweird.f32 %v1970
        %vm1977 = vmor %vm1975, %vm1976
        %v1978 = vsel %vm1977, %v1970, %v1974
        %v1979 = vand.u32 2147483647, %v1874
        %vm1980 = vcmp.eq.f32.partialorder %v1979, 8.507059e+37
        %v1981 = vand.u32 %v1874, 2147483648
        %v1982 = vor.u32 1.1754944e-38, %v1981
        %v1983 = vsel %vm1980, %v1982, %v1978
        %v1984 = vmul.f32 %v1842, %v1983
        %v1985 = vrcp.pop %v1876
        %v1986 = vmul.f32 %v1876, %v1985
        %v1987 = vsub.f32 1.0, %v1986
        %v1988 = vmul.f32 %v1985, %v1987
        %v1989 = vadd.f32 %v1985, %v1988
        %vm1990 = vweird.f32 %v1876
        %vm1991 = vweird.f32 %v1985
        %vm1992 = vmor %vm1990, %vm1991
        %v1993 = vsel %vm1992, %v1985, %v1989
        %v1994 = vand.u32 2147483647, %v1876
        %vm1995 = vcmp.eq.f32.partialorder %v1994, 8.507059e+37
        %v1996 = vand.u32 %v1876, 2147483648
        %v1997 = vor.u32 1.1754944e-38, %v1996
        %v1998 = vsel %vm1995, %v1997, %v1993
        %v1999 = vmul.f32 %v1844, %v1998
        %v2000 = vrcp.pop %v1878
        %v2001 = vmul.f32 %v1878, %v2000
        %v2002 = vsub.f32 1.0, %v2001
        %v2003 = vmul.f32 %v2000, %v2002
        %v2004 = vadd.f32 %v2000, %v2003
        %vm2005 = vweird.f32 %v1878
        %vm2006 = vweird.f32 %v2000
        %vm2007 = vmor %vm2005, %vm2006
        %v2008 = vsel %vm2007, %v2000, %v2004
        %v2009 = vand.u32 2147483647, %v1878
        %vm2010 = vcmp.eq.f32.partialorder %v2009, 8.507059e+37
        %v2011 = vand.u32 %v1878, 2147483648
        %v2012 = vor.u32 1.1754944e-38, %v2011
        %v2013 = vsel %vm2010, %v2012, %v2008
        %v2014 = vmul.f32 %v1846, %v2013
        %v2015 = vrcp.pop %v1880
        %v2016 = vmul.f32 %v1880, %v2015
        %v2017 = vsub.f32 1.0, %v2016
        %v2018 = vmul.f32 %v2015, %v2017
        %v2019 = vadd.f32 %v2015, %v2018
        %vm2020 = vweird.f32 %v1880
        %vm2021 = vweird.f32 %v2015
        %vm2022 = vmor %vm2020, %vm2021
        %v2023 = vsel %vm2022, %v2015, %v2019
        %v2024 = vand.u32 2147483647, %v1880
        %vm2025 = vcmp.eq.f32.partialorder %v2024, 8.507059e+37
        %v2026 = vand.u32 %v1880, 2147483648
        %v2027 = vor.u32 1.1754944e-38, %v2026
        %v2028 = vsel %vm2025, %v2027, %v2023
        %v2029 = vmul.f32 %v1848, %v2028
        %v2030 = vrcp.pop %v1882
        %v2031 = vmul.f32 %v1882, %v2030
        %v2032 = vsub.f32 1.0, %v2031
        %v2033 = vmul.f32 %v2030, %v2032
        %v2034 = vadd.f32 %v2030, %v2033
        %vm2035 = vweird.f32 %v1882
        %vm2036 = vweird.f32 %v2030
        %vm2037 = vmor %vm2035, %vm2036
        %v2038 = vsel %vm2037, %v2030, %v2034
        %v2039 = vand.u32 2147483647, %v1882
        %vm2040 = vcmp.eq.f32.partialorder %v2039, 8.507059e+37
        %v2041 = vand.u32 %v1882, 2147483648
        %v2042 = vor.u32 1.1754944e-38, %v2041
        %v2043 = vsel %vm2040, %v2042, %v2038
        %v2044 = vmul.f32 %v1850, %v2043
        %v2045 = vrcp.pop %v1884
        %v2046 = vmul.f32 %v1884, %v2045
        %v2047 = vsub.f32 1.0, %v2046
        %v2048 = vmul.f32 %v2045, %v2047
        %v2049 = vadd.f32 %v2045, %v2048
        %vm2050 = vweird.f32 %v1884
        %vm2051 = vweird.f32 %v2045
        %vm2052 = vmor %vm2050, %vm2051
        %v2053 = vsel %vm2052, %v2045, %v2049
        %v2054 = vand.u32 2147483647, %v1884
        %vm2055 = vcmp.eq.f32.partialorder %v2054, 8.507059e+37
        %v2056 = vand.u32 %v1884, 2147483648
        %v2057 = vor.u32 1.1754944e-38, %v2056
        %v2058 = vsel %vm2055, %v2057, %v2053
        %v2059 = vmul.f32 %v1852, %v2058
        %v2060 = vrcp.pop %v1886
        %v2061 = vmul.f32 %v1886, %v2060
        %v2062 = vsub.f32 1.0, %v2061
        %v2063 = vmul.f32 %v2060, %v2062
        %v2064 = vadd.f32 %v2060, %v2063
        %vm2065 = vweird.f32 %v1886
        %vm2066 = vweird.f32 %v2060
        %vm2067 = vmor %vm2065, %vm2066
        %v2068 = vsel %vm2067, %v2060, %v2064
        %v2069 = vand.u32 2147483647, %v1886
        %vm2070 = vcmp.eq.f32.partialorder %v2069, 8.507059e+37
        %v2071 = vand.u32 %v1886, 2147483648
        %v2072 = vor.u32 1.1754944e-38, %v2071
        %v2073 = vsel %vm2070, %v2072, %v2068
        %v2074 = vmul.f32 %v1854, %v2073
        %v2075 = vrcp.pop %v1888
        %v2076 = vmul.f32 %v1888, %v2075
        %v2077 = vsub.f32 1.0, %v2076
        %v2078 = vmul.f32 %v2075, %v2077
        %v2079 = vadd.f32 %v2075, %v2078
        %vm2080 = vweird.f32 %v1888
        %vm2081 = vweird.f32 %v2075
        %vm2082 = vmor %vm2080, %vm2081
        %v2083 = vsel %vm2082, %v2075, %v2079
        %v2084 = vand.u32 2147483647, %v1888
        %vm2085 = vcmp.eq.f32.partialorder %v2084, 8.507059e+37
        %v2086 = vand.u32 %v1888, 2147483648
        %v2087 = vor.u32 1.1754944e-38, %v2086
        %v2088 = vsel %vm2085, %v2087, %v2083
        %v2089 = vmul.f32 %v1856, %v2088
        %v2090 = vrcp.pop %v1890
        %v2091 = vmul.f32 %v1890, %v2090
        %v2092 = vsub.f32 1.0, %v2091
        %v2093 = vmul.f32 %v2090, %v2092
        %v2094 = vadd.f32 %v2090, %v2093
        %vm2095 = vweird.f32 %v1890
        %vm2096 = vweird.f32 %v2090
        %vm2097 = vmor %vm2095, %vm2096
        %v2098 = vsel %vm2097, %v2090, %v2094
        %v2099 = vand.u32 2147483647, %v1890
        %vm2100 = vcmp.eq.f32.partialorder %v2099, 8.507059e+37
        %v2101 = vand.u32 %v1890, 2147483648
        %v2102 = vor.u32 1.1754944e-38, %v2101
        %v2103 = vsel %vm2100, %v2102, %v2098
        %v2104 = vmul.f32 %v1858, %v2103
        %v2105 = vrcp.pop %v1892
        %v2106 = vmul.f32 %v1892, %v2105
        %v2107 = vsub.f32 1.0, %v2106
        %v2108 = vmul.f32 %v2105, %v2107
        %v2109 = vadd.f32 %v2105, %v2108
        %vm2110 = vweird.f32 %v1892
        %vm2111 = vweird.f32 %v2105
        %vm2112 = vmor %vm2110, %vm2111
        %v2113 = vsel %vm2112, %v2105, %v2109
        %v2114 = vand.u32 2147483647, %v1892
        %vm2115 = vcmp.eq.f32.partialorder %v2114, 8.507059e+37
        %v2116 = vand.u32 %v1892, 2147483648
        %v2117 = vor.u32 1.1754944e-38, %v2116
        %v2118 = vsel %vm2115, %v2117, %v2113
        %v2119 = vmul.f32 %v1860, %v2118
        %v2120 = vrcp.pop %v1894
        %v2121 = vmul.f32 %v1894, %v2120
        %v2122 = vsub.f32 1.0, %v2121
        %v2123 = vmul.f32 %v2120, %v2122
        %v2124 = vadd.f32 %v2120, %v2123
        %vm2125 = vweird.f32 %v1894
        %vm2126 = vweird.f32 %v2120
        %vm2127 = vmor %vm2125, %vm2126
        %v2128 = vsel %vm2127, %v2120, %v2124
        %v2129 = vand.u32 2147483647, %v1894
        %vm2130 = vcmp.eq.f32.partialorder %v2129, 8.507059e+37
        %v2131 = vand.u32 %v1894, 2147483648
        %v2132 = vor.u32 1.1754944e-38, %v2131
        %v2133 = vsel %vm2130, %v2132, %v2128
        %v2134 = vmul.f32 %v1862, %v2133
        %v2135 = vld [vmem:[#allocation3] sm:$0xff]
        %v2136 = vld [vmem:[#allocation3 + $0x8] sm:$0xff]
        %v2137 = vld [vmem:[#allocation3 + $0x10] sm:$0xff]
        %v2138 = vld [vmem:[#allocation3 + $0x18] sm:$0xff]
        %v2139 = vld [vmem:[#allocation3 + $0x20] sm:$0xff]
        %v2140 = vld [vmem:[#allocation3 + $0x28] sm:$0xff]
        %v2141 = vld [vmem:[#allocation3 + $0x30] sm:$0xff]
        %v2142 = vld [vmem:[#allocation3 + $0x38] sm:$0xff]
        %v2143 = vld [vmem:[#allocation3 + $0x40] sm:$0xff]
        %v2144 = vld [vmem:[#allocation3 + $0x48] sm:$0xff]
        %v2145 = vld [vmem:[#allocation3 + $0x50] sm:$0xff]
        %v2146 = vld [vmem:[#allocation3 + $0x58] sm:$0xff]
        %v2147 = vld [vmem:[#allocation3 + $0x60] sm:$0xff]
        %v2148 = vld [vmem:[#allocation3 + $0x68] sm:$0xff]
        %v2149 = vld [vmem:[#allocation3 + $0x70] sm:$0xff]
        %v2150 = vld [vmem:[#allocation3 + $0x78] sm:$0xff]
        %2151 = vmatpush.msra.mxu0 %v2150
        %2152 = vmatpush.msra.mxu0 %v2149
        %2153 = vmatpush.msra.mxu0 %v2148
        %2154 = vmatpush.msra.mxu0 %v2147
        %2155 = vmatpush.msra.mxu0 %v2146
        %2156 = vmatpush.msra.mxu0 %v2145
        %2157 = vmatpush.msra.mxu0 %v2144
        %2158 = vmatpush.msra.mxu0 %v2143
        %2159 = vmatpush.msra.mxu0 %v2142
        %2160 = vmatpush.msra.mxu0 %v2141
        %2161 = vmatpush.msra.mxu0 %v2140
        %2162 = vmatpush.msra.mxu0 %v2139
        %2163 = vmatpush.msra.mxu0 %v2138
        %2164 = vmatpush.msra.mxu0 %v2137
        %2165 = vmatpush.msra.mxu0 %v2136
        %2166 = vmatpush.msra.mxu0 %v2135
        %2167 = vmatmul.f32.gmra.mxu0 %v1909
        %v2168 = vpop.f32.mrf.mxu0
        %v2169 = vadd.f32 0.0, %v2168
        %2170 = vmatmul.f32.gmra.mxu0 %v1924
        %v2171 = vpop.f32.mrf.mxu0
        %v2172 = vadd.f32 0.0, %v2171
        %2173 = vmatmul.f32.gmra.mxu0 %v1939
        %v2174 = vpop.f32.mrf.mxu0
        %v2175 = vadd.f32 0.0, %v2174
        %2176 = vmatmul.f32.gmra.mxu0 %v1954
        %v2177 = vpop.f32.mrf.mxu0
        %v2178 = vadd.f32 0.0, %v2177
        %2179 = vmatmul.f32.gmra.mxu0 %v1969
        %v2180 = vpop.f32.mrf.mxu0
        %v2181 = vadd.f32 0.0, %v2180
        %2182 = vmatmul.f32.gmra.mxu0 %v1984
        %v2183 = vpop.f32.mrf.mxu0
        %v2184 = vadd.f32 0.0, %v2183
        %2185 = vmatmul.f32.gmra.mxu0 %v1999
        %v2186 = vpop.f32.mrf.mxu0
        %v2187 = vadd.f32 0.0, %v2186
        %2188 = vmatmul.f32.gmra.mxu0 %v2014
        %v2189 = vpop.f32.mrf.mxu0
        %v2190 = vadd.f32 0.0, %v2189
        %2191 = vmatmul.f32.gmra.mxu0 %v2029
        %v2192 = vpop.f32.mrf.mxu0
        %v2193 = vadd.f32 0.0, %v2192
        %2194 = vmatmul.f32.gmra.mxu0 %v2044
        %v2195 = vpop.f32.mrf.mxu0
        %v2196 = vadd.f32 0.0, %v2195
        %2197 = vmatmul.f32.gmra.mxu0 %v2059
        %v2198 = vpop.f32.mrf.mxu0
        %v2199 = vadd.f32 0.0, %v2198
        %2200 = vmatmul.f32.gmra.mxu0 %v2074
        %v2201 = vpop.f32.mrf.mxu0
        %v2202 = vadd.f32 0.0, %v2201
        %2203 = vmatmul.f32.gmra.mxu0 %v2089
        %v2204 = vpop.f32.mrf.mxu0
        %v2205 = vadd.f32 0.0, %v2204
        %2206 = vmatmul.f32.gmra.mxu0 %v2104
        %v2207 = vpop.f32.mrf.mxu0
        %v2208 = vadd.f32 0.0, %v2207
        %2209 = vmatmul.f32.gmra.mxu0 %v2119
        %v2210 = vpop.f32.mrf.mxu0
        %v2211 = vadd.f32 0.0, %v2210
        %2212 = vmatmul.f32.gmra.mxu0 %v2134
        %v2213 = vpop.f32.mrf.mxu0
        %v2214 = vadd.f32 0.0, %v2213
        %2215 = vdwg.mxu0
        %s2216 = scalar_lea.vmem [#allocation2], 32
        %v2217 = vld [vmem:[%s2216] sm:$0xff]
        %v2218 = vld [vmem:[%s2216 + $0x8] sm:$0xff]
        %v2219 = vld [vmem:[%s2216 + $0x10] sm:$0xff]
        %v2220 = vld [vmem:[%s2216 + $0x18] sm:$0xff]
        %2221 = vrot.lane.b32.xlu0 %v1618, 96
        %v2222 = vpop.permute.xlu0 %2221
        %2223 = vrot.lane.b32.xlu0 %v1621, 96
        %v2224 = vpop.permute.xlu0 %2223
        %2225 = vrot.lane.b32.xlu0 %v1624, 96
        %v2226 = vpop.permute.xlu0 %2225
        %2227 = vrot.lane.b32.xlu0 %v1627, 96
        %v2228 = vpop.permute.xlu0 %2227
        %2229 = vrot.lane.b32.xlu0 %v1630, 96
        %v2230 = vpop.permute.xlu0 %2229
        %2231 = vrot.lane.b32.xlu0 %v1633, 96
        %v2232 = vpop.permute.xlu0 %2231
        %2233 = vrot.lane.b32.xlu0 %v1636, 96
        %v2234 = vpop.permute.xlu0 %2233
        %2235 = vrot.lane.b32.xlu0 %v1639, 96
        %v2236 = vpop.permute.xlu0 %2235
        %2237 = vrot.lane.b32.xlu0 %v1642, 96
        %v2238 = vpop.permute.xlu0 %2237
        %2239 = vrot.lane.b32.xlu0 %v1645, 96
        %v2240 = vpop.permute.xlu0 %2239
        %2241 = vrot.lane.b32.xlu0 %v1648, 96
        %v2242 = vpop.permute.xlu0 %2241
        %2243 = vrot.lane.b32.xlu0 %v1651, 96
        %v2244 = vpop.permute.xlu0 %2243
        %2245 = vrot.lane.b32.xlu0 %v1654, 96
        %v2246 = vpop.permute.xlu0 %2245
        %2247 = vrot.lane.b32.xlu0 %v1657, 96
        %v2248 = vpop.permute.xlu0 %2247
        %2249 = vrot.lane.b32.xlu0 %v1660, 96
        %v2250 = vpop.permute.xlu0 %2249
        %2251 = vrot.lane.b32.xlu0 %v1663, 96
        %v2252 = vpop.permute.xlu0 %2251
        %v2253 = vsel %vm1669, %v2222, 0
        %v2255 = vsel %vm1669, %v2224, 0
        %v2257 = vsel %vm1669, %v2226, 0
        %v2259 = vsel %vm1669, %v2228, 0
        %v2261 = vsel %vm1669, %v2230, 0
        %v2263 = vsel %vm1669, %v2232, 0
        %v2265 = vsel %vm1669, %v2234, 0
        %v2267 = vsel %vm1669, %v2236, 0
        %v2269 = vsel %vm1669, %v2238, 0
        %v2271 = vsel %vm1669, %v2240, 0
        %v2273 = vsel %vm1669, %v2242, 0
        %v2275 = vsel %vm1669, %v2244, 0
        %v2277 = vsel %vm1669, %v2246, 0
        %v2279 = vsel %vm1669, %v2248, 0
        %v2281 = vsel %vm1669, %v2250, 0
        %v2283 = vsel %vm1669, %v2252, 0
        %2285 = vmatpush.msra.mxu0 0.0
        %2286 = vmatpush.msra.mxu0 0.0
        %2287 = vmatpush.msra.mxu0 0.0
        %2288 = vmatpush.msra.mxu0 0.0
        %2289 = vmatpush.msra.mxu0 0.0
        %2290 = vmatpush.msra.mxu0 0.0
        %2291 = vmatpush.msra.mxu0 0.0
        %2292 = vmatpush.msra.mxu0 0.0
        %2293 = vmatpush.msra.mxu0 0.0
        %2294 = vmatpush.msra.mxu0 0.0
        %2295 = vmatpush.msra.mxu0 0.0
        %2296 = vmatpush.msra.mxu0 0.0
        %2297 = vmatpush.msra.mxu0 %v2220
        %2298 = vmatpush.msra.mxu0 %v2219
        %2299 = vmatpush.msra.mxu0 %v2218
        %2300 = vmatpush.msra.mxu0 %v2217
        %2301 = vmatmul.f32.gmra.mxu0 %v2253
        %v2302 = vpop.f32.mrf.mxu0
        %v2303 = vadd.f32 0.0, %v2302
        %2304 = vmatmul.f32.gmra.mxu0 %v2255
        %v2305 = vpop.f32.mrf.mxu0
        %v2306 = vadd.f32 0.0, %v2305
        %2307 = vmatmul.f32.gmra.mxu0 %v2257
        %v2308 = vpop.f32.mrf.mxu0
        %v2309 = vadd.f32 0.0, %v2308
        %2310 = vmatmul.f32.gmra.mxu0 %v2259
        %v2311 = vpop.f32.mrf.mxu0
        %v2312 = vadd.f32 0.0, %v2311
        %2313 = vmatmul.f32.gmra.mxu0 %v2261
        %v2314 = vpop.f32.mrf.mxu0
        %v2315 = vadd.f32 0.0, %v2314
        %2316 = vmatmul.f32.gmra.mxu0 %v2263
        %v2317 = vpop.f32.mrf.mxu0
        %v2318 = vadd.f32 0.0, %v2317
        %2319 = vmatmul.f32.gmra.mxu0 %v2265
        %v2320 = vpop.f32.mrf.mxu0
        %v2321 = vadd.f32 0.0, %v2320
        %2322 = vmatmul.f32.gmra.mxu0 %v2267
        %v2323 = vpop.f32.mrf.mxu0
        %v2324 = vadd.f32 0.0, %v2323
        %2325 = vmatmul.f32.gmra.mxu0 %v2269
        %v2326 = vpop.f32.mrf.mxu0
        %v2327 = vadd.f32 0.0, %v2326
        %2328 = vmatmul.f32.gmra.mxu0 %v2271
        %v2329 = vpop.f32.mrf.mxu0
        %v2330 = vadd.f32 0.0, %v2329
        %2331 = vmatmul.f32.gmra.mxu0 %v2273
        %v2332 = vpop.f32.mrf.mxu0
        %v2333 = vadd.f32 0.0, %v2332
        %2334 = vmatmul.f32.gmra.mxu0 %v2275
        %v2335 = vpop.f32.mrf.mxu0
        %v2336 = vadd.f32 0.0, %v2335
        %2337 = vmatmul.f32.gmra.mxu0 %v2277
        %v2338 = vpop.f32.mrf.mxu0
        %v2339 = vadd.f32 0.0, %v2338
        %2340 = vmatmul.f32.gmra.mxu0 %v2279
        %v2341 = vpop.f32.mrf.mxu0
        %v2342 = vadd.f32 0.0, %v2341
        %2343 = vmatmul.f32.gmra.mxu0 %v2281
        %v2344 = vpop.f32.mrf.mxu0
        %v2345 = vadd.f32 0.0, %v2344
        %2346 = vmatmul.f32.gmra.mxu0 %v2283
        %v2347 = vpop.f32.mrf.mxu0
        %v2348 = vadd.f32 0.0, %v2347
        %2349 = vdwg.mxu0
        %2350 = vmax.xlane.f32.xlu0 %v2303
        %v2351 = vpop.xlane.xlu0 %2350
        %2352 = vmax.xlane.f32.xlu0 %v2306
        %v2353 = vpop.xlane.xlu0 %2352
        %2354 = vmax.xlane.f32.xlu0 %v2309
        %v2355 = vpop.xlane.xlu0 %2354
        %2356 = vmax.xlane.f32.xlu0 %v2312
        %v2357 = vpop.xlane.xlu0 %2356
        %2358 = vmax.xlane.f32.xlu0 %v2315
        %v2359 = vpop.xlane.xlu0 %2358
        %2360 = vmax.xlane.f32.xlu0 %v2318
        %v2361 = vpop.xlane.xlu0 %2360
        %2362 = vmax.xlane.f32.xlu0 %v2321
        %v2363 = vpop.xlane.xlu0 %2362
        %2364 = vmax.xlane.f32.xlu0 %v2324
        %v2365 = vpop.xlane.xlu0 %2364
        %2366 = vmax.xlane.f32.xlu0 %v2327
        %v2367 = vpop.xlane.xlu0 %2366
        %2368 = vmax.xlane.f32.xlu0 %v2330
        %v2369 = vpop.xlane.xlu0 %2368
        %2370 = vmax.xlane.f32.xlu0 %v2333
        %v2371 = vpop.xlane.xlu0 %2370
        %2372 = vmax.xlane.f32.xlu0 %v2336
        %v2373 = vpop.xlane.xlu0 %2372
        %2374 = vmax.xlane.f32.xlu0 %v2339
        %v2375 = vpop.xlane.xlu0 %2374
        %2376 = vmax.xlane.f32.xlu0 %v2342
        %v2377 = vpop.xlane.xlu0 %2376
        %2378 = vmax.xlane.f32.xlu0 %v2345
        %v2379 = vpop.xlane.xlu0 %2378
        %2380 = vmax.xlane.f32.xlu0 %v2348
        %v2381 = vpop.xlane.xlu0 %2380
        %v2382 = vsub.f32 %v2303, %v2351
        %v2383 = vsub.f32 %v2306, %v2353
        %v2384 = vsub.f32 %v2309, %v2355
        %v2385 = vsub.f32 %v2312, %v2357
        %v2386 = vsub.f32 %v2315, %v2359
        %v2387 = vsub.f32 %v2318, %v2361
        %v2388 = vsub.f32 %v2321, %v2363
        %v2389 = vsub.f32 %v2324, %v2365
        %v2390 = vsub.f32 %v2327, %v2367
        %v2391 = vsub.f32 %v2330, %v2369
        %v2392 = vsub.f32 %v2333, %v2371
        %v2393 = vsub.f32 %v2336, %v2373
        %v2394 = vsub.f32 %v2339, %v2375
        %v2395 = vsub.f32 %v2342, %v2377
        %v2396 = vsub.f32 %v2345, %v2379
        %v2397 = vsub.f32 %v2348, %v2381
        %v2398 = vmul.f32 %v2382, 1.442695
        %v2399 = vpow.pop %v2398
        %v2400 = vmul.f32 %v2383, 1.442695
        %v2401 = vpow.pop %v2400
        %v2402 = vmul.f32 %v2384, 1.442695
        %v2403 = vpow.pop %v2402
        %v2404 = vmul.f32 %v2385, 1.442695
        %v2405 = vpow.pop %v2404
        %v2406 = vmul.f32 %v2386, 1.442695
        %v2407 = vpow.pop %v2406
        %v2408 = vmul.f32 %v2387, 1.442695
        %v2409 = vpow.pop %v2408
        %v2410 = vmul.f32 %v2388, 1.442695
        %v2411 = vpow.pop %v2410
        %v2412 = vmul.f32 %v2389, 1.442695
        %v2413 = vpow.pop %v2412
        %v2414 = vmul.f32 %v2390, 1.442695
        %v2415 = vpow.pop %v2414
        %v2416 = vmul.f32 %v2391, 1.442695
        %v2417 = vpow.pop %v2416
        %v2418 = vmul.f32 %v2392, 1.442695
        %v2419 = vpow.pop %v2418
        %v2420 = vmul.f32 %v2393, 1.442695
        %v2421 = vpow.pop %v2420
        %v2422 = vmul.f32 %v2394, 1.442695
        %v2423 = vpow.pop %v2422
        %v2424 = vmul.f32 %v2395, 1.442695
        %v2425 = vpow.pop %v2424
        %v2426 = vmul.f32 %v2396, 1.442695
        %v2427 = vpow.pop %v2426
        %v2428 = vmul.f32 %v2397, 1.442695
        %v2429 = vpow.pop %v2428
        %2430 = vadd.xlane.f32.xlu0 %v2399
        %v2431 = vpop.xlane.xlu0 %2430
        %2432 = vadd.xlane.f32.xlu0 %v2401
        %v2433 = vpop.xlane.xlu0 %2432
        %2434 = vadd.xlane.f32.xlu0 %v2403
        %v2435 = vpop.xlane.xlu0 %2434
        %2436 = vadd.xlane.f32.xlu0 %v2405
        %v2437 = vpop.xlane.xlu0 %2436
        %2438 = vadd.xlane.f32.xlu0 %v2407
        %v2439 = vpop.xlane.xlu0 %2438
        %2440 = vadd.xlane.f32.xlu0 %v2409
        %v2441 = vpop.xlane.xlu0 %2440
        %2442 = vadd.xlane.f32.xlu0 %v2411
        %v2443 = vpop.xlane.xlu0 %2442
        %2444 = vadd.xlane.f32.xlu0 %v2413
        %v2445 = vpop.xlane.xlu0 %2444
        %2446 = vadd.xlane.f32.xlu0 %v2415
        %v2447 = vpop.xlane.xlu0 %2446
        %2448 = vadd.xlane.f32.xlu0 %v2417
        %v2449 = vpop.xlane.xlu0 %2448
        %2450 = vadd.xlane.f32.xlu0 %v2419
        %v2451 = vpop.xlane.xlu0 %2450
        %2452 = vadd.xlane.f32.xlu0 %v2421
        %v2453 = vpop.xlane.xlu0 %2452
        %2454 = vadd.xlane.f32.xlu0 %v2423
        %v2455 = vpop.xlane.xlu0 %2454
        %2456 = vadd.xlane.f32.xlu0 %v2425
        %v2457 = vpop.xlane.xlu0 %2456
        %2458 = vadd.xlane.f32.xlu0 %v2427
        %v2459 = vpop.xlane.xlu0 %2458
        %2460 = vadd.xlane.f32.xlu0 %v2429
        %v2461 = vpop.xlane.xlu0 %2460
        %v2462 = vrcp.pop %v2431
        %v2463 = vmul.f32 %v2431, %v2462
        %v2464 = vsub.f32 1.0, %v2463
        %v2465 = vmul.f32 %v2462, %v2464
        %v2466 = vadd.f32 %v2462, %v2465
        %vm2467 = vweird.f32 %v2431
        %vm2468 = vweird.f32 %v2462
        %vm2469 = vmor %vm2467, %vm2468
        %v2470 = vsel %vm2469, %v2462, %v2466
        %v2471 = vand.u32 2147483647, %v2431
        %vm2472 = vcmp.eq.f32.partialorder %v2471, 8.507059e+37
        %v2473 = vand.u32 %v2431, 2147483648
        %v2474 = vor.u32 1.1754944e-38, %v2473
        %v2475 = vsel %vm2472, %v2474, %v2470
        %v2476 = vmul.f32 %v2399, %v2475
        %v2477 = vrcp.pop %v2433
        %v2478 = vmul.f32 %v2433, %v2477
        %v2479 = vsub.f32 1.0, %v2478
        %v2480 = vmul.f32 %v2477, %v2479
        %v2481 = vadd.f32 %v2477, %v2480
        %vm2482 = vweird.f32 %v2433
        %vm2483 = vweird.f32 %v2477
        %vm2484 = vmor %vm2482, %vm2483
        %v2485 = vsel %vm2484, %v2477, %v2481
        %v2486 = vand.u32 2147483647, %v2433
        %vm2487 = vcmp.eq.f32.partialorder %v2486, 8.507059e+37
        %v2488 = vand.u32 %v2433, 2147483648
        %v2489 = vor.u32 1.1754944e-38, %v2488
        %v2490 = vsel %vm2487, %v2489, %v2485
        %v2491 = vmul.f32 %v2401, %v2490
        %v2492 = vrcp.pop %v2435
        %v2493 = vmul.f32 %v2435, %v2492
        %v2494 = vsub.f32 1.0, %v2493
        %v2495 = vmul.f32 %v2492, %v2494
        %v2496 = vadd.f32 %v2492, %v2495
        %vm2497 = vweird.f32 %v2435
        %vm2498 = vweird.f32 %v2492
        %vm2499 = vmor %vm2497, %vm2498
        %v2500 = vsel %vm2499, %v2492, %v2496
        %v2501 = vand.u32 2147483647, %v2435
        %vm2502 = vcmp.eq.f32.partialorder %v2501, 8.507059e+37
        %v2503 = vand.u32 %v2435, 2147483648
        %v2504 = vor.u32 1.1754944e-38, %v2503
        %v2505 = vsel %vm2502, %v2504, %v2500
        %v2506 = vmul.f32 %v2403, %v2505
        %v2507 = vrcp.pop %v2437
        %v2508 = vmul.f32 %v2437, %v2507
        %v2509 = vsub.f32 1.0, %v2508
        %v2510 = vmul.f32 %v2507, %v2509
        %v2511 = vadd.f32 %v2507, %v2510
        %vm2512 = vweird.f32 %v2437
        %vm2513 = vweird.f32 %v2507
        %vm2514 = vmor %vm2512, %vm2513
        %v2515 = vsel %vm2514, %v2507, %v2511
        %v2516 = vand.u32 2147483647, %v2437
        %vm2517 = vcmp.eq.f32.partialorder %v2516, 8.507059e+37
        %v2518 = vand.u32 %v2437, 2147483648
        %v2519 = vor.u32 1.1754944e-38, %v2518
        %v2520 = vsel %vm2517, %v2519, %v2515
        %v2521 = vmul.f32 %v2405, %v2520
        %v2522 = vrcp.pop %v2439
        %v2523 = vmul.f32 %v2439, %v2522
        %v2524 = vsub.f32 1.0, %v2523
        %v2525 = vmul.f32 %v2522, %v2524
        %v2526 = vadd.f32 %v2522, %v2525
        %vm2527 = vweird.f32 %v2439
        %vm2528 = vweird.f32 %v2522
        %vm2529 = vmor %vm2527, %vm2528
        %v2530 = vsel %vm2529, %v2522, %v2526
        %v2531 = vand.u32 2147483647, %v2439
        %vm2532 = vcmp.eq.f32.partialorder %v2531, 8.507059e+37
        %v2533 = vand.u32 %v2439, 2147483648
        %v2534 = vor.u32 1.1754944e-38, %v2533
        %v2535 = vsel %vm2532, %v2534, %v2530
        %v2536 = vmul.f32 %v2407, %v2535
        %v2537 = vrcp.pop %v2441
        %v2538 = vmul.f32 %v2441, %v2537
        %v2539 = vsub.f32 1.0, %v2538
        %v2540 = vmul.f32 %v2537, %v2539
        %v2541 = vadd.f32 %v2537, %v2540
        %vm2542 = vweird.f32 %v2441
        %vm2543 = vweird.f32 %v2537
        %vm2544 = vmor %vm2542, %vm2543
        %v2545 = vsel %vm2544, %v2537, %v2541
        %v2546 = vand.u32 2147483647, %v2441
        %vm2547 = vcmp.eq.f32.partialorder %v2546, 8.507059e+37
        %v2548 = vand.u32 %v2441, 2147483648
        %v2549 = vor.u32 1.1754944e-38, %v2548
        %v2550 = vsel %vm2547, %v2549, %v2545
        %v2551 = vmul.f32 %v2409, %v2550
        %v2552 = vrcp.pop %v2443
        %v2553 = vmul.f32 %v2443, %v2552
        %v2554 = vsub.f32 1.0, %v2553
        %v2555 = vmul.f32 %v2552, %v2554
        %v2556 = vadd.f32 %v2552, %v2555
        %vm2557 = vweird.f32 %v2443
        %vm2558 = vweird.f32 %v2552
        %vm2559 = vmor %vm2557, %vm2558
        %v2560 = vsel %vm2559, %v2552, %v2556
        %v2561 = vand.u32 2147483647, %v2443
        %vm2562 = vcmp.eq.f32.partialorder %v2561, 8.507059e+37
        %v2563 = vand.u32 %v2443, 2147483648
        %v2564 = vor.u32 1.1754944e-38, %v2563
        %v2565 = vsel %vm2562, %v2564, %v2560
        %v2566 = vmul.f32 %v2411, %v2565
        %v2567 = vrcp.pop %v2445
        %v2568 = vmul.f32 %v2445, %v2567
        %v2569 = vsub.f32 1.0, %v2568
        %v2570 = vmul.f32 %v2567, %v2569
        %v2571 = vadd.f32 %v2567, %v2570
        %vm2572 = vweird.f32 %v2445
        %vm2573 = vweird.f32 %v2567
        %vm2574 = vmor %vm2572, %vm2573
        %v2575 = vsel %vm2574, %v2567, %v2571
        %v2576 = vand.u32 2147483647, %v2445
        %vm2577 = vcmp.eq.f32.partialorder %v2576, 8.507059e+37
        %v2578 = vand.u32 %v2445, 2147483648
        %v2579 = vor.u32 1.1754944e-38, %v2578
        %v2580 = vsel %vm2577, %v2579, %v2575
        %v2581 = vmul.f32 %v2413, %v2580
        %v2582 = vrcp.pop %v2447
        %v2583 = vmul.f32 %v2447, %v2582
        %v2584 = vsub.f32 1.0, %v2583
        %v2585 = vmul.f32 %v2582, %v2584
        %v2586 = vadd.f32 %v2582, %v2585
        %vm2587 = vweird.f32 %v2447
        %vm2588 = vweird.f32 %v2582
        %vm2589 = vmor %vm2587, %vm2588
        %v2590 = vsel %vm2589, %v2582, %v2586
        %v2591 = vand.u32 2147483647, %v2447
        %vm2592 = vcmp.eq.f32.partialorder %v2591, 8.507059e+37
        %v2593 = vand.u32 %v2447, 2147483648
        %v2594 = vor.u32 1.1754944e-38, %v2593
        %v2595 = vsel %vm2592, %v2594, %v2590
        %v2596 = vmul.f32 %v2415, %v2595
        %v2597 = vrcp.pop %v2449
        %v2598 = vmul.f32 %v2449, %v2597
        %v2599 = vsub.f32 1.0, %v2598
        %v2600 = vmul.f32 %v2597, %v2599
        %v2601 = vadd.f32 %v2597, %v2600
        %vm2602 = vweird.f32 %v2449
        %vm2603 = vweird.f32 %v2597
        %vm2604 = vmor %vm2602, %vm2603
        %v2605 = vsel %vm2604, %v2597, %v2601
        %v2606 = vand.u32 2147483647, %v2449
        %vm2607 = vcmp.eq.f32.partialorder %v2606, 8.507059e+37
        %v2608 = vand.u32 %v2449, 2147483648
        %v2609 = vor.u32 1.1754944e-38, %v2608
        %v2610 = vsel %vm2607, %v2609, %v2605
        %v2611 = vmul.f32 %v2417, %v2610
        %v2612 = vrcp.pop %v2451
        %v2613 = vmul.f32 %v2451, %v2612
        %v2614 = vsub.f32 1.0, %v2613
        %v2615 = vmul.f32 %v2612, %v2614
        %v2616 = vadd.f32 %v2612, %v2615
        %vm2617 = vweird.f32 %v2451
        %vm2618 = vweird.f32 %v2612
        %vm2619 = vmor %vm2617, %vm2618
        %v2620 = vsel %vm2619, %v2612, %v2616
        %v2621 = vand.u32 2147483647, %v2451
        %vm2622 = vcmp.eq.f32.partialorder %v2621, 8.507059e+37
        %v2623 = vand.u32 %v2451, 2147483648
        %v2624 = vor.u32 1.1754944e-38, %v2623
        %v2625 = vsel %vm2622, %v2624, %v2620
        %v2626 = vmul.f32 %v2419, %v2625
        %v2627 = vrcp.pop %v2453
        %v2628 = vmul.f32 %v2453, %v2627
        %v2629 = vsub.f32 1.0, %v2628
        %v2630 = vmul.f32 %v2627, %v2629
        %v2631 = vadd.f32 %v2627, %v2630
        %vm2632 = vweird.f32 %v2453
        %vm2633 = vweird.f32 %v2627
        %vm2634 = vmor %vm2632, %vm2633
        %v2635 = vsel %vm2634, %v2627, %v2631
        %v2636 = vand.u32 2147483647, %v2453
        %vm2637 = vcmp.eq.f32.partialorder %v2636, 8.507059e+37
        %v2638 = vand.u32 %v2453, 2147483648
        %v2639 = vor.u32 1.1754944e-38, %v2638
        %v2640 = vsel %vm2637, %v2639, %v2635
        %v2641 = vmul.f32 %v2421, %v2640
        %v2642 = vrcp.pop %v2455
        %v2643 = vmul.f32 %v2455, %v2642
        %v2644 = vsub.f32 1.0, %v2643
        %v2645 = vmul.f32 %v2642, %v2644
        %v2646 = vadd.f32 %v2642, %v2645
        %vm2647 = vweird.f32 %v2455
        %vm2648 = vweird.f32 %v2642
        %vm2649 = vmor %vm2647, %vm2648
        %v2650 = vsel %vm2649, %v2642, %v2646
        %v2651 = vand.u32 2147483647, %v2455
        %vm2652 = vcmp.eq.f32.partialorder %v2651, 8.507059e+37
        %v2653 = vand.u32 %v2455, 2147483648
        %v2654 = vor.u32 1.1754944e-38, %v2653
        %v2655 = vsel %vm2652, %v2654, %v2650
        %v2656 = vmul.f32 %v2423, %v2655
        %v2657 = vrcp.pop %v2457
        %v2658 = vmul.f32 %v2457, %v2657
        %v2659 = vsub.f32 1.0, %v2658
        %v2660 = vmul.f32 %v2657, %v2659
        %v2661 = vadd.f32 %v2657, %v2660
        %vm2662 = vweird.f32 %v2457
        %vm2663 = vweird.f32 %v2657
        %vm2664 = vmor %vm2662, %vm2663
        %v2665 = vsel %vm2664, %v2657, %v2661
        %v2666 = vand.u32 2147483647, %v2457
        %vm2667 = vcmp.eq.f32.partialorder %v2666, 8.507059e+37
        %v2668 = vand.u32 %v2457, 2147483648
        %v2669 = vor.u32 1.1754944e-38, %v2668
        %v2670 = vsel %vm2667, %v2669, %v2665
        %v2671 = vmul.f32 %v2425, %v2670
        %v2672 = vrcp.pop %v2459
        %v2673 = vmul.f32 %v2459, %v2672
        %v2674 = vsub.f32 1.0, %v2673
        %v2675 = vmul.f32 %v2672, %v2674
        %v2676 = vadd.f32 %v2672, %v2675
        %vm2677 = vweird.f32 %v2459
        %vm2678 = vweird.f32 %v2672
        %vm2679 = vmor %vm2677, %vm2678
        %v2680 = vsel %vm2679, %v2672, %v2676
        %v2681 = vand.u32 2147483647, %v2459
        %vm2682 = vcmp.eq.f32.partialorder %v2681, 8.507059e+37
        %v2683 = vand.u32 %v2459, 2147483648
        %v2684 = vor.u32 1.1754944e-38, %v2683
        %v2685 = vsel %vm2682, %v2684, %v2680
        %v2686 = vmul.f32 %v2427, %v2685
        %v2687 = vrcp.pop %v2461
        %v2688 = vmul.f32 %v2461, %v2687
        %v2689 = vsub.f32 1.0, %v2688
        %v2690 = vmul.f32 %v2687, %v2689
        %v2691 = vadd.f32 %v2687, %v2690
        %vm2692 = vweird.f32 %v2461
        %vm2693 = vweird.f32 %v2687
        %vm2694 = vmor %vm2692, %vm2693
        %v2695 = vsel %vm2694, %v2687, %v2691
        %v2696 = vand.u32 2147483647, %v2461
        %vm2697 = vcmp.eq.f32.partialorder %v2696, 8.507059e+37
        %v2698 = vand.u32 %v2461, 2147483648
        %v2699 = vor.u32 1.1754944e-38, %v2698
        %v2700 = vsel %vm2697, %v2699, %v2695
        %v2701 = vmul.f32 %v2429, %v2700
        %s2702 = scalar_lea.vmem [#allocation3], 128
        %v2703 = vld [vmem:[%s2702] sm:$0xff]
        %v2704 = vld [vmem:[%s2702 + $0x8] sm:$0xff]
        %v2705 = vld [vmem:[%s2702 + $0x10] sm:$0xff]
        %v2706 = vld [vmem:[%s2702 + $0x18] sm:$0xff]
        %v2707 = vld [vmem:[%s2702 + $0x20] sm:$0xff]
        %v2708 = vld [vmem:[%s2702 + $0x28] sm:$0xff]
        %v2709 = vld [vmem:[%s2702 + $0x30] sm:$0xff]
        %v2710 = vld [vmem:[%s2702 + $0x38] sm:$0xff]
        %v2711 = vld [vmem:[%s2702 + $0x40] sm:$0xff]
        %v2712 = vld [vmem:[%s2702 + $0x48] sm:$0xff]
        %v2713 = vld [vmem:[%s2702 + $0x50] sm:$0xff]
        %v2714 = vld [vmem:[%s2702 + $0x58] sm:$0xff]
        %v2715 = vld [vmem:[%s2702 + $0x60] sm:$0xff]
        %v2716 = vld [vmem:[%s2702 + $0x68] sm:$0xff]
        %v2717 = vld [vmem:[%s2702 + $0x70] sm:$0xff]
        %v2718 = vld [vmem:[%s2702 + $0x78] sm:$0xff]
        %2719 = vmatpush.msra.mxu0 %v2718
        %2720 = vmatpush.msra.mxu0 %v2717
        %2721 = vmatpush.msra.mxu0 %v2716
        %2722 = vmatpush.msra.mxu0 %v2715
        %2723 = vmatpush.msra.mxu0 %v2714
        %2724 = vmatpush.msra.mxu0 %v2713
        %2725 = vmatpush.msra.mxu0 %v2712
        %2726 = vmatpush.msra.mxu0 %v2711
        %2727 = vmatpush.msra.mxu0 %v2710
        %2728 = vmatpush.msra.mxu0 %v2709
        %2729 = vmatpush.msra.mxu0 %v2708
        %2730 = vmatpush.msra.mxu0 %v2707
        %2731 = vmatpush.msra.mxu0 %v2706
        %2732 = vmatpush.msra.mxu0 %v2705
        %2733 = vmatpush.msra.mxu0 %v2704
        %2734 = vmatpush.msra.mxu0 %v2703
        %2735 = vmatmul.f32.gmra.mxu0 %v2476
        %v2736 = vpop.f32.mrf.mxu0
        %v2737 = vadd.f32 0.0, %v2736
        %2738 = vmatmul.f32.gmra.mxu0 %v2491
        %v2739 = vpop.f32.mrf.mxu0
        %v2740 = vadd.f32 0.0, %v2739
        %2741 = vmatmul.f32.gmra.mxu0 %v2506
        %v2742 = vpop.f32.mrf.mxu0
        %v2743 = vadd.f32 0.0, %v2742
        %2744 = vmatmul.f32.gmra.mxu0 %v2521
        %v2745 = vpop.f32.mrf.mxu0
        %v2746 = vadd.f32 0.0, %v2745
        %2747 = vmatmul.f32.gmra.mxu0 %v2536
        %v2748 = vpop.f32.mrf.mxu0
        %v2749 = vadd.f32 0.0, %v2748
        %2750 = vmatmul.f32.gmra.mxu0 %v2551
        %v2751 = vpop.f32.mrf.mxu0
        %v2752 = vadd.f32 0.0, %v2751
        %2753 = vmatmul.f32.gmra.mxu0 %v2566
        %v2754 = vpop.f32.mrf.mxu0
        %v2755 = vadd.f32 0.0, %v2754
        %2756 = vmatmul.f32.gmra.mxu0 %v2581
        %v2757 = vpop.f32.mrf.mxu0
        %v2758 = vadd.f32 0.0, %v2757
        %2759 = vmatmul.f32.gmra.mxu0 %v2596
        %v2760 = vpop.f32.mrf.mxu0
        %v2761 = vadd.f32 0.0, %v2760
        %2762 = vmatmul.f32.gmra.mxu0 %v2611
        %v2763 = vpop.f32.mrf.mxu0
        %v2764 = vadd.f32 0.0, %v2763
        %2765 = vmatmul.f32.gmra.mxu0 %v2626
        %v2766 = vpop.f32.mrf.mxu0
        %v2767 = vadd.f32 0.0, %v2766
        %2768 = vmatmul.f32.gmra.mxu0 %v2641
        %v2769 = vpop.f32.mrf.mxu0
        %v2770 = vadd.f32 0.0, %v2769
        %2771 = vmatmul.f32.gmra.mxu0 %v2656
        %v2772 = vpop.f32.mrf.mxu0
        %v2773 = vadd.f32 0.0, %v2772
        %2774 = vmatmul.f32.gmra.mxu0 %v2671
        %v2775 = vpop.f32.mrf.mxu0
        %v2776 = vadd.f32 0.0, %v2775
        %2777 = vmatmul.f32.gmra.mxu0 %v2686
        %v2778 = vpop.f32.mrf.mxu0
        %v2779 = vadd.f32 0.0, %v2778
        %2780 = vmatmul.f32.gmra.mxu0 %v2701
        %v2781 = vpop.f32.mrf.mxu0
        %v2782 = vadd.f32 0.0, %v2781
        %2783 = vdwg.mxu0
        %s2784 = scalar_lea.vmem [#allocation2], 64
        %v2785 = vld [vmem:[%s2784] sm:$0xff]
        %v2786 = vld [vmem:[%s2784 + $0x8] sm:$0xff]
        %v2787 = vld [vmem:[%s2784 + $0x10] sm:$0xff]
        %v2788 = vld [vmem:[%s2784 + $0x18] sm:$0xff]
        %2789 = vrot.lane.b32.xlu0 %v1618, 64
        %v2790 = vpop.permute.xlu0 %2789
        %2791 = vrot.lane.b32.xlu0 %v1621, 64
        %v2792 = vpop.permute.xlu0 %2791
        %2793 = vrot.lane.b32.xlu0 %v1624, 64
        %v2794 = vpop.permute.xlu0 %2793
        %2795 = vrot.lane.b32.xlu0 %v1627, 64
        %v2796 = vpop.permute.xlu0 %2795
        %2797 = vrot.lane.b32.xlu0 %v1630, 64
        %v2798 = vpop.permute.xlu0 %2797
        %2799 = vrot.lane.b32.xlu0 %v1633, 64
        %v2800 = vpop.permute.xlu0 %2799
        %2801 = vrot.lane.b32.xlu0 %v1636, 64
        %v2802 = vpop.permute.xlu0 %2801
        %2803 = vrot.lane.b32.xlu0 %v1639, 64
        %v2804 = vpop.permute.xlu0 %2803
        %2805 = vrot.lane.b32.xlu0 %v1642, 64
        %v2806 = vpop.permute.xlu0 %2805
        %2807 = vrot.lane.b32.xlu0 %v1645, 64
        %v2808 = vpop.permute.xlu0 %2807
        %2809 = vrot.lane.b32.xlu0 %v1648, 64
        %v2810 = vpop.permute.xlu0 %2809
        %2811 = vrot.lane.b32.xlu0 %v1651, 64
        %v2812 = vpop.permute.xlu0 %2811
        %2813 = vrot.lane.b32.xlu0 %v1654, 64
        %v2814 = vpop.permute.xlu0 %2813
        %2815 = vrot.lane.b32.xlu0 %v1657, 64
        %v2816 = vpop.permute.xlu0 %2815
        %2817 = vrot.lane.b32.xlu0 %v1660, 64
        %v2818 = vpop.permute.xlu0 %2817
        %2819 = vrot.lane.b32.xlu0 %v1663, 64
        %v2820 = vpop.permute.xlu0 %2819
        %v2821 = vsel %vm1669, %v2790, 0
        %v2823 = vsel %vm1669, %v2792, 0
        %v2825 = vsel %vm1669, %v2794, 0
        %v2827 = vsel %vm1669, %v2796, 0
        %v2829 = vsel %vm1669, %v2798, 0
        %v2831 = vsel %vm1669, %v2800, 0
        %v2833 = vsel %vm1669, %v2802, 0
        %v2835 = vsel %vm1669, %v2804, 0
        %v2837 = vsel %vm1669, %v2806, 0
        %v2839 = vsel %vm1669, %v2808, 0
        %v2841 = vsel %vm1669, %v2810, 0
        %v2843 = vsel %vm1669, %v2812, 0
        %v2845 = vsel %vm1669, %v2814, 0
        %v2847 = vsel %vm1669, %v2816, 0
        %v2849 = vsel %vm1669, %v2818, 0
        %v2851 = vsel %vm1669, %v2820, 0
        %2853 = vmatpush.msra.mxu0 0.0
        %2854 = vmatpush.msra.mxu0 0.0
        %2855 = vmatpush.msra.mxu0 0.0
        %2856 = vmatpush.msra.mxu0 0.0
        %2857 = vmatpush.msra.mxu0 0.0
        %2858 = vmatpush.msra.mxu0 0.0
        %2859 = vmatpush.msra.mxu0 0.0
        %2860 = vmatpush.msra.mxu0 0.0
        %2861 = vmatpush.msra.mxu0 0.0
        %2862 = vmatpush.msra.mxu0 0.0
        %2863 = vmatpush.msra.mxu0 0.0
        %2864 = vmatpush.msra.mxu0 0.0
        %2865 = vmatpush.msra.mxu0 %v2788
        %2866 = vmatpush.msra.mxu0 %v2787
        %2867 = vmatpush.msra.mxu0 %v2786
        %2868 = vmatpush.msra.mxu0 %v2785
        %2869 = vmatmul.f32.gmra.mxu0 %v2821
        %v2870 = vpop.f32.mrf.mxu0
        %v2871 = vadd.f32 0.0, %v2870
        %2872 = vmatmul.f32.gmra.mxu0 %v2823
        %v2873 = vpop.f32.mrf.mxu0
        %v2874 = vadd.f32 0.0, %v2873
        %2875 = vmatmul.f32.gmra.mxu0 %v2825
        %v2876 = vpop.f32.mrf.mxu0
        %v2877 = vadd.f32 0.0, %v2876
        %2878 = vmatmul.f32.gmra.mxu0 %v2827
        %v2879 = vpop.f32.mrf.mxu0
        %v2880 = vadd.f32 0.0, %v2879
        %2881 = vmatmul.f32.gmra.mxu0 %v2829
        %v2882 = vpop.f32.mrf.mxu0
        %v2883 = vadd.f32 0.0, %v2882
        %2884 = vmatmul.f32.gmra.mxu0 %v2831
        %v2885 = vpop.f32.mrf.mxu0
        %v2886 = vadd.f32 0.0, %v2885
        %2887 = vmatmul.f32.gmra.mxu0 %v2833
        %v2888 = vpop.f32.mrf.mxu0
        %v2889 = vadd.f32 0.0, %v2888
        %2890 = vmatmul.f32.gmra.mxu0 %v2835
        %v2891 = vpop.f32.mrf.mxu0
        %v2892 = vadd.f32 0.0, %v2891
        %2893 = vmatmul.f32.gmra.mxu0 %v2837
        %v2894 = vpop.f32.mrf.mxu0
        %v2895 = vadd.f32 0.0, %v2894
        %2896 = vmatmul.f32.gmra.mxu0 %v2839
        %v2897 = vpop.f32.mrf.mxu0
        %v2898 = vadd.f32 0.0, %v2897
        %2899 = vmatmul.f32.gmra.mxu0 %v2841
        %v2900 = vpop.f32.mrf.mxu0
        %v2901 = vadd.f32 0.0, %v2900
        %2902 = vmatmul.f32.gmra.mxu0 %v2843
        %v2903 = vpop.f32.mrf.mxu0
        %v2904 = vadd.f32 0.0, %v2903
        %2905 = vmatmul.f32.gmra.mxu0 %v2845
        %v2906 = vpop.f32.mrf.mxu0
        %v2907 = vadd.f32 0.0, %v2906
        %2908 = vmatmul.f32.gmra.mxu0 %v2847
        %v2909 = vpop.f32.mrf.mxu0
        %v2910 = vadd.f32 0.0, %v2909
        %2911 = vmatmul.f32.gmra.mxu0 %v2849
        %v2912 = vpop.f32.mrf.mxu0
        %v2913 = vadd.f32 0.0, %v2912
        %2914 = vmatmul.f32.gmra.mxu0 %v2851
        %v2915 = vpop.f32.mrf.mxu0
        %v2916 = vadd.f32 0.0, %v2915
        %2917 = vdwg.mxu0
        %2918 = vmax.xlane.f32.xlu0 %v2871
        %v2919 = vpop.xlane.xlu0 %2918
        %2920 = vmax.xlane.f32.xlu0 %v2874
        %v2921 = vpop.xlane.xlu0 %2920
        %2922 = vmax.xlane.f32.xlu0 %v2877
        %v2923 = vpop.xlane.xlu0 %2922
        %2924 = vmax.xlane.f32.xlu0 %v2880
        %v2925 = vpop.xlane.xlu0 %2924
        %2926 = vmax.xlane.f32.xlu0 %v2883
        %v2927 = vpop.xlane.xlu0 %2926
        %2928 = vmax.xlane.f32.xlu0 %v2886
        %v2929 = vpop.xlane.xlu0 %2928
        %2930 = vmax.xlane.f32.xlu0 %v2889
        %v2931 = vpop.xlane.xlu0 %2930
        %2932 = vmax.xlane.f32.xlu0 %v2892
        %v2933 = vpop.xlane.xlu0 %2932
        %2934 = vmax.xlane.f32.xlu0 %v2895
        %v2935 = vpop.xlane.xlu0 %2934
        %2936 = vmax.xlane.f32.xlu0 %v2898
        %v2937 = vpop.xlane.xlu0 %2936
        %2938 = vmax.xlane.f32.xlu0 %v2901
        %v2939 = vpop.xlane.xlu0 %2938
        %2940 = vmax.xlane.f32.xlu0 %v2904
        %v2941 = vpop.xlane.xlu0 %2940
        %2942 = vmax.xlane.f32.xlu0 %v2907
        %v2943 = vpop.xlane.xlu0 %2942
        %2944 = vmax.xlane.f32.xlu0 %v2910
        %v2945 = vpop.xlane.xlu0 %2944
        %2946 = vmax.xlane.f32.xlu0 %v2913
        %v2947 = vpop.xlane.xlu0 %2946
        %2948 = vmax.xlane.f32.xlu0 %v2916
        %v2949 = vpop.xlane.xlu0 %2948
        %v2950 = vsub.f32 %v2871, %v2919
        %v2951 = vsub.f32 %v2874, %v2921
        %v2952 = vsub.f32 %v2877, %v2923
        %v2953 = vsub.f32 %v2880, %v2925
        %v2954 = vsub.f32 %v2883, %v2927
        %v2955 = vsub.f32 %v2886, %v2929
        %v2956 = vsub.f32 %v2889, %v2931
        %v2957 = vsub.f32 %v2892, %v2933
        %v2958 = vsub.f32 %v2895, %v2935
        %v2959 = vsub.f32 %v2898, %v2937
        %v2960 = vsub.f32 %v2901, %v2939
        %v2961 = vsub.f32 %v2904, %v2941
        %v2962 = vsub.f32 %v2907, %v2943
        %v2963 = vsub.f32 %v2910, %v2945
        %v2964 = vsub.f32 %v2913, %v2947
        %v2965 = vsub.f32 %v2916, %v2949
        %v2966 = vmul.f32 %v2950, 1.442695
        %v2967 = vpow.pop %v2966
        %v2968 = vmul.f32 %v2951, 1.442695
        %v2969 = vpow.pop %v2968
        %v2970 = vmul.f32 %v2952, 1.442695
        %v2971 = vpow.pop %v2970
        %v2972 = vmul.f32 %v2953, 1.442695
        %v2973 = vpow.pop %v2972
        %v2974 = vmul.f32 %v2954, 1.442695
        %v2975 = vpow.pop %v2974
        %v2976 = vmul.f32 %v2955, 1.442695
        %v2977 = vpow.pop %v2976
        %v2978 = vmul.f32 %v2956, 1.442695
        %v2979 = vpow.pop %v2978
        %v2980 = vmul.f32 %v2957, 1.442695
        %v2981 = vpow.pop %v2980
        %v2982 = vmul.f32 %v2958, 1.442695
        %v2983 = vpow.pop %v2982
        %v2984 = vmul.f32 %v2959, 1.442695
        %v2985 = vpow.pop %v2984
        %v2986 = vmul.f32 %v2960, 1.442695
        %v2987 = vpow.pop %v2986
        %v2988 = vmul.f32 %v2961, 1.442695
        %v2989 = vpow.pop %v2988
        %v2990 = vmul.f32 %v2962, 1.442695
        %v2991 = vpow.pop %v2990
        %v2992 = vmul.f32 %v2963, 1.442695
        %v2993 = vpow.pop %v2992
        %v2994 = vmul.f32 %v2964, 1.442695
        %v2995 = vpow.pop %v2994
        %v2996 = vmul.f32 %v2965, 1.442695
        %v2997 = vpow.pop %v2996
        %2998 = vadd.xlane.f32.xlu0 %v2967
        %v2999 = vpop.xlane.xlu0 %2998
        %3000 = vadd.xlane.f32.xlu0 %v2969
        %v3001 = vpop.xlane.xlu0 %3000
        %3002 = vadd.xlane.f32.xlu0 %v2971
        %v3003 = vpop.xlane.xlu0 %3002
        %3004 = vadd.xlane.f32.xlu0 %v2973
        %v3005 = vpop.xlane.xlu0 %3004
        %3006 = vadd.xlane.f32.xlu0 %v2975
        %v3007 = vpop.xlane.xlu0 %3006
        %3008 = vadd.xlane.f32.xlu0 %v2977
        %v3009 = vpop.xlane.xlu0 %3008
        %3010 = vadd.xlane.f32.xlu0 %v2979
        %v3011 = vpop.xlane.xlu0 %3010
        %3012 = vadd.xlane.f32.xlu0 %v2981
        %v3013 = vpop.xlane.xlu0 %3012
        %3014 = vadd.xlane.f32.xlu0 %v2983
        %v3015 = vpop.xlane.xlu0 %3014
        %3016 = vadd.xlane.f32.xlu0 %v2985
        %v3017 = vpop.xlane.xlu0 %3016
        %3018 = vadd.xlane.f32.xlu0 %v2987
        %v3019 = vpop.xlane.xlu0 %3018
        %3020 = vadd.xlane.f32.xlu0 %v2989
        %v3021 = vpop.xlane.xlu0 %3020
        %3022 = vadd.xlane.f32.xlu0 %v2991
        %v3023 = vpop.xlane.xlu0 %3022
        %3024 = vadd.xlane.f32.xlu0 %v2993
        %v3025 = vpop.xlane.xlu0 %3024
        %3026 = vadd.xlane.f32.xlu0 %v2995
        %v3027 = vpop.xlane.xlu0 %3026
        %3028 = vadd.xlane.f32.xlu0 %v2997
        %v3029 = vpop.xlane.xlu0 %3028
        %v3030 = vrcp.pop %v2999
        %v3031 = vmul.f32 %v2999, %v3030
        %v3032 = vsub.f32 1.0, %v3031
        %v3033 = vmul.f32 %v3030, %v3032
        %v3034 = vadd.f32 %v3030, %v3033
        %vm3035 = vweird.f32 %v2999
        %vm3036 = vweird.f32 %v3030
        %vm3037 = vmor %vm3035, %vm3036
        %v3038 = vsel %vm3037, %v3030, %v3034
        %v3039 = vand.u32 2147483647, %v2999
        %vm3040 = vcmp.eq.f32.partialorder %v3039, 8.507059e+37
        %v3041 = vand.u32 %v2999, 2147483648
        %v3042 = vor.u32 1.1754944e-38, %v3041
        %v3043 = vsel %vm3040, %v3042, %v3038
        %v3044 = vmul.f32 %v2967, %v3043
        %v3045 = vrcp.pop %v3001
        %v3046 = vmul.f32 %v3001, %v3045
        %v3047 = vsub.f32 1.0, %v3046
        %v3048 = vmul.f32 %v3045, %v3047
        %v3049 = vadd.f32 %v3045, %v3048
        %vm3050 = vweird.f32 %v3001
        %vm3051 = vweird.f32 %v3045
        %vm3052 = vmor %vm3050, %vm3051
        %v3053 = vsel %vm3052, %v3045, %v3049
        %v3054 = vand.u32 2147483647, %v3001
        %vm3055 = vcmp.eq.f32.partialorder %v3054, 8.507059e+37
        %v3056 = vand.u32 %v3001, 2147483648
        %v3057 = vor.u32 1.1754944e-38, %v3056
        %v3058 = vsel %vm3055, %v3057, %v3053
        %v3059 = vmul.f32 %v2969, %v3058
        %v3060 = vrcp.pop %v3003
        %v3061 = vmul.f32 %v3003, %v3060
        %v3062 = vsub.f32 1.0, %v3061
        %v3063 = vmul.f32 %v3060, %v3062
        %v3064 = vadd.f32 %v3060, %v3063
        %vm3065 = vweird.f32 %v3003
        %vm3066 = vweird.f32 %v3060
        %vm3067 = vmor %vm3065, %vm3066
        %v3068 = vsel %vm3067, %v3060, %v3064
        %v3069 = vand.u32 2147483647, %v3003
        %vm3070 = vcmp.eq.f32.partialorder %v3069, 8.507059e+37
        %v3071 = vand.u32 %v3003, 2147483648
        %v3072 = vor.u32 1.1754944e-38, %v3071
        %v3073 = vsel %vm3070, %v3072, %v3068
        %v3074 = vmul.f32 %v2971, %v3073
        %v3075 = vrcp.pop %v3005
        %v3076 = vmul.f32 %v3005, %v3075
        %v3077 = vsub.f32 1.0, %v3076
        %v3078 = vmul.f32 %v3075, %v3077
        %v3079 = vadd.f32 %v3075, %v3078
        %vm3080 = vweird.f32 %v3005
        %vm3081 = vweird.f32 %v3075
        %vm3082 = vmor %vm3080, %vm3081
        %v3083 = vsel %vm3082, %v3075, %v3079
        %v3084 = vand.u32 2147483647, %v3005
        %vm3085 = vcmp.eq.f32.partialorder %v3084, 8.507059e+37
        %v3086 = vand.u32 %v3005, 2147483648
        %v3087 = vor.u32 1.1754944e-38, %v3086
        %v3088 = vsel %vm3085, %v3087, %v3083
        %v3089 = vmul.f32 %v2973, %v3088
        %v3090 = vrcp.pop %v3007
        %v3091 = vmul.f32 %v3007, %v3090
        %v3092 = vsub.f32 1.0, %v3091
        %v3093 = vmul.f32 %v3090, %v3092
        %v3094 = vadd.f32 %v3090, %v3093
        %vm3095 = vweird.f32 %v3007
        %vm3096 = vweird.f32 %v3090
        %vm3097 = vmor %vm3095, %vm3096
        %v3098 = vsel %vm3097, %v3090, %v3094
        %v3099 = vand.u32 2147483647, %v3007
        %vm3100 = vcmp.eq.f32.partialorder %v3099, 8.507059e+37
        %v3101 = vand.u32 %v3007, 2147483648
        %v3102 = vor.u32 1.1754944e-38, %v3101
        %v3103 = vsel %vm3100, %v3102, %v3098
        %v3104 = vmul.f32 %v2975, %v3103
        %v3105 = vrcp.pop %v3009
        %v3106 = vmul.f32 %v3009, %v3105
        %v3107 = vsub.f32 1.0, %v3106
        %v3108 = vmul.f32 %v3105, %v3107
        %v3109 = vadd.f32 %v3105, %v3108
        %vm3110 = vweird.f32 %v3009
        %vm3111 = vweird.f32 %v3105
        %vm3112 = vmor %vm3110, %vm3111
        %v3113 = vsel %vm3112, %v3105, %v3109
        %v3114 = vand.u32 2147483647, %v3009
        %vm3115 = vcmp.eq.f32.partialorder %v3114, 8.507059e+37
        %v3116 = vand.u32 %v3009, 2147483648
        %v3117 = vor.u32 1.1754944e-38, %v3116
        %v3118 = vsel %vm3115, %v3117, %v3113
        %v3119 = vmul.f32 %v2977, %v3118
        %v3120 = vrcp.pop %v3011
        %v3121 = vmul.f32 %v3011, %v3120
        %v3122 = vsub.f32 1.0, %v3121
        %v3123 = vmul.f32 %v3120, %v3122
        %v3124 = vadd.f32 %v3120, %v3123
        %vm3125 = vweird.f32 %v3011
        %vm3126 = vweird.f32 %v3120
        %vm3127 = vmor %vm3125, %vm3126
        %v3128 = vsel %vm3127, %v3120, %v3124
        %v3129 = vand.u32 2147483647, %v3011
        %vm3130 = vcmp.eq.f32.partialorder %v3129, 8.507059e+37
        %v3131 = vand.u32 %v3011, 2147483648
        %v3132 = vor.u32 1.1754944e-38, %v3131
        %v3133 = vsel %vm3130, %v3132, %v3128
        %v3134 = vmul.f32 %v2979, %v3133
        %v3135 = vrcp.pop %v3013
        %v3136 = vmul.f32 %v3013, %v3135
        %v3137 = vsub.f32 1.0, %v3136
        %v3138 = vmul.f32 %v3135, %v3137
        %v3139 = vadd.f32 %v3135, %v3138
        %vm3140 = vweird.f32 %v3013
        %vm3141 = vweird.f32 %v3135
        %vm3142 = vmor %vm3140, %vm3141
        %v3143 = vsel %vm3142, %v3135, %v3139
        %v3144 = vand.u32 2147483647, %v3013
        %vm3145 = vcmp.eq.f32.partialorder %v3144, 8.507059e+37
        %v3146 = vand.u32 %v3013, 2147483648
        %v3147 = vor.u32 1.1754944e-38, %v3146
        %v3148 = vsel %vm3145, %v3147, %v3143
        %v3149 = vmul.f32 %v2981, %v3148
        %v3150 = vrcp.pop %v3015
        %v3151 = vmul.f32 %v3015, %v3150
        %v3152 = vsub.f32 1.0, %v3151
        %v3153 = vmul.f32 %v3150, %v3152
        %v3154 = vadd.f32 %v3150, %v3153
        %vm3155 = vweird.f32 %v3015
        %vm3156 = vweird.f32 %v3150
        %vm3157 = vmor %vm3155, %vm3156
        %v3158 = vsel %vm3157, %v3150, %v3154
        %v3159 = vand.u32 2147483647, %v3015
        %vm3160 = vcmp.eq.f32.partialorder %v3159, 8.507059e+37
        %v3161 = vand.u32 %v3015, 2147483648
        %v3162 = vor.u32 1.1754944e-38, %v3161
        %v3163 = vsel %vm3160, %v3162, %v3158
        %v3164 = vmul.f32 %v2983, %v3163
        %v3165 = vrcp.pop %v3017
        %v3166 = vmul.f32 %v3017, %v3165
        %v3167 = vsub.f32 1.0, %v3166
        %v3168 = vmul.f32 %v3165, %v3167
        %v3169 = vadd.f32 %v3165, %v3168
        %vm3170 = vweird.f32 %v3017
        %vm3171 = vweird.f32 %v3165
        %vm3172 = vmor %vm3170, %vm3171
        %v3173 = vsel %vm3172, %v3165, %v3169
        %v3174 = vand.u32 2147483647, %v3017
        %vm3175 = vcmp.eq.f32.partialorder %v3174, 8.507059e+37
        %v3176 = vand.u32 %v3017, 2147483648
        %v3177 = vor.u32 1.1754944e-38, %v3176
        %v3178 = vsel %vm3175, %v3177, %v3173
        %v3179 = vmul.f32 %v2985, %v3178
        %v3180 = vrcp.pop %v3019
        %v3181 = vmul.f32 %v3019, %v3180
        %v3182 = vsub.f32 1.0, %v3181
        %v3183 = vmul.f32 %v3180, %v3182
        %v3184 = vadd.f32 %v3180, %v3183
        %vm3185 = vweird.f32 %v3019
        %vm3186 = vweird.f32 %v3180
        %vm3187 = vmor %vm3185, %vm3186
        %v3188 = vsel %vm3187, %v3180, %v3184
        %v3189 = vand.u32 2147483647, %v3019
        %vm3190 = vcmp.eq.f32.partialorder %v3189, 8.507059e+37
        %v3191 = vand.u32 %v3019, 2147483648
        %v3192 = vor.u32 1.1754944e-38, %v3191
        %v3193 = vsel %vm3190, %v3192, %v3188
        %v3194 = vmul.f32 %v2987, %v3193
        %v3195 = vrcp.pop %v3021
        %v3196 = vmul.f32 %v3021, %v3195
        %v3197 = vsub.f32 1.0, %v3196
        %v3198 = vmul.f32 %v3195, %v3197
        %v3199 = vadd.f32 %v3195, %v3198
        %vm3200 = vweird.f32 %v3021
        %vm3201 = vweird.f32 %v3195
        %vm3202 = vmor %vm3200, %vm3201
        %v3203 = vsel %vm3202, %v3195, %v3199
        %v3204 = vand.u32 2147483647, %v3021
        %vm3205 = vcmp.eq.f32.partialorder %v3204, 8.507059e+37
        %v3206 = vand.u32 %v3021, 2147483648
        %v3207 = vor.u32 1.1754944e-38, %v3206
        %v3208 = vsel %vm3205, %v3207, %v3203
        %v3209 = vmul.f32 %v2989, %v3208
        %v3210 = vrcp.pop %v3023
        %v3211 = vmul.f32 %v3023, %v3210
        %v3212 = vsub.f32 1.0, %v3211
        %v3213 = vmul.f32 %v3210, %v3212
        %v3214 = vadd.f32 %v3210, %v3213
        %vm3215 = vweird.f32 %v3023
        %vm3216 = vweird.f32 %v3210
        %vm3217 = vmor %vm3215, %vm3216
        %v3218 = vsel %vm3217, %v3210, %v3214
        %v3219 = vand.u32 2147483647, %v3023
        %vm3220 = vcmp.eq.f32.partialorder %v3219, 8.507059e+37
        %v3221 = vand.u32 %v3023, 2147483648
        %v3222 = vor.u32 1.1754944e-38, %v3221
        %v3223 = vsel %vm3220, %v3222, %v3218
        %v3224 = vmul.f32 %v2991, %v3223
        %v3225 = vrcp.pop %v3025
        %v3226 = vmul.f32 %v3025, %v3225
        %v3227 = vsub.f32 1.0, %v3226
        %v3228 = vmul.f32 %v3225, %v3227
        %v3229 = vadd.f32 %v3225, %v3228
        %vm3230 = vweird.f32 %v3025
        %vm3231 = vweird.f32 %v3225
        %vm3232 = vmor %vm3230, %vm3231
        %v3233 = vsel %vm3232, %v3225, %v3229
        %v3234 = vand.u32 2147483647, %v3025
        %vm3235 = vcmp.eq.f32.partialorder %v3234, 8.507059e+37
        %v3236 = vand.u32 %v3025, 2147483648
        %v3237 = vor.u32 1.1754944e-38, %v3236
        %v3238 = vsel %vm3235, %v3237, %v3233
        %v3239 = vmul.f32 %v2993, %v3238
        %v3240 = vrcp.pop %v3027
        %v3241 = vmul.f32 %v3027, %v3240
        %v3242 = vsub.f32 1.0, %v3241
        %v3243 = vmul.f32 %v3240, %v3242
        %v3244 = vadd.f32 %v3240, %v3243
        %vm3245 = vweird.f32 %v3027
        %vm3246 = vweird.f32 %v3240
        %vm3247 = vmor %vm3245, %vm3246
        %v3248 = vsel %vm3247, %v3240, %v3244
        %v3249 = vand.u32 2147483647, %v3027
        %vm3250 = vcmp.eq.f32.partialorder %v3249, 8.507059e+37
        %v3251 = vand.u32 %v3027, 2147483648
        %v3252 = vor.u32 1.1754944e-38, %v3251
        %v3253 = vsel %vm3250, %v3252, %v3248
        %v3254 = vmul.f32 %v2995, %v3253
        %v3255 = vrcp.pop %v3029
        %v3256 = vmul.f32 %v3029, %v3255
        %v3257 = vsub.f32 1.0, %v3256
        %v3258 = vmul.f32 %v3255, %v3257
        %v3259 = vadd.f32 %v3255, %v3258
        %vm3260 = vweird.f32 %v3029
        %vm3261 = vweird.f32 %v3255
        %vm3262 = vmor %vm3260, %vm3261
        %v3263 = vsel %vm3262, %v3255, %v3259
        %v3264 = vand.u32 2147483647, %v3029
        %vm3265 = vcmp.eq.f32.partialorder %v3264, 8.507059e+37
        %v3266 = vand.u32 %v3029, 2147483648
        %v3267 = vor.u32 1.1754944e-38, %v3266
        %v3268 = vsel %vm3265, %v3267, %v3263
        %v3269 = vmul.f32 %v2997, %v3268
        %s3270 = scalar_lea.vmem [#allocation3], 256
        %v3271 = vld [vmem:[%s3270] sm:$0xff]
        %v3272 = vld [vmem:[%s3270 + $0x8] sm:$0xff]
        %v3273 = vld [vmem:[%s3270 + $0x10] sm:$0xff]
        %v3274 = vld [vmem:[%s3270 + $0x18] sm:$0xff]
        %v3275 = vld [vmem:[%s3270 + $0x20] sm:$0xff]
        %v3276 = vld [vmem:[%s3270 + $0x28] sm:$0xff]
        %v3277 = vld [vmem:[%s3270 + $0x30] sm:$0xff]
        %v3278 = vld [vmem:[%s3270 + $0x38] sm:$0xff]
        %v3279 = vld [vmem:[%s3270 + $0x40] sm:$0xff]
        %v3280 = vld [vmem:[%s3270 + $0x48] sm:$0xff]
        %v3281 = vld [vmem:[%s3270 + $0x50] sm:$0xff]
        %v3282 = vld [vmem:[%s3270 + $0x58] sm:$0xff]
        %v3283 = vld [vmem:[%s3270 + $0x60] sm:$0xff]
        %v3284 = vld [vmem:[%s3270 + $0x68] sm:$0xff]
        %v3285 = vld [vmem:[%s3270 + $0x70] sm:$0xff]
        %v3286 = vld [vmem:[%s3270 + $0x78] sm:$0xff]
        %3287 = vmatpush.msra.mxu0 %v3286
        %3288 = vmatpush.msra.mxu0 %v3285
        %3289 = vmatpush.msra.mxu0 %v3284
        %3290 = vmatpush.msra.mxu0 %v3283
        %3291 = vmatpush.msra.mxu0 %v3282
        %3292 = vmatpush.msra.mxu0 %v3281
        %3293 = vmatpush.msra.mxu0 %v3280
        %3294 = vmatpush.msra.mxu0 %v3279
        %3295 = vmatpush.msra.mxu0 %v3278
        %3296 = vmatpush.msra.mxu0 %v3277
        %3297 = vmatpush.msra.mxu0 %v3276
        %3298 = vmatpush.msra.mxu0 %v3275
        %3299 = vmatpush.msra.mxu0 %v3274
        %3300 = vmatpush.msra.mxu0 %v3273
        %3301 = vmatpush.msra.mxu0 %v3272
        %3302 = vmatpush.msra.mxu0 %v3271
        %3303 = vmatmul.f32.gmra.mxu0 %v3044
        %v3304 = vpop.f32.mrf.mxu0
        %v3305 = vadd.f32 0.0, %v3304
        %3306 = vmatmul.f32.gmra.mxu0 %v3059
        %v3307 = vpop.f32.mrf.mxu0
        %v3308 = vadd.f32 0.0, %v3307
        %3309 = vmatmul.f32.gmra.mxu0 %v3074
        %v3310 = vpop.f32.mrf.mxu0
        %v3311 = vadd.f32 0.0, %v3310
        %3312 = vmatmul.f32.gmra.mxu0 %v3089
        %v3313 = vpop.f32.mrf.mxu0
        %v3314 = vadd.f32 0.0, %v3313
        %3315 = vmatmul.f32.gmra.mxu0 %v3104
        %v3316 = vpop.f32.mrf.mxu0
        %v3317 = vadd.f32 0.0, %v3316
        %3318 = vmatmul.f32.gmra.mxu0 %v3119
        %v3319 = vpop.f32.mrf.mxu0
        %v3320 = vadd.f32 0.0, %v3319
        %3321 = vmatmul.f32.gmra.mxu0 %v3134
        %v3322 = vpop.f32.mrf.mxu0
        %v3323 = vadd.f32 0.0, %v3322
        %3324 = vmatmul.f32.gmra.mxu0 %v3149
        %v3325 = vpop.f32.mrf.mxu0
        %v3326 = vadd.f32 0.0, %v3325
        %3327 = vmatmul.f32.gmra.mxu0 %v3164
        %v3328 = vpop.f32.mrf.mxu0
        %v3329 = vadd.f32 0.0, %v3328
        %3330 = vmatmul.f32.gmra.mxu0 %v3179
        %v3331 = vpop.f32.mrf.mxu0
        %v3332 = vadd.f32 0.0, %v3331
        %3333 = vmatmul.f32.gmra.mxu0 %v3194
        %v3334 = vpop.f32.mrf.mxu0
        %v3335 = vadd.f32 0.0, %v3334
        %3336 = vmatmul.f32.gmra.mxu0 %v3209
        %v3337 = vpop.f32.mrf.mxu0
        %v3338 = vadd.f32 0.0, %v3337
        %3339 = vmatmul.f32.gmra.mxu0 %v3224
        %v3340 = vpop.f32.mrf.mxu0
        %v3341 = vadd.f32 0.0, %v3340
        %3342 = vmatmul.f32.gmra.mxu0 %v3239
        %v3343 = vpop.f32.mrf.mxu0
        %v3344 = vadd.f32 0.0, %v3343
        %3345 = vmatmul.f32.gmra.mxu0 %v3254
        %v3346 = vpop.f32.mrf.mxu0
        %v3347 = vadd.f32 0.0, %v3346
        %3348 = vmatmul.f32.gmra.mxu0 %v3269
        %v3349 = vpop.f32.mrf.mxu0
        %v3350 = vadd.f32 0.0, %v3349
        %3351 = vdwg.mxu0
        %s3352 = scalar_lea.vmem [#allocation2], 96
        %v3353 = vld [vmem:[%s3352] sm:$0xff]
        %v3354 = vld [vmem:[%s3352 + $0x8] sm:$0xff]
        %v3355 = vld [vmem:[%s3352 + $0x10] sm:$0xff]
        %v3356 = vld [vmem:[%s3352 + $0x18] sm:$0xff]
        %3357 = vrot.lane.b32.xlu0 %v1618, 32
        %v3358 = vpop.permute.xlu0 %3357
        %3359 = vrot.lane.b32.xlu0 %v1621, 32
        %v3360 = vpop.permute.xlu0 %3359
        %3361 = vrot.lane.b32.xlu0 %v1624, 32
        %v3362 = vpop.permute.xlu0 %3361
        %3363 = vrot.lane.b32.xlu0 %v1627, 32
        %v3364 = vpop.permute.xlu0 %3363
        %3365 = vrot.lane.b32.xlu0 %v1630, 32
        %v3366 = vpop.permute.xlu0 %3365
        %3367 = vrot.lane.b32.xlu0 %v1633, 32
        %v3368 = vpop.permute.xlu0 %3367
        %3369 = vrot.lane.b32.xlu0 %v1636, 32
        %v3370 = vpop.permute.xlu0 %3369
        %3371 = vrot.lane.b32.xlu0 %v1639, 32
        %v3372 = vpop.permute.xlu0 %3371
        %3373 = vrot.lane.b32.xlu0 %v1642, 32
        %v3374 = vpop.permute.xlu0 %3373
        %3375 = vrot.lane.b32.xlu0 %v1645, 32
        %v3376 = vpop.permute.xlu0 %3375
        %3377 = vrot.lane.b32.xlu0 %v1648, 32
        %v3378 = vpop.permute.xlu0 %3377
        %3379 = vrot.lane.b32.xlu0 %v1651, 32
        %v3380 = vpop.permute.xlu0 %3379
        %3381 = vrot.lane.b32.xlu0 %v1654, 32
        %v3382 = vpop.permute.xlu0 %3381
        %3383 = vrot.lane.b32.xlu0 %v1657, 32
        %v3384 = vpop.permute.xlu0 %3383
        %3385 = vrot.lane.b32.xlu0 %v1660, 32
        %v3386 = vpop.permute.xlu0 %3385
        %3387 = vrot.lane.b32.xlu0 %v1663, 32
        %v3388 = vpop.permute.xlu0 %3387
        %v3389 = vsel %vm1669, %v3358, 0
        %v3391 = vsel %vm1669, %v3360, 0
        %v3393 = vsel %vm1669, %v3362, 0
        %v3395 = vsel %vm1669, %v3364, 0
        %v3397 = vsel %vm1669, %v3366, 0
        %v3399 = vsel %vm1669, %v3368, 0
        %v3401 = vsel %vm1669, %v3370, 0
        %v3403 = vsel %vm1669, %v3372, 0
        %v3405 = vsel %vm1669, %v3374, 0
        %v3407 = vsel %vm1669, %v3376, 0
        %v3409 = vsel %vm1669, %v3378, 0
        %v3411 = vsel %vm1669, %v3380, 0
        %v3413 = vsel %vm1669, %v3382, 0
        %v3415 = vsel %vm1669, %v3384, 0
        %v3417 = vsel %vm1669, %v3386, 0
        %v3419 = vsel %vm1669, %v3388, 0
        %3421 = vmatpush.msra.mxu0 0.0
        %3422 = vmatpush.msra.mxu0 0.0
        %3423 = vmatpush.msra.mxu0 0.0
        %3424 = vmatpush.msra.mxu0 0.0
        %3425 = vmatpush.msra.mxu0 0.0
        %3426 = vmatpush.msra.mxu0 0.0
        %3427 = vmatpush.msra.mxu0 0.0
        %3428 = vmatpush.msra.mxu0 0.0
        %3429 = vmatpush.msra.mxu0 0.0
        %3430 = vmatpush.msra.mxu0 0.0
        %3431 = vmatpush.msra.mxu0 0.0
        %3432 = vmatpush.msra.mxu0 0.0
        %3433 = vmatpush.msra.mxu0 %v3356
        %3434 = vmatpush.msra.mxu0 %v3355
        %3435 = vmatpush.msra.mxu0 %v3354
        %3436 = vmatpush.msra.mxu0 %v3353
        %3437 = vmatmul.f32.gmra.mxu0 %v3389
        %v3438 = vpop.f32.mrf.mxu0
        %v3439 = vadd.f32 0.0, %v3438
        %3440 = vmatmul.f32.gmra.mxu0 %v3391
        %v3441 = vpop.f32.mrf.mxu0
        %v3442 = vadd.f32 0.0, %v3441
        %3443 = vmatmul.f32.gmra.mxu0 %v3393
        %v3444 = vpop.f32.mrf.mxu0
        %v3445 = vadd.f32 0.0, %v3444
        %3446 = vmatmul.f32.gmra.mxu0 %v3395
        %v3447 = vpop.f32.mrf.mxu0
        %v3448 = vadd.f32 0.0, %v3447
        %3449 = vmatmul.f32.gmra.mxu0 %v3397
        %v3450 = vpop.f32.mrf.mxu0
        %v3451 = vadd.f32 0.0, %v3450
        %3452 = vmatmul.f32.gmra.mxu0 %v3399
        %v3453 = vpop.f32.mrf.mxu0
        %v3454 = vadd.f32 0.0, %v3453
        %3455 = vmatmul.f32.gmra.mxu0 %v3401
        %v3456 = vpop.f32.mrf.mxu0
        %v3457 = vadd.f32 0.0, %v3456
        %3458 = vmatmul.f32.gmra.mxu0 %v3403
        %v3459 = vpop.f32.mrf.mxu0
        %v3460 = vadd.f32 0.0, %v3459
        %3461 = vmatmul.f32.gmra.mxu0 %v3405
        %v3462 = vpop.f32.mrf.mxu0
        %v3463 = vadd.f32 0.0, %v3462
        %3464 = vmatmul.f32.gmra.mxu0 %v3407
        %v3465 = vpop.f32.mrf.mxu0
        %v3466 = vadd.f32 0.0, %v3465
        %3467 = vmatmul.f32.gmra.mxu0 %v3409
        %v3468 = vpop.f32.mrf.mxu0
        %v3469 = vadd.f32 0.0, %v3468
        %3470 = vmatmul.f32.gmra.mxu0 %v3411
        %v3471 = vpop.f32.mrf.mxu0
        %v3472 = vadd.f32 0.0, %v3471
        %3473 = vmatmul.f32.gmra.mxu0 %v3413
        %v3474 = vpop.f32.mrf.mxu0
        %v3475 = vadd.f32 0.0, %v3474
        %3476 = vmatmul.f32.gmra.mxu0 %v3415
        %v3477 = vpop.f32.mrf.mxu0
        %v3478 = vadd.f32 0.0, %v3477
        %3479 = vmatmul.f32.gmra.mxu0 %v3417
        %v3480 = vpop.f32.mrf.mxu0
        %v3481 = vadd.f32 0.0, %v3480
        %3482 = vmatmul.f32.gmra.mxu0 %v3419
        %v3483 = vpop.f32.mrf.mxu0
        %v3484 = vadd.f32 0.0, %v3483
        %3485 = vdwg.mxu0
        %3486 = vmax.xlane.f32.xlu0 %v3439
        %v3487 = vpop.xlane.xlu0 %3486
        %3488 = vmax.xlane.f32.xlu0 %v3442
        %v3489 = vpop.xlane.xlu0 %3488
        %3490 = vmax.xlane.f32.xlu0 %v3445
        %v3491 = vpop.xlane.xlu0 %3490
        %3492 = vmax.xlane.f32.xlu0 %v3448
        %v3493 = vpop.xlane.xlu0 %3492
        %3494 = vmax.xlane.f32.xlu0 %v3451
        %v3495 = vpop.xlane.xlu0 %3494
        %3496 = vmax.xlane.f32.xlu0 %v3454
        %v3497 = vpop.xlane.xlu0 %3496
        %3498 = vmax.xlane.f32.xlu0 %v3457
        %v3499 = vpop.xlane.xlu0 %3498
        %3500 = vmax.xlane.f32.xlu0 %v3460
        %v3501 = vpop.xlane.xlu0 %3500
        %3502 = vmax.xlane.f32.xlu0 %v3463
        %v3503 = vpop.xlane.xlu0 %3502
        %3504 = vmax.xlane.f32.xlu0 %v3466
        %v3505 = vpop.xlane.xlu0 %3504
        %3506 = vmax.xlane.f32.xlu0 %v3469
        %v3507 = vpop.xlane.xlu0 %3506
        %3508 = vmax.xlane.f32.xlu0 %v3472
        %v3509 = vpop.xlane.xlu0 %3508
        %3510 = vmax.xlane.f32.xlu0 %v3475
        %v3511 = vpop.xlane.xlu0 %3510
        %3512 = vmax.xlane.f32.xlu0 %v3478
        %v3513 = vpop.xlane.xlu0 %3512
        %3514 = vmax.xlane.f32.xlu0 %v3481
        %v3515 = vpop.xlane.xlu0 %3514
        %3516 = vmax.xlane.f32.xlu0 %v3484
        %v3517 = vpop.xlane.xlu0 %3516
        %v3518 = vsub.f32 %v3439, %v3487
        %v3519 = vsub.f32 %v3442, %v3489
        %v3520 = vsub.f32 %v3445, %v3491
        %v3521 = vsub.f32 %v3448, %v3493
        %v3522 = vsub.f32 %v3451, %v3495
        %v3523 = vsub.f32 %v3454, %v3497
        %v3524 = vsub.f32 %v3457, %v3499
        %v3525 = vsub.f32 %v3460, %v3501
        %v3526 = vsub.f32 %v3463, %v3503
        %v3527 = vsub.f32 %v3466, %v3505
        %v3528 = vsub.f32 %v3469, %v3507
        %v3529 = vsub.f32 %v3472, %v3509
        %v3530 = vsub.f32 %v3475, %v3511
        %v3531 = vsub.f32 %v3478, %v3513
        %v3532 = vsub.f32 %v3481, %v3515
        %v3533 = vsub.f32 %v3484, %v3517
        %v3534 = vmul.f32 %v3518, 1.442695
        %v3535 = vpow.pop %v3534
        %v3536 = vmul.f32 %v3519, 1.442695
        %v3537 = vpow.pop %v3536
        %v3538 = vmul.f32 %v3520, 1.442695
        %v3539 = vpow.pop %v3538
        %v3540 = vmul.f32 %v3521, 1.442695
        %v3541 = vpow.pop %v3540
        %v3542 = vmul.f32 %v3522, 1.442695
        %v3543 = vpow.pop %v3542
        %v3544 = vmul.f32 %v3523, 1.442695
        %v3545 = vpow.pop %v3544
        %v3546 = vmul.f32 %v3524, 1.442695
        %v3547 = vpow.pop %v3546
        %v3548 = vmul.f32 %v3525, 1.442695
        %v3549 = vpow.pop %v3548
        %v3550 = vmul.f32 %v3526, 1.442695
        %v3551 = vpow.pop %v3550
        %v3552 = vmul.f32 %v3527, 1.442695
        %v3553 = vpow.pop %v3552
        %v3554 = vmul.f32 %v3528, 1.442695
        %v3555 = vpow.pop %v3554
        %v3556 = vmul.f32 %v3529, 1.442695
        %v3557 = vpow.pop %v3556
        %v3558 = vmul.f32 %v3530, 1.442695
        %v3559 = vpow.pop %v3558
        %v3560 = vmul.f32 %v3531, 1.442695
        %v3561 = vpow.pop %v3560
        %v3562 = vmul.f32 %v3532, 1.442695
        %v3563 = vpow.pop %v3562
        %v3564 = vmul.f32 %v3533, 1.442695
        %v3565 = vpow.pop %v3564
        %3566 = vadd.xlane.f32.xlu0 %v3535
        %v3567 = vpop.xlane.xlu0 %3566
        %3568 = vadd.xlane.f32.xlu0 %v3537
        %v3569 = vpop.xlane.xlu0 %3568
        %3570 = vadd.xlane.f32.xlu0 %v3539
        %v3571 = vpop.xlane.xlu0 %3570
        %3572 = vadd.xlane.f32.xlu0 %v3541
        %v3573 = vpop.xlane.xlu0 %3572
        %3574 = vadd.xlane.f32.xlu0 %v3543
        %v3575 = vpop.xlane.xlu0 %3574
        %3576 = vadd.xlane.f32.xlu0 %v3545
        %v3577 = vpop.xlane.xlu0 %3576
        %3578 = vadd.xlane.f32.xlu0 %v3547
        %v3579 = vpop.xlane.xlu0 %3578
        %3580 = vadd.xlane.f32.xlu0 %v3549
        %v3581 = vpop.xlane.xlu0 %3580
        %3582 = vadd.xlane.f32.xlu0 %v3551
        %v3583 = vpop.xlane.xlu0 %3582
        %3584 = vadd.xlane.f32.xlu0 %v3553
        %v3585 = vpop.xlane.xlu0 %3584
        %3586 = vadd.xlane.f32.xlu0 %v3555
        %v3587 = vpop.xlane.xlu0 %3586
        %3588 = vadd.xlane.f32.xlu0 %v3557
        %v3589 = vpop.xlane.xlu0 %3588
        %3590 = vadd.xlane.f32.xlu0 %v3559
        %v3591 = vpop.xlane.xlu0 %3590
        %3592 = vadd.xlane.f32.xlu0 %v3561
        %v3593 = vpop.xlane.xlu0 %3592
        %3594 = vadd.xlane.f32.xlu0 %v3563
        %v3595 = vpop.xlane.xlu0 %3594
        %3596 = vadd.xlane.f32.xlu0 %v3565
        %v3597 = vpop.xlane.xlu0 %3596
        %v3598 = vrcp.pop %v3567
        %v3599 = vmul.f32 %v3567, %v3598
        %v3600 = vsub.f32 1.0, %v3599
        %v3601 = vmul.f32 %v3598, %v3600
        %v3602 = vadd.f32 %v3598, %v3601
        %vm3603 = vweird.f32 %v3567
        %vm3604 = vweird.f32 %v3598
        %vm3605 = vmor %vm3603, %vm3604
        %v3606 = vsel %vm3605, %v3598, %v3602
        %v3607 = vand.u32 2147483647, %v3567
        %vm3608 = vcmp.eq.f32.partialorder %v3607, 8.507059e+37
        %v3609 = vand.u32 %v3567, 2147483648
        %v3610 = vor.u32 1.1754944e-38, %v3609
        %v3611 = vsel %vm3608, %v3610, %v3606
        %v3612 = vmul.f32 %v3535, %v3611
        %v3613 = vrcp.pop %v3569
        %v3614 = vmul.f32 %v3569, %v3613
        %v3615 = vsub.f32 1.0, %v3614
        %v3616 = vmul.f32 %v3613, %v3615
        %v3617 = vadd.f32 %v3613, %v3616
        %vm3618 = vweird.f32 %v3569
        %vm3619 = vweird.f32 %v3613
        %vm3620 = vmor %vm3618, %vm3619
        %v3621 = vsel %vm3620, %v3613, %v3617
        %v3622 = vand.u32 2147483647, %v3569
        %vm3623 = vcmp.eq.f32.partialorder %v3622, 8.507059e+37
        %v3624 = vand.u32 %v3569, 2147483648
        %v3625 = vor.u32 1.1754944e-38, %v3624
        %v3626 = vsel %vm3623, %v3625, %v3621
        %v3627 = vmul.f32 %v3537, %v3626
        %v3628 = vrcp.pop %v3571
        %v3629 = vmul.f32 %v3571, %v3628
        %v3630 = vsub.f32 1.0, %v3629
        %v3631 = vmul.f32 %v3628, %v3630
        %v3632 = vadd.f32 %v3628, %v3631
        %vm3633 = vweird.f32 %v3571
        %vm3634 = vweird.f32 %v3628
        %vm3635 = vmor %vm3633, %vm3634
        %v3636 = vsel %vm3635, %v3628, %v3632
        %v3637 = vand.u32 2147483647, %v3571
        %vm3638 = vcmp.eq.f32.partialorder %v3637, 8.507059e+37
        %v3639 = vand.u32 %v3571, 2147483648
        %v3640 = vor.u32 1.1754944e-38, %v3639
        %v3641 = vsel %vm3638, %v3640, %v3636
        %v3642 = vmul.f32 %v3539, %v3641
        %v3643 = vrcp.pop %v3573
        %v3644 = vmul.f32 %v3573, %v3643
        %v3645 = vsub.f32 1.0, %v3644
        %v3646 = vmul.f32 %v3643, %v3645
        %v3647 = vadd.f32 %v3643, %v3646
        %vm3648 = vweird.f32 %v3573
        %vm3649 = vweird.f32 %v3643
        %vm3650 = vmor %vm3648, %vm3649
        %v3651 = vsel %vm3650, %v3643, %v3647
        %v3652 = vand.u32 2147483647, %v3573
        %vm3653 = vcmp.eq.f32.partialorder %v3652, 8.507059e+37
        %v3654 = vand.u32 %v3573, 2147483648
        %v3655 = vor.u32 1.1754944e-38, %v3654
        %v3656 = vsel %vm3653, %v3655, %v3651
        %v3657 = vmul.f32 %v3541, %v3656
        %v3658 = vrcp.pop %v3575
        %v3659 = vmul.f32 %v3575, %v3658
        %v3660 = vsub.f32 1.0, %v3659
        %v3661 = vmul.f32 %v3658, %v3660
        %v3662 = vadd.f32 %v3658, %v3661
        %vm3663 = vweird.f32 %v3575
        %vm3664 = vweird.f32 %v3658
        %vm3665 = vmor %vm3663, %vm3664
        %v3666 = vsel %vm3665, %v3658, %v3662
        %v3667 = vand.u32 2147483647, %v3575
        %vm3668 = vcmp.eq.f32.partialorder %v3667, 8.507059e+37
        %v3669 = vand.u32 %v3575, 2147483648
        %v3670 = vor.u32 1.1754944e-38, %v3669
        %v3671 = vsel %vm3668, %v3670, %v3666
        %v3672 = vmul.f32 %v3543, %v3671
        %v3673 = vrcp.pop %v3577
        %v3674 = vmul.f32 %v3577, %v3673
        %v3675 = vsub.f32 1.0, %v3674
        %v3676 = vmul.f32 %v3673, %v3675
        %v3677 = vadd.f32 %v3673, %v3676
        %vm3678 = vweird.f32 %v3577
        %vm3679 = vweird.f32 %v3673
        %vm3680 = vmor %vm3678, %vm3679
        %v3681 = vsel %vm3680, %v3673, %v3677
        %v3682 = vand.u32 2147483647, %v3577
        %vm3683 = vcmp.eq.f32.partialorder %v3682, 8.507059e+37
        %v3684 = vand.u32 %v3577, 2147483648
        %v3685 = vor.u32 1.1754944e-38, %v3684
        %v3686 = vsel %vm3683, %v3685, %v3681
        %v3687 = vmul.f32 %v3545, %v3686
        %v3688 = vrcp.pop %v3579
        %v3689 = vmul.f32 %v3579, %v3688
        %v3690 = vsub.f32 1.0, %v3689
        %v3691 = vmul.f32 %v3688, %v3690
        %v3692 = vadd.f32 %v3688, %v3691
        %vm3693 = vweird.f32 %v3579
        %vm3694 = vweird.f32 %v3688
        %vm3695 = vmor %vm3693, %vm3694
        %v3696 = vsel %vm3695, %v3688, %v3692
        %v3697 = vand.u32 2147483647, %v3579
        %vm3698 = vcmp.eq.f32.partialorder %v3697, 8.507059e+37
        %v3699 = vand.u32 %v3579, 2147483648
        %v3700 = vor.u32 1.1754944e-38, %v3699
        %v3701 = vsel %vm3698, %v3700, %v3696
        %v3702 = vmul.f32 %v3547, %v3701
        %v3703 = vrcp.pop %v3581
        %v3704 = vmul.f32 %v3581, %v3703
        %v3705 = vsub.f32 1.0, %v3704
        %v3706 = vmul.f32 %v3703, %v3705
        %v3707 = vadd.f32 %v3703, %v3706
        %vm3708 = vweird.f32 %v3581
        %vm3709 = vweird.f32 %v3703
        %vm3710 = vmor %vm3708, %vm3709
        %v3711 = vsel %vm3710, %v3703, %v3707
        %v3712 = vand.u32 2147483647, %v3581
        %vm3713 = vcmp.eq.f32.partialorder %v3712, 8.507059e+37
        %v3714 = vand.u32 %v3581, 2147483648
        %v3715 = vor.u32 1.1754944e-38, %v3714
        %v3716 = vsel %vm3713, %v3715, %v3711
        %v3717 = vmul.f32 %v3549, %v3716
        %v3718 = vrcp.pop %v3583
        %v3719 = vmul.f32 %v3583, %v3718
        %v3720 = vsub.f32 1.0, %v3719
        %v3721 = vmul.f32 %v3718, %v3720
        %v3722 = vadd.f32 %v3718, %v3721
        %vm3723 = vweird.f32 %v3583
        %vm3724 = vweird.f32 %v3718
        %vm3725 = vmor %vm3723, %vm3724
        %v3726 = vsel %vm3725, %v3718, %v3722
        %v3727 = vand.u32 2147483647, %v3583
        %vm3728 = vcmp.eq.f32.partialorder %v3727, 8.507059e+37
        %v3729 = vand.u32 %v3583, 2147483648
        %v3730 = vor.u32 1.1754944e-38, %v3729
        %v3731 = vsel %vm3728, %v3730, %v3726
        %v3732 = vmul.f32 %v3551, %v3731
        %v3733 = vrcp.pop %v3585
        %v3734 = vmul.f32 %v3585, %v3733
        %v3735 = vsub.f32 1.0, %v3734
        %v3736 = vmul.f32 %v3733, %v3735
        %v3737 = vadd.f32 %v3733, %v3736
        %vm3738 = vweird.f32 %v3585
        %vm3739 = vweird.f32 %v3733
        %vm3740 = vmor %vm3738, %vm3739
        %v3741 = vsel %vm3740, %v3733, %v3737
        %v3742 = vand.u32 2147483647, %v3585
        %vm3743 = vcmp.eq.f32.partialorder %v3742, 8.507059e+37
        %v3744 = vand.u32 %v3585, 2147483648
        %v3745 = vor.u32 1.1754944e-38, %v3744
        %v3746 = vsel %vm3743, %v3745, %v3741
        %v3747 = vmul.f32 %v3553, %v3746
        %v3748 = vrcp.pop %v3587
        %v3749 = vmul.f32 %v3587, %v3748
        %v3750 = vsub.f32 1.0, %v3749
        %v3751 = vmul.f32 %v3748, %v3750
        %v3752 = vadd.f32 %v3748, %v3751
        %vm3753 = vweird.f32 %v3587
        %vm3754 = vweird.f32 %v3748
        %vm3755 = vmor %vm3753, %vm3754
        %v3756 = vsel %vm3755, %v3748, %v3752
        %v3757 = vand.u32 2147483647, %v3587
        %vm3758 = vcmp.eq.f32.partialorder %v3757, 8.507059e+37
        %v3759 = vand.u32 %v3587, 2147483648
        %v3760 = vor.u32 1.1754944e-38, %v3759
        %v3761 = vsel %vm3758, %v3760, %v3756
        %v3762 = vmul.f32 %v3555, %v3761
        %v3763 = vrcp.pop %v3589
        %v3764 = vmul.f32 %v3589, %v3763
        %v3765 = vsub.f32 1.0, %v3764
        %v3766 = vmul.f32 %v3763, %v3765
        %v3767 = vadd.f32 %v3763, %v3766
        %vm3768 = vweird.f32 %v3589
        %vm3769 = vweird.f32 %v3763
        %vm3770 = vmor %vm3768, %vm3769
        %v3771 = vsel %vm3770, %v3763, %v3767
        %v3772 = vand.u32 2147483647, %v3589
        %vm3773 = vcmp.eq.f32.partialorder %v3772, 8.507059e+37
        %v3774 = vand.u32 %v3589, 2147483648
        %v3775 = vor.u32 1.1754944e-38, %v3774
        %v3776 = vsel %vm3773, %v3775, %v3771
        %v3777 = vmul.f32 %v3557, %v3776
        %v3778 = vrcp.pop %v3591
        %v3779 = vmul.f32 %v3591, %v3778
        %v3780 = vsub.f32 1.0, %v3779
        %v3781 = vmul.f32 %v3778, %v3780
        %v3782 = vadd.f32 %v3778, %v3781
        %vm3783 = vweird.f32 %v3591
        %vm3784 = vweird.f32 %v3778
        %vm3785 = vmor %vm3783, %vm3784
        %v3786 = vsel %vm3785, %v3778, %v3782
        %v3787 = vand.u32 2147483647, %v3591
        %vm3788 = vcmp.eq.f32.partialorder %v3787, 8.507059e+37
        %v3789 = vand.u32 %v3591, 2147483648
        %v3790 = vor.u32 1.1754944e-38, %v3789
        %v3791 = vsel %vm3788, %v3790, %v3786
        %v3792 = vmul.f32 %v3559, %v3791
        %v3793 = vrcp.pop %v3593
        %v3794 = vmul.f32 %v3593, %v3793
        %v3795 = vsub.f32 1.0, %v3794
        %v3796 = vmul.f32 %v3793, %v3795
        %v3797 = vadd.f32 %v3793, %v3796
        %vm3798 = vweird.f32 %v3593
        %vm3799 = vweird.f32 %v3793
        %vm3800 = vmor %vm3798, %vm3799
        %v3801 = vsel %vm3800, %v3793, %v3797
        %v3802 = vand.u32 2147483647, %v3593
        %vm3803 = vcmp.eq.f32.partialorder %v3802, 8.507059e+37
        %v3804 = vand.u32 %v3593, 2147483648
        %v3805 = vor.u32 1.1754944e-38, %v3804
        %v3806 = vsel %vm3803, %v3805, %v3801
        %v3807 = vmul.f32 %v3561, %v3806
        %v3808 = vrcp.pop %v3595
        %v3809 = vmul.f32 %v3595, %v3808
        %v3810 = vsub.f32 1.0, %v3809
        %v3811 = vmul.f32 %v3808, %v3810
        %v3812 = vadd.f32 %v3808, %v3811
        %vm3813 = vweird.f32 %v3595
        %vm3814 = vweird.f32 %v3808
        %vm3815 = vmor %vm3813, %vm3814
        %v3816 = vsel %vm3815, %v3808, %v3812
        %v3817 = vand.u32 2147483647, %v3595
        %vm3818 = vcmp.eq.f32.partialorder %v3817, 8.507059e+37
        %v3819 = vand.u32 %v3595, 2147483648
        %v3820 = vor.u32 1.1754944e-38, %v3819
        %v3821 = vsel %vm3818, %v3820, %v3816
        %v3822 = vmul.f32 %v3563, %v3821
        %v3823 = vrcp.pop %v3597
        %v3824 = vmul.f32 %v3597, %v3823
        %v3825 = vsub.f32 1.0, %v3824
        %v3826 = vmul.f32 %v3823, %v3825
        %v3827 = vadd.f32 %v3823, %v3826
        %vm3828 = vweird.f32 %v3597
        %vm3829 = vweird.f32 %v3823
        %vm3830 = vmor %vm3828, %vm3829
        %v3831 = vsel %vm3830, %v3823, %v3827
        %v3832 = vand.u32 2147483647, %v3597
        %vm3833 = vcmp.eq.f32.partialorder %v3832, 8.507059e+37
        %v3834 = vand.u32 %v3597, 2147483648
        %v3835 = vor.u32 1.1754944e-38, %v3834
        %v3836 = vsel %vm3833, %v3835, %v3831
        %v3837 = vmul.f32 %v3565, %v3836
        %s3838 = scalar_lea.vmem [#allocation3], 384
        %v3839 = vld [vmem:[%s3838] sm:$0xff]
        %v3840 = vld [vmem:[%s3838 + $0x8] sm:$0xff]
        %v3841 = vld [vmem:[%s3838 + $0x10] sm:$0xff]
        %v3842 = vld [vmem:[%s3838 + $0x18] sm:$0xff]
        %v3843 = vld [vmem:[%s3838 + $0x20] sm:$0xff]
        %v3844 = vld [vmem:[%s3838 + $0x28] sm:$0xff]
        %v3845 = vld [vmem:[%s3838 + $0x30] sm:$0xff]
        %v3846 = vld [vmem:[%s3838 + $0x38] sm:$0xff]
        %v3847 = vld [vmem:[%s3838 + $0x40] sm:$0xff]
        %v3848 = vld [vmem:[%s3838 + $0x48] sm:$0xff]
        %v3849 = vld [vmem:[%s3838 + $0x50] sm:$0xff]
        %v3850 = vld [vmem:[%s3838 + $0x58] sm:$0xff]
        %v3851 = vld [vmem:[%s3838 + $0x60] sm:$0xff]
        %v3852 = vld [vmem:[%s3838 + $0x68] sm:$0xff]
        %v3853 = vld [vmem:[%s3838 + $0x70] sm:$0xff]
        %v3854 = vld [vmem:[%s3838 + $0x78] sm:$0xff]
        %3855 = vmatpush.msra.mxu0 %v3854
        %3856 = vmatpush.msra.mxu0 %v3853
        %3857 = vmatpush.msra.mxu0 %v3852
        %3858 = vmatpush.msra.mxu0 %v3851
        %3859 = vmatpush.msra.mxu0 %v3850
        %3860 = vmatpush.msra.mxu0 %v3849
        %3861 = vmatpush.msra.mxu0 %v3848
        %3862 = vmatpush.msra.mxu0 %v3847
        %3863 = vmatpush.msra.mxu0 %v3846
        %3864 = vmatpush.msra.mxu0 %v3845
        %3865 = vmatpush.msra.mxu0 %v3844
        %3866 = vmatpush.msra.mxu0 %v3843
        %3867 = vmatpush.msra.mxu0 %v3842
        %3868 = vmatpush.msra.mxu0 %v3841
        %3869 = vmatpush.msra.mxu0 %v3840
        %3870 = vmatpush.msra.mxu0 %v3839
        %3871 = vmatmul.f32.gmra.mxu0 %v3612
        %v3872 = vpop.f32.mrf.mxu0
        %v3873 = vadd.f32 0.0, %v3872
        %3874 = vmatmul.f32.gmra.mxu0 %v3627
        %v3875 = vpop.f32.mrf.mxu0
        %v3876 = vadd.f32 0.0, %v3875
        %3877 = vmatmul.f32.gmra.mxu0 %v3642
        %v3878 = vpop.f32.mrf.mxu0
        %v3879 = vadd.f32 0.0, %v3878
        %3880 = vmatmul.f32.gmra.mxu0 %v3657
        %v3881 = vpop.f32.mrf.mxu0
        %v3882 = vadd.f32 0.0, %v3881
        %3883 = vmatmul.f32.gmra.mxu0 %v3672
        %v3884 = vpop.f32.mrf.mxu0
        %v3885 = vadd.f32 0.0, %v3884
        %3886 = vmatmul.f32.gmra.mxu0 %v3687
        %v3887 = vpop.f32.mrf.mxu0
        %v3888 = vadd.f32 0.0, %v3887
        %3889 = vmatmul.f32.gmra.mxu0 %v3702
        %v3890 = vpop.f32.mrf.mxu0
        %v3891 = vadd.f32 0.0, %v3890
        %3892 = vmatmul.f32.gmra.mxu0 %v3717
        %v3893 = vpop.f32.mrf.mxu0
        %v3894 = vadd.f32 0.0, %v3893
        %3895 = vmatmul.f32.gmra.mxu0 %v3732
        %v3896 = vpop.f32.mrf.mxu0
        %v3897 = vadd.f32 0.0, %v3896
        %3898 = vmatmul.f32.gmra.mxu0 %v3747
        %v3899 = vpop.f32.mrf.mxu0
        %v3900 = vadd.f32 0.0, %v3899
        %3901 = vmatmul.f32.gmra.mxu0 %v3762
        %v3902 = vpop.f32.mrf.mxu0
        %v3903 = vadd.f32 0.0, %v3902
        %3904 = vmatmul.f32.gmra.mxu0 %v3777
        %v3905 = vpop.f32.mrf.mxu0
        %v3906 = vadd.f32 0.0, %v3905
        %3907 = vmatmul.f32.gmra.mxu0 %v3792
        %v3908 = vpop.f32.mrf.mxu0
        %v3909 = vadd.f32 0.0, %v3908
        %3910 = vmatmul.f32.gmra.mxu0 %v3807
        %v3911 = vpop.f32.mrf.mxu0
        %v3912 = vadd.f32 0.0, %v3911
        %3913 = vmatmul.f32.gmra.mxu0 %v3822
        %v3914 = vpop.f32.mrf.mxu0
        %v3915 = vadd.f32 0.0, %v3914
        %3916 = vmatmul.f32.gmra.mxu0 %v3837
        %v3917 = vpop.f32.mrf.mxu0
        %v3918 = vadd.f32 0.0, %v3917
        %3919 = vdwg.mxu0
        %3936 = vrot.lane.b32.xlu0 %v2737, 32
        %v3937 = vpop.permute.xlu0 %3936
        %3938 = vrot.lane.b32.xlu0 %v2740, 32
        %v3939 = vpop.permute.xlu0 %3938
        %3940 = vrot.lane.b32.xlu0 %v2743, 32
        %v3941 = vpop.permute.xlu0 %3940
        %3942 = vrot.lane.b32.xlu0 %v2746, 32
        %v3943 = vpop.permute.xlu0 %3942
        %3944 = vrot.lane.b32.xlu0 %v2749, 32
        %v3945 = vpop.permute.xlu0 %3944
        %3946 = vrot.lane.b32.xlu0 %v2752, 32
        %v3947 = vpop.permute.xlu0 %3946
        %3948 = vrot.lane.b32.xlu0 %v2755, 32
        %v3949 = vpop.permute.xlu0 %3948
        %3950 = vrot.lane.b32.xlu0 %v2758, 32
        %v3951 = vpop.permute.xlu0 %3950
        %3952 = vrot.lane.b32.xlu0 %v2761, 32
        %v3953 = vpop.permute.xlu0 %3952
        %3954 = vrot.lane.b32.xlu0 %v2764, 32
        %v3955 = vpop.permute.xlu0 %3954
        %3956 = vrot.lane.b32.xlu0 %v2767, 32
        %v3957 = vpop.permute.xlu0 %3956
        %3958 = vrot.lane.b32.xlu0 %v2770, 32
        %v3959 = vpop.permute.xlu0 %3958
        %3960 = vrot.lane.b32.xlu0 %v2773, 32
        %v3961 = vpop.permute.xlu0 %3960
        %3962 = vrot.lane.b32.xlu0 %v2776, 32
        %v3963 = vpop.permute.xlu0 %3962
        %3964 = vrot.lane.b32.xlu0 %v2779, 32
        %v3965 = vpop.permute.xlu0 %3964
        %3966 = vrot.lane.b32.xlu0 %v2782, 32
        %v3967 = vpop.permute.xlu0 %3966
        %4000 = vrot.lane.b32.xlu0 %v3305, 64
        %v4001 = vpop.permute.xlu0 %4000
        %4002 = vrot.lane.b32.xlu0 %v3308, 64
        %v4003 = vpop.permute.xlu0 %4002
        %4004 = vrot.lane.b32.xlu0 %v3311, 64
        %v4005 = vpop.permute.xlu0 %4004
        %4006 = vrot.lane.b32.xlu0 %v3314, 64
        %v4007 = vpop.permute.xlu0 %4006
        %4008 = vrot.lane.b32.xlu0 %v3317, 64
        %v4009 = vpop.permute.xlu0 %4008
        %4010 = vrot.lane.b32.xlu0 %v3320, 64
        %v4011 = vpop.permute.xlu0 %4010
        %4012 = vrot.lane.b32.xlu0 %v3323, 64
        %v4013 = vpop.permute.xlu0 %4012
        %4014 = vrot.lane.b32.xlu0 %v3326, 64
        %v4015 = vpop.permute.xlu0 %4014
        %4016 = vrot.lane.b32.xlu0 %v3329, 64
        %v4017 = vpop.permute.xlu0 %4016
        %4018 = vrot.lane.b32.xlu0 %v3332, 64
        %v4019 = vpop.permute.xlu0 %4018
        %4020 = vrot.lane.b32.xlu0 %v3335, 64
        %v4021 = vpop.permute.xlu0 %4020
        %4022 = vrot.lane.b32.xlu0 %v3338, 64
        %v4023 = vpop.permute.xlu0 %4022
        %4024 = vrot.lane.b32.xlu0 %v3341, 64
        %v4025 = vpop.permute.xlu0 %4024
        %4026 = vrot.lane.b32.xlu0 %v3344, 64
        %v4027 = vpop.permute.xlu0 %4026
        %4028 = vrot.lane.b32.xlu0 %v3347, 64
        %v4029 = vpop.permute.xlu0 %4028
        %4030 = vrot.lane.b32.xlu0 %v3350, 64
        %v4031 = vpop.permute.xlu0 %4030
        %4064 = vrot.lane.b32.xlu0 %v3873, 96
        %v4065 = vpop.permute.xlu0 %4064
        %4066 = vrot.lane.b32.xlu0 %v3876, 96
        %v4067 = vpop.permute.xlu0 %4066
        %4068 = vrot.lane.b32.xlu0 %v3879, 96
        %v4069 = vpop.permute.xlu0 %4068
        %4070 = vrot.lane.b32.xlu0 %v3882, 96
        %v4071 = vpop.permute.xlu0 %4070
        %4072 = vrot.lane.b32.xlu0 %v3885, 96
        %v4073 = vpop.permute.xlu0 %4072
        %4074 = vrot.lane.b32.xlu0 %v3888, 96
        %v4075 = vpop.permute.xlu0 %4074
        %4076 = vrot.lane.b32.xlu0 %v3891, 96
        %v4077 = vpop.permute.xlu0 %4076
        %4078 = vrot.lane.b32.xlu0 %v3894, 96
        %v4079 = vpop.permute.xlu0 %4078
        %4080 = vrot.lane.b32.xlu0 %v3897, 96
        %v4081 = vpop.permute.xlu0 %4080
        %4082 = vrot.lane.b32.xlu0 %v3900, 96
        %v4083 = vpop.permute.xlu0 %4082
        %4084 = vrot.lane.b32.xlu0 %v3903, 96
        %v4085 = vpop.permute.xlu0 %4084
        %4086 = vrot.lane.b32.xlu0 %v3906, 96
        %v4087 = vpop.permute.xlu0 %4086
        %4088 = vrot.lane.b32.xlu0 %v3909, 96
        %v4089 = vpop.permute.xlu0 %4088
        %4090 = vrot.lane.b32.xlu0 %v3912, 96
        %v4091 = vpop.permute.xlu0 %4090
        %4092 = vrot.lane.b32.xlu0 %v3915, 96
        %v4093 = vpop.permute.xlu0 %4092
        %4094 = vrot.lane.b32.xlu0 %v3918, 96
        %v4095 = vpop.permute.xlu0 %4094
        %v4112 = vsel %vm1669, %v2169, %v3937
        %v4113 = vsel %vm1669, %v2172, %v3939
        %v4114 = vsel %vm1669, %v2175, %v3941
        %v4115 = vsel %vm1669, %v2178, %v3943
        %v4116 = vsel %vm1669, %v2181, %v3945
        %v4117 = vsel %vm1669, %v2184, %v3947
        %v4118 = vsel %vm1669, %v2187, %v3949
        %v4119 = vsel %vm1669, %v2190, %v3951
        %v4120 = vsel %vm1669, %v2193, %v3953
        %v4121 = vsel %vm1669, %v2196, %v3955
        %v4122 = vsel %vm1669, %v2199, %v3957
        %v4123 = vsel %vm1669, %v2202, %v3959
        %v4124 = vsel %vm1669, %v2205, %v3961
        %v4125 = vsel %vm1669, %v2208, %v3963
        %v4126 = vsel %vm1669, %v2211, %v3965
        %v4127 = vsel %vm1669, %v2214, %v3967
        %vm4128 = vcmask 523264
        %v4129 = vsel %vm4128, %v4112, %v4001
        %v4130 = vsel %vm4128, %v4113, %v4003
        %v4131 = vsel %vm4128, %v4114, %v4005
        %v4132 = vsel %vm4128, %v4115, %v4007
        %v4133 = vsel %vm4128, %v4116, %v4009
        %v4134 = vsel %vm4128, %v4117, %v4011
        %v4135 = vsel %vm4128, %v4118, %v4013
        %v4136 = vsel %vm4128, %v4119, %v4015
        %v4137 = vsel %vm4128, %v4120, %v4017
        %v4138 = vsel %vm4128, %v4121, %v4019
        %v4139 = vsel %vm4128, %v4122, %v4021
        %v4140 = vsel %vm4128, %v4123, %v4023
        %v4141 = vsel %vm4128, %v4124, %v4025
        %v4142 = vsel %vm4128, %v4125, %v4027
        %v4143 = vsel %vm4128, %v4126, %v4029
        %v4144 = vsel %vm4128, %v4127, %v4031
        %vm4145 = vcmask 785408
        %v4146 = vsel %vm4145, %v4129, %v4065
        %v4147 = vsel %vm4145, %v4130, %v4067
        %v4148 = vsel %vm4145, %v4131, %v4069
        %v4149 = vsel %vm4145, %v4132, %v4071
        %v4150 = vsel %vm4145, %v4133, %v4073
        %v4151 = vsel %vm4145, %v4134, %v4075
        %v4152 = vsel %vm4145, %v4135, %v4077
        %v4153 = vsel %vm4145, %v4136, %v4079
        %v4154 = vsel %vm4145, %v4137, %v4081
        %v4155 = vsel %vm4145, %v4138, %v4083
        %v4156 = vsel %vm4145, %v4139, %v4085
        %v4157 = vsel %vm4145, %v4140, %v4087
        %v4158 = vsel %vm4145, %v4141, %v4089
        %v4159 = vsel %vm4145, %v4142, %v4091
        %v4160 = vsel %vm4145, %v4143, %v4093
        %v4161 = vsel %vm4145, %v4144, %v4095
        %v4162 = vld [vmem:[#allocation15] sm:$0xff]
        %v4163 = vld [vmem:[#allocation15 + $0x8] sm:$0xff]
        %v4164 = vld [vmem:[#allocation15 + $0x10] sm:$0xff]
        %v4165 = vld [vmem:[#allocation15 + $0x18] sm:$0xff]
        %v4166 = vld [vmem:[#allocation15 + $0x20] sm:$0xff]
        %v4167 = vld [vmem:[#allocation15 + $0x28] sm:$0xff]
        %v4168 = vld [vmem:[#allocation15 + $0x30] sm:$0xff]
        %v4169 = vld [vmem:[#allocation15 + $0x38] sm:$0xff]
        %v4170 = vld [vmem:[#allocation15 + $0x40] sm:$0xff]
        %v4171 = vld [vmem:[#allocation15 + $0x48] sm:$0xff]
        %v4172 = vld [vmem:[#allocation15 + $0x50] sm:$0xff]
        %v4173 = vld [vmem:[#allocation15 + $0x58] sm:$0xff]
        %v4174 = vld [vmem:[#allocation15 + $0x60] sm:$0xff]
        %v4175 = vld [vmem:[#allocation15 + $0x68] sm:$0xff]
        %v4176 = vld [vmem:[#allocation15 + $0x70] sm:$0xff]
        %v4177 = vld [vmem:[#allocation15 + $0x78] sm:$0xff]
        %v4178 = vld [vmem:[%s10] sm:$0x1]
        %v4180 = vperm.slane %v4178, 0
        %4182 = vmatpush.msra.mxu0 %v4177
        %4183 = vmatpush.msra.mxu0 %v4176
        %4184 = vmatpush.msra.mxu0 %v4175
        %4185 = vmatpush.msra.mxu0 %v4174
        %4186 = vmatpush.msra.mxu0 %v4173
        %4187 = vmatpush.msra.mxu0 %v4172
        %4188 = vmatpush.msra.mxu0 %v4171
        %4189 = vmatpush.msra.mxu0 %v4170
        %4190 = vmatpush.msra.mxu0 %v4169
        %4191 = vmatpush.msra.mxu0 %v4168
        %4192 = vmatpush.msra.mxu0 %v4167
        %4193 = vmatpush.msra.mxu0 %v4166
        %4194 = vmatpush.msra.mxu0 %v4165
        %4195 = vmatpush.msra.mxu0 %v4164
        %4196 = vmatpush.msra.mxu0 %v4163
        %4197 = vmatpush.msra.mxu0 %v4162
        %4198 = vmatmul.f32.gmra.mxu0 %v4146
        %v4199 = vpop.f32.mrf.mxu0
        %v4200 = vadd.f32 %v4180, %v4199
        %4201 = vmatmul.f32.gmra.mxu0 %v4147
        %v4202 = vpop.f32.mrf.mxu0
        %v4203 = vadd.f32 %v4180, %v4202
        %4204 = vmatmul.f32.gmra.mxu0 %v4148
        %v4205 = vpop.f32.mrf.mxu0
        %v4206 = vadd.f32 %v4180, %v4205
        %4207 = vmatmul.f32.gmra.mxu0 %v4149
        %v4208 = vpop.f32.mrf.mxu0
        %v4209 = vadd.f32 %v4180, %v4208
        %4210 = vmatmul.f32.gmra.mxu0 %v4150
        %v4211 = vpop.f32.mrf.mxu0
        %v4212 = vadd.f32 %v4180, %v4211
        %4213 = vmatmul.f32.gmra.mxu0 %v4151
        %v4214 = vpop.f32.mrf.mxu0
        %v4215 = vadd.f32 %v4180, %v4214
        %4216 = vmatmul.f32.gmra.mxu0 %v4152
        %v4217 = vpop.f32.mrf.mxu0
        %v4218 = vadd.f32 %v4180, %v4217
        %4219 = vmatmul.f32.gmra.mxu0 %v4153
        %v4220 = vpop.f32.mrf.mxu0
        %v4221 = vadd.f32 %v4180, %v4220
        %4222 = vmatmul.f32.gmra.mxu0 %v4154
        %v4223 = vpop.f32.mrf.mxu0
        %v4224 = vadd.f32 %v4180, %v4223
        %4225 = vmatmul.f32.gmra.mxu0 %v4155
        %v4226 = vpop.f32.mrf.mxu0
        %v4227 = vadd.f32 %v4180, %v4226
        %4228 = vmatmul.f32.gmra.mxu0 %v4156
        %v4229 = vpop.f32.mrf.mxu0
        %v4230 = vadd.f32 %v4180, %v4229
        %4231 = vmatmul.f32.gmra.mxu0 %v4157
        %v4232 = vpop.f32.mrf.mxu0
        %v4233 = vadd.f32 %v4180, %v4232
        %4234 = vmatmul.f32.gmra.mxu0 %v4158
        %v4235 = vpop.f32.mrf.mxu0
        %v4236 = vadd.f32 %v4180, %v4235
        %4237 = vmatmul.f32.gmra.mxu0 %v4159
        %v4238 = vpop.f32.mrf.mxu0
        %v4239 = vadd.f32 %v4180, %v4238
        %4240 = vmatmul.f32.gmra.mxu0 %v4160
        %v4241 = vpop.f32.mrf.mxu0
        %v4242 = vadd.f32 %v4180, %v4241
        %4243 = vmatmul.f32.gmra.mxu0 %v4161
        %v4244 = vpop.f32.mrf.mxu0
        %v4245 = vadd.f32 %v4180, %v4244
        %4246 = vdwg.mxu0
        %v4247 = vadd.f32 %v823, %v4200
        %v4248 = vadd.f32 %v824, %v4203
        %v4249 = vadd.f32 %v825, %v4206
        %v4250 = vadd.f32 %v826, %v4209
        %v4251 = vadd.f32 %v827, %v4212
        %v4252 = vadd.f32 %v828, %v4215
        %v4253 = vadd.f32 %v829, %v4218
        %v4254 = vadd.f32 %v830, %v4221
        %v4255 = vadd.f32 %v831, %v4224
        %v4256 = vadd.f32 %v832, %v4227
        %v4257 = vadd.f32 %v833, %v4230
        %v4258 = vadd.f32 %v834, %v4233
        %v4259 = vadd.f32 %v835, %v4236
        %v4260 = vadd.f32 %v836, %v4239
        %v4261 = vadd.f32 %v837, %v4242
        %v4262 = vadd.f32 %v838, %v4245
        %4263 = vadd.xlane.f32.xlu0 %v4247
        %v4264 = vpop.xlane.xlu0 %4263
        %4265 = vadd.xlane.f32.xlu0 %v4248
        %v4266 = vpop.xlane.xlu0 %4265
        %4267 = vadd.xlane.f32.xlu0 %v4249
        %v4268 = vpop.xlane.xlu0 %4267
        %4269 = vadd.xlane.f32.xlu0 %v4250
        %v4270 = vpop.xlane.xlu0 %4269
        %4271 = vadd.xlane.f32.xlu0 %v4251
        %v4272 = vpop.xlane.xlu0 %4271
        %4273 = vadd.xlane.f32.xlu0 %v4252
        %v4274 = vpop.xlane.xlu0 %4273
        %4275 = vadd.xlane.f32.xlu0 %v4253
        %v4276 = vpop.xlane.xlu0 %4275
        %4277 = vadd.xlane.f32.xlu0 %v4254
        %v4278 = vpop.xlane.xlu0 %4277
        %4279 = vadd.xlane.f32.xlu0 %v4255
        %v4280 = vpop.xlane.xlu0 %4279
        %4281 = vadd.xlane.f32.xlu0 %v4256
        %v4282 = vpop.xlane.xlu0 %4281
        %4283 = vadd.xlane.f32.xlu0 %v4257
        %v4284 = vpop.xlane.xlu0 %4283
        %4285 = vadd.xlane.f32.xlu0 %v4258
        %v4286 = vpop.xlane.xlu0 %4285
        %4287 = vadd.xlane.f32.xlu0 %v4259
        %v4288 = vpop.xlane.xlu0 %4287
        %4289 = vadd.xlane.f32.xlu0 %v4260
        %v4290 = vpop.xlane.xlu0 %4289
        %4291 = vadd.xlane.f32.xlu0 %v4261
        %v4292 = vpop.xlane.xlu0 %4291
        %4293 = vadd.xlane.f32.xlu0 %v4262
        %v4294 = vpop.xlane.xlu0 %4293
        %v4295 = vrcp.pop 128.0
        %v4296 = vmul.f32 128.0, %v4295
        %v4297 = vsub.f32 1.0, %v4296
        %v4298 = vmul.f32 %v4295, %v4297
        %v4299 = vadd.f32 %v4295, %v4298
        %vm4300 = vweird.f32 %v4295
        %v4301 = vsel %vm4300, %v4295, %v4299
        %v4302 = vmul.f32 %v4264, %v4301
        %v4303 = vmul.f32 %v4266, %v4301
        %v4304 = vmul.f32 %v4268, %v4301
        %v4305 = vmul.f32 %v4270, %v4301
        %v4306 = vmul.f32 %v4272, %v4301
        %v4307 = vmul.f32 %v4274, %v4301
        %v4308 = vmul.f32 %v4276, %v4301
        %v4309 = vmul.f32 %v4278, %v4301
        %v4310 = vmul.f32 %v4280, %v4301
        %v4311 = vmul.f32 %v4282, %v4301
        %v4312 = vmul.f32 %v4284, %v4301
        %v4313 = vmul.f32 %v4286, %v4301
        %v4314 = vmul.f32 %v4288, %v4301
        %v4315 = vmul.f32 %v4290, %v4301
        %v4316 = vmul.f32 %v4292, %v4301
        %v4317 = vmul.f32 %v4294, %v4301
        %v4318 = vsub.f32 %v4247, %v4302
        %v4319 = vsub.f32 %v4248, %v4303
        %v4320 = vsub.f32 %v4249, %v4304
        %v4321 = vsub.f32 %v4250, %v4305
        %v4322 = vsub.f32 %v4251, %v4306
        %v4323 = vsub.f32 %v4252, %v4307
        %v4324 = vsub.f32 %v4253, %v4308
        %v4325 = vsub.f32 %v4254, %v4309
        %v4326 = vsub.f32 %v4255, %v4310
        %v4327 = vsub.f32 %v4256, %v4311
        %v4328 = vsub.f32 %v4257, %v4312
        %v4329 = vsub.f32 %v4258, %v4313
        %v4330 = vsub.f32 %v4259, %v4314
        %v4331 = vsub.f32 %v4260, %v4315
        %v4332 = vsub.f32 %v4261, %v4316
        %v4333 = vsub.f32 %v4262, %v4317
        %v4334 = vmul.f32 %v4318, %v4318
        %v4335 = vmul.f32 %v4319, %v4319
        %v4336 = vmul.f32 %v4320, %v4320
        %v4337 = vmul.f32 %v4321, %v4321
        %v4338 = vmul.f32 %v4322, %v4322
        %v4339 = vmul.f32 %v4323, %v4323
        %v4340 = vmul.f32 %v4324, %v4324
        %v4341 = vmul.f32 %v4325, %v4325
        %v4342 = vmul.f32 %v4326, %v4326
        %v4343 = vmul.f32 %v4327, %v4327
        %v4344 = vmul.f32 %v4328, %v4328
        %v4345 = vmul.f32 %v4329, %v4329
        %v4346 = vmul.f32 %v4330, %v4330
        %v4347 = vmul.f32 %v4331, %v4331
        %v4348 = vmul.f32 %v4332, %v4332
        %v4349 = vmul.f32 %v4333, %v4333
        %4350 = vadd.xlane.f32.xlu0 %v4334
        %v4351 = vpop.xlane.xlu0 %4350
        %4352 = vadd.xlane.f32.xlu0 %v4335
        %v4353 = vpop.xlane.xlu0 %4352
        %4354 = vadd.xlane.f32.xlu0 %v4336
        %v4355 = vpop.xlane.xlu0 %4354
        %4356 = vadd.xlane.f32.xlu0 %v4337
        %v4357 = vpop.xlane.xlu0 %4356
        %4358 = vadd.xlane.f32.xlu0 %v4338
        %v4359 = vpop.xlane.xlu0 %4358
        %4360 = vadd.xlane.f32.xlu0 %v4339
        %v4361 = vpop.xlane.xlu0 %4360
        %4362 = vadd.xlane.f32.xlu0 %v4340
        %v4363 = vpop.xlane.xlu0 %4362
        %4364 = vadd.xlane.f32.xlu0 %v4341
        %v4365 = vpop.xlane.xlu0 %4364
        %4366 = vadd.xlane.f32.xlu0 %v4342
        %v4367 = vpop.xlane.xlu0 %4366
        %4368 = vadd.xlane.f32.xlu0 %v4343
        %v4369 = vpop.xlane.xlu0 %4368
        %4370 = vadd.xlane.f32.xlu0 %v4344
        %v4371 = vpop.xlane.xlu0 %4370
        %4372 = vadd.xlane.f32.xlu0 %v4345
        %v4373 = vpop.xlane.xlu0 %4372
        %4374 = vadd.xlane.f32.xlu0 %v4346
        %v4375 = vpop.xlane.xlu0 %4374
        %4376 = vadd.xlane.f32.xlu0 %v4347
        %v4377 = vpop.xlane.xlu0 %4376
        %4378 = vadd.xlane.f32.xlu0 %v4348
        %v4379 = vpop.xlane.xlu0 %4378
        %4380 = vadd.xlane.f32.xlu0 %v4349
        %v4381 = vpop.xlane.xlu0 %4380
        %v4382 = vmul.f32 %v4351, %v4301
        %v4383 = vmul.f32 %v4353, %v4301
        %v4384 = vmul.f32 %v4355, %v4301
        %v4385 = vmul.f32 %v4357, %v4301
        %v4386 = vmul.f32 %v4359, %v4301
        %v4387 = vmul.f32 %v4361, %v4301
        %v4388 = vmul.f32 %v4363, %v4301
        %v4389 = vmul.f32 %v4365, %v4301
        %v4390 = vmul.f32 %v4367, %v4301
        %v4391 = vmul.f32 %v4369, %v4301
        %v4392 = vmul.f32 %v4371, %v4301
        %v4393 = vmul.f32 %v4373, %v4301
        %v4394 = vmul.f32 %v4375, %v4301
        %v4395 = vmul.f32 %v4377, %v4301
        %v4396 = vmul.f32 %v4379, %v4301
        %v4397 = vmul.f32 %v4381, %v4301
        %v4398 = vadd.f32 %v4382, 1e-05
        %v4399 = vadd.f32 %v4383, 1e-05
        %v4400 = vadd.f32 %v4384, 1e-05
        %v4401 = vadd.f32 %v4385, 1e-05
        %v4402 = vadd.f32 %v4386, 1e-05
        %v4403 = vadd.f32 %v4387, 1e-05
        %v4404 = vadd.f32 %v4388, 1e-05
        %v4405 = vadd.f32 %v4389, 1e-05
        %v4406 = vadd.f32 %v4390, 1e-05
        %v4407 = vadd.f32 %v4391, 1e-05
        %v4408 = vadd.f32 %v4392, 1e-05
        %v4409 = vadd.f32 %v4393, 1e-05
        %v4410 = vadd.f32 %v4394, 1e-05
        %v4411 = vadd.f32 %v4395, 1e-05
        %v4412 = vadd.f32 %v4396, 1e-05
        %v4413 = vadd.f32 %v4397, 1e-05
        %v4414 = vrsqrt.pop %v4398
        %v4415 = vmul.f32 %v4414, %v4398
        %v4416 = vmul.f32 %v4415, %v4414
        %v4417 = vmul.f32 0.5, %v4416
        %v4418 = vsub.f32 1.5, %v4417
        %v4419 = vmul.f32 %v4414, %v4418
        %vm4420 = vweird.f32 %v4398
        %vm4421 = vweird.f32 %v4414
        %vm4422 = vmor %vm4420, %vm4421
        %v4423 = vsel %vm4422, %v4414, %v4419
        %v4424 = vrsqrt.pop %v4399
        %v4425 = vmul.f32 %v4424, %v4399
        %v4426 = vmul.f32 %v4425, %v4424
        %v4427 = vmul.f32 0.5, %v4426
        %v4428 = vsub.f32 1.5, %v4427
        %v4429 = vmul.f32 %v4424, %v4428
        %vm4430 = vweird.f32 %v4399
        %vm4431 = vweird.f32 %v4424
        %vm4432 = vmor %vm4430, %vm4431
        %v4433 = vsel %vm4432, %v4424, %v4429
        %v4434 = vrsqrt.pop %v4400
        %v4435 = vmul.f32 %v4434, %v4400
        %v4436 = vmul.f32 %v4435, %v4434
        %v4437 = vmul.f32 0.5, %v4436
        %v4438 = vsub.f32 1.5, %v4437
        %v4439 = vmul.f32 %v4434, %v4438
        %vm4440 = vweird.f32 %v4400
        %vm4441 = vweird.f32 %v4434
        %vm4442 = vmor %vm4440, %vm4441
        %v4443 = vsel %vm4442, %v4434, %v4439
        %v4444 = vrsqrt.pop %v4401
        %v4445 = vmul.f32 %v4444, %v4401
        %v4446 = vmul.f32 %v4445, %v4444
        %v4447 = vmul.f32 0.5, %v4446
        %v4448 = vsub.f32 1.5, %v4447
        %v4449 = vmul.f32 %v4444, %v4448
        %vm4450 = vweird.f32 %v4401
        %vm4451 = vweird.f32 %v4444
        %vm4452 = vmor %vm4450, %vm4451
        %v4453 = vsel %vm4452, %v4444, %v4449
        %v4454 = vrsqrt.pop %v4402
        %v4455 = vmul.f32 %v4454, %v4402
        %v4456 = vmul.f32 %v4455, %v4454
        %v4457 = vmul.f32 0.5, %v4456
        %v4458 = vsub.f32 1.5, %v4457
        %v4459 = vmul.f32 %v4454, %v4458
        %vm4460 = vweird.f32 %v4402
        %vm4461 = vweird.f32 %v4454
        %vm4462 = vmor %vm4460, %vm4461
        %v4463 = vsel %vm4462, %v4454, %v4459
        %v4464 = vrsqrt.pop %v4403
        %v4465 = vmul.f32 %v4464, %v4403
        %v4466 = vmul.f32 %v4465, %v4464
        %v4467 = vmul.f32 0.5, %v4466
        %v4468 = vsub.f32 1.5, %v4467
        %v4469 = vmul.f32 %v4464, %v4468
        %vm4470 = vweird.f32 %v4403
        %vm4471 = vweird.f32 %v4464
        %vm4472 = vmor %vm4470, %vm4471
        %v4473 = vsel %vm4472, %v4464, %v4469
        %v4474 = vrsqrt.pop %v4404
        %v4475 = vmul.f32 %v4474, %v4404
        %v4476 = vmul.f32 %v4475, %v4474
        %v4477 = vmul.f32 0.5, %v4476
        %v4478 = vsub.f32 1.5, %v4477
        %v4479 = vmul.f32 %v4474, %v4478
        %vm4480 = vweird.f32 %v4404
        %vm4481 = vweird.f32 %v4474
        %vm4482 = vmor %vm4480, %vm4481
        %v4483 = vsel %vm4482, %v4474, %v4479
        %v4484 = vrsqrt.pop %v4405
        %v4485 = vmul.f32 %v4484, %v4405
        %v4486 = vmul.f32 %v4485, %v4484
        %v4487 = vmul.f32 0.5, %v4486
        %v4488 = vsub.f32 1.5, %v4487
        %v4489 = vmul.f32 %v4484, %v4488
        %vm4490 = vweird.f32 %v4405
        %vm4491 = vweird.f32 %v4484
        %vm4492 = vmor %vm4490, %vm4491
        %v4493 = vsel %vm4492, %v4484, %v4489
        %v4494 = vrsqrt.pop %v4406
        %v4495 = vmul.f32 %v4494, %v4406
        %v4496 = vmul.f32 %v4495, %v4494
        %v4497 = vmul.f32 0.5, %v4496
        %v4498 = vsub.f32 1.5, %v4497
        %v4499 = vmul.f32 %v4494, %v4498
        %vm4500 = vweird.f32 %v4406
        %vm4501 = vweird.f32 %v4494
        %vm4502 = vmor %vm4500, %vm4501
        %v4503 = vsel %vm4502, %v4494, %v4499
        %v4504 = vrsqrt.pop %v4407
        %v4505 = vmul.f32 %v4504, %v4407
        %v4506 = vmul.f32 %v4505, %v4504
        %v4507 = vmul.f32 0.5, %v4506
        %v4508 = vsub.f32 1.5, %v4507
        %v4509 = vmul.f32 %v4504, %v4508
        %vm4510 = vweird.f32 %v4407
        %vm4511 = vweird.f32 %v4504
        %vm4512 = vmor %vm4510, %vm4511
        %v4513 = vsel %vm4512, %v4504, %v4509
        %v4514 = vrsqrt.pop %v4408
        %v4515 = vmul.f32 %v4514, %v4408
        %v4516 = vmul.f32 %v4515, %v4514
        %v4517 = vmul.f32 0.5, %v4516
        %v4518 = vsub.f32 1.5, %v4517
        %v4519 = vmul.f32 %v4514, %v4518
        %vm4520 = vweird.f32 %v4408
        %vm4521 = vweird.f32 %v4514
        %vm4522 = vmor %vm4520, %vm4521
        %v4523 = vsel %vm4522, %v4514, %v4519
        %v4524 = vrsqrt.pop %v4409
        %v4525 = vmul.f32 %v4524, %v4409
        %v4526 = vmul.f32 %v4525, %v4524
        %v4527 = vmul.f32 0.5, %v4526
        %v4528 = vsub.f32 1.5, %v4527
        %v4529 = vmul.f32 %v4524, %v4528
        %vm4530 = vweird.f32 %v4409
        %vm4531 = vweird.f32 %v4524
        %vm4532 = vmor %vm4530, %vm4531
        %v4533 = vsel %vm4532, %v4524, %v4529
        %v4534 = vrsqrt.pop %v4410
        %v4535 = vmul.f32 %v4534, %v4410
        %v4536 = vmul.f32 %v4535, %v4534
        %v4537 = vmul.f32 0.5, %v4536
        %v4538 = vsub.f32 1.5, %v4537
        %v4539 = vmul.f32 %v4534, %v4538
        %vm4540 = vweird.f32 %v4410
        %vm4541 = vweird.f32 %v4534
        %vm4542 = vmor %vm4540, %vm4541
        %v4543 = vsel %vm4542, %v4534, %v4539
        %v4544 = vrsqrt.pop %v4411
        %v4545 = vmul.f32 %v4544, %v4411
        %v4546 = vmul.f32 %v4545, %v4544
        %v4547 = vmul.f32 0.5, %v4546
        %v4548 = vsub.f32 1.5, %v4547
        %v4549 = vmul.f32 %v4544, %v4548
        %vm4550 = vweird.f32 %v4411
        %vm4551 = vweird.f32 %v4544
        %vm4552 = vmor %vm4550, %vm4551
        %v4553 = vsel %vm4552, %v4544, %v4549
        %v4554 = vrsqrt.pop %v4412
        %v4555 = vmul.f32 %v4554, %v4412
        %v4556 = vmul.f32 %v4555, %v4554
        %v4557 = vmul.f32 0.5, %v4556
        %v4558 = vsub.f32 1.5, %v4557
        %v4559 = vmul.f32 %v4554, %v4558
        %vm4560 = vweird.f32 %v4412
        %vm4561 = vweird.f32 %v4554
        %vm4562 = vmor %vm4560, %vm4561
        %v4563 = vsel %vm4562, %v4554, %v4559
        %v4564 = vrsqrt.pop %v4413
        %v4565 = vmul.f32 %v4564, %v4413
        %v4566 = vmul.f32 %v4565, %v4564
        %v4567 = vmul.f32 0.5, %v4566
        %v4568 = vsub.f32 1.5, %v4567
        %v4569 = vmul.f32 %v4564, %v4568
        %vm4570 = vweird.f32 %v4413
        %vm4571 = vweird.f32 %v4564
        %vm4572 = vmor %vm4570, %vm4571
        %v4573 = vsel %vm4572, %v4564, %v4569
        %v4574 = vmul.f32 %v4318, %v4423
        %v4575 = vmul.f32 %v4319, %v4433
        %v4576 = vmul.f32 %v4320, %v4443
        %v4577 = vmul.f32 %v4321, %v4453
        %v4578 = vmul.f32 %v4322, %v4463
        %v4579 = vmul.f32 %v4323, %v4473
        %v4580 = vmul.f32 %v4324, %v4483
        %v4581 = vmul.f32 %v4325, %v4493
        %v4582 = vmul.f32 %v4326, %v4503
        %v4583 = vmul.f32 %v4327, %v4513
        %v4584 = vmul.f32 %v4328, %v4523
        %v4585 = vmul.f32 %v4329, %v4533
        %v4586 = vmul.f32 %v4330, %v4543
        %v4587 = vmul.f32 %v4331, %v4553
        %v4588 = vmul.f32 %v4332, %v4563
        %v4589 = vmul.f32 %v4333, %v4573
        %v4590 = vld [vmem:[%s11] sm:$0x1]
        %v4592 = vperm.slane %v4590, 0
        %v4594 = vmul.f32 %v4574, %v4592
        %v4595 = vmul.f32 %v4575, %v4592
        %v4596 = vmul.f32 %v4576, %v4592
        %v4597 = vmul.f32 %v4577, %v4592
        %v4598 = vmul.f32 %v4578, %v4592
        %v4599 = vmul.f32 %v4579, %v4592
        %v4600 = vmul.f32 %v4580, %v4592
        %v4601 = vmul.f32 %v4581, %v4592
        %v4602 = vmul.f32 %v4582, %v4592
        %v4603 = vmul.f32 %v4583, %v4592
        %v4604 = vmul.f32 %v4584, %v4592
        %v4605 = vmul.f32 %v4585, %v4592
        %v4606 = vmul.f32 %v4586, %v4592
        %v4607 = vmul.f32 %v4587, %v4592
        %v4608 = vmul.f32 %v4588, %v4592
        %v4609 = vmul.f32 %v4589, %v4592
        %v4610 = vld [vmem:[%s12] sm:$0x1]
        %v4612 = vperm.slane %v4610, 0
        %v4614 = vadd.f32 %v4594, %v4612
        %v4615 = vadd.f32 %v4595, %v4612
        %v4616 = vadd.f32 %v4596, %v4612
        %v4617 = vadd.f32 %v4597, %v4612
        %v4618 = vadd.f32 %v4598, %v4612
        %v4619 = vadd.f32 %v4599, %v4612
        %v4620 = vadd.f32 %v4600, %v4612
        %v4621 = vadd.f32 %v4601, %v4612
        %v4622 = vadd.f32 %v4602, %v4612
        %v4623 = vadd.f32 %v4603, %v4612
        %v4624 = vadd.f32 %v4604, %v4612
        %v4625 = vadd.f32 %v4605, %v4612
        %v4626 = vadd.f32 %v4606, %v4612
        %v4627 = vadd.f32 %v4607, %v4612
        %v4628 = vadd.f32 %v4608, %v4612
        %v4629 = vadd.f32 %v4609, %v4612
        %v4630 = vld [vmem:[#allocation16] sm:$0xff]
        %v4631 = vld [vmem:[#allocation16 + $0x8] sm:$0xff]
        %v4632 = vld [vmem:[#allocation16 + $0x10] sm:$0xff]
        %v4633 = vld [vmem:[#allocation16 + $0x18] sm:$0xff]
        %v4634 = vld [vmem:[#allocation16 + $0x20] sm:$0xff]
        %v4635 = vld [vmem:[#allocation16 + $0x28] sm:$0xff]
        %v4636 = vld [vmem:[#allocation16 + $0x30] sm:$0xff]
        %v4637 = vld [vmem:[#allocation16 + $0x38] sm:$0xff]
        %v4638 = vld [vmem:[#allocation16 + $0x40] sm:$0xff]
        %v4639 = vld [vmem:[#allocation16 + $0x48] sm:$0xff]
        %v4640 = vld [vmem:[#allocation16 + $0x50] sm:$0xff]
        %v4641 = vld [vmem:[#allocation16 + $0x58] sm:$0xff]
        %v4642 = vld [vmem:[#allocation16 + $0x60] sm:$0xff]
        %v4643 = vld [vmem:[#allocation16 + $0x68] sm:$0xff]
        %v4644 = vld [vmem:[#allocation16 + $0x70] sm:$0xff]
        %v4645 = vld [vmem:[#allocation16 + $0x78] sm:$0xff]
        %v4646 = vld [vmem:[#allocation16 + $0x80] sm:$0xff]
        %v4647 = vld [vmem:[#allocation16 + $0x88] sm:$0xff]
        %v4648 = vld [vmem:[#allocation16 + $0x90] sm:$0xff]
        %v4649 = vld [vmem:[#allocation16 + $0x98] sm:$0xff]
        %v4650 = vld [vmem:[#allocation16 + $0xa0] sm:$0xff]
        %v4651 = vld [vmem:[#allocation16 + $0xa8] sm:$0xff]
        %v4652 = vld [vmem:[#allocation16 + $0xb0] sm:$0xff]
        %v4653 = vld [vmem:[#allocation16 + $0xb8] sm:$0xff]
        %v4654 = vld [vmem:[#allocation16 + $0xc0] sm:$0xff]
        %v4655 = vld [vmem:[#allocation16 + $0xc8] sm:$0xff]
        %v4656 = vld [vmem:[#allocation16 + $0xd0] sm:$0xff]
        %v4657 = vld [vmem:[#allocation16 + $0xd8] sm:$0xff]
        %v4658 = vld [vmem:[#allocation16 + $0xe0] sm:$0xff]
        %v4659 = vld [vmem:[#allocation16 + $0xe8] sm:$0xff]
        %v4660 = vld [vmem:[#allocation16 + $0xf0] sm:$0xff]
        %v4661 = vld [vmem:[#allocation16 + $0xf8] sm:$0xff]
        %v4662 = vld [vmem:[%s14] sm:$0x3]
        %v4664 = vperm.slane %v4662, 0
        %v4665 = vperm.slane %v4662, 1
        %4668 = vmatpush.msra.mxu0 %v4660
        %4669 = vmatpush.msra.mxu0 %v4658
        %4670 = vmatpush.msra.mxu0 %v4656
        %4671 = vmatpush.msra.mxu0 %v4654
        %4672 = vmatpush.msra.mxu0 %v4652
        %4673 = vmatpush.msra.mxu0 %v4650
        %4674 = vmatpush.msra.mxu0 %v4648
        %4675 = vmatpush.msra.mxu0 %v4646
        %4676 = vmatpush.msra.mxu0 %v4644
        %4677 = vmatpush.msra.mxu0 %v4642
        %4678 = vmatpush.msra.mxu0 %v4640
        %4679 = vmatpush.msra.mxu0 %v4638
        %4680 = vmatpush.msra.mxu0 %v4636
        %4681 = vmatpush.msra.mxu0 %v4634
        %4682 = vmatpush.msra.mxu0 %v4632
        %4683 = vmatpush.msra.mxu0 %v4630
        %4684 = vmatmul.f32.gmra.mxu0 %v4614
        %v4685 = vpop.f32.mrf.mxu0
        %v4686 = vadd.f32 %v4664, %v4685
        %4687 = vmatmul.f32.gmra.mxu0 %v4615
        %v4688 = vpop.f32.mrf.mxu0
        %v4689 = vadd.f32 %v4664, %v4688
        %4690 = vmatmul.f32.gmra.mxu0 %v4616
        %v4691 = vpop.f32.mrf.mxu0
        %v4692 = vadd.f32 %v4664, %v4691
        %4693 = vmatmul.f32.gmra.mxu0 %v4617
        %v4694 = vpop.f32.mrf.mxu0
        %v4695 = vadd.f32 %v4664, %v4694
        %4696 = vmatmul.f32.gmra.mxu0 %v4618
        %v4697 = vpop.f32.mrf.mxu0
        %v4698 = vadd.f32 %v4664, %v4697
        %4699 = vmatmul.f32.gmra.mxu0 %v4619
        %v4700 = vpop.f32.mrf.mxu0
        %v4701 = vadd.f32 %v4664, %v4700
        %4702 = vmatmul.f32.gmra.mxu0 %v4620
        %v4703 = vpop.f32.mrf.mxu0
        %v4704 = vadd.f32 %v4664, %v4703
        %4705 = vmatmul.f32.gmra.mxu0 %v4621
        %v4706 = vpop.f32.mrf.mxu0
        %v4707 = vadd.f32 %v4664, %v4706
        %4708 = vmatmul.f32.gmra.mxu0 %v4622
        %v4709 = vpop.f32.mrf.mxu0
        %v4710 = vadd.f32 %v4664, %v4709
        %4711 = vmatmul.f32.gmra.mxu0 %v4623
        %v4712 = vpop.f32.mrf.mxu0
        %v4713 = vadd.f32 %v4664, %v4712
        %4714 = vmatmul.f32.gmra.mxu0 %v4624
        %v4715 = vpop.f32.mrf.mxu0
        %v4716 = vadd.f32 %v4664, %v4715
        %4717 = vmatmul.f32.gmra.mxu0 %v4625
        %v4718 = vpop.f32.mrf.mxu0
        %v4719 = vadd.f32 %v4664, %v4718
        %4720 = vmatmul.f32.gmra.mxu0 %v4626
        %v4721 = vpop.f32.mrf.mxu0
        %v4722 = vadd.f32 %v4664, %v4721
        %4723 = vmatmul.f32.gmra.mxu0 %v4627
        %v4724 = vpop.f32.mrf.mxu0
        %v4725 = vadd.f32 %v4664, %v4724
        %4726 = vmatmul.f32.gmra.mxu0 %v4628
        %v4727 = vpop.f32.mrf.mxu0
        %v4728 = vadd.f32 %v4664, %v4727
        %4729 = vmatmul.f32.gmra.mxu0 %v4629
        %v4730 = vpop.f32.mrf.mxu0
        %v4731 = vadd.f32 %v4664, %v4730
        %4732 = vdwg.mxu0
        %4733 = vmatpush.msra.mxu0 %v4661
        %4734 = vmatpush.msra.mxu0 %v4659
        %4735 = vmatpush.msra.mxu0 %v4657
        %4736 = vmatpush.msra.mxu0 %v4655
        %4737 = vmatpush.msra.mxu0 %v4653
        %4738 = vmatpush.msra.mxu0 %v4651
        %4739 = vmatpush.msra.mxu0 %v4649
        %4740 = vmatpush.msra.mxu0 %v4647
        %4741 = vmatpush.msra.mxu0 %v4645
        %4742 = vmatpush.msra.mxu0 %v4643
        %4743 = vmatpush.msra.mxu0 %v4641
        %4744 = vmatpush.msra.mxu0 %v4639
        %4745 = vmatpush.msra.mxu0 %v4637
        %4746 = vmatpush.msra.mxu0 %v4635
        %4747 = vmatpush.msra.mxu0 %v4633
        %4748 = vmatpush.msra.mxu0 %v4631
        %4749 = vmatmul.f32.gmra.mxu0 %v4614
        %v4750 = vpop.f32.mrf.mxu0
        %v4751 = vadd.f32 %v4665, %v4750
        %4752 = vmatmul.f32.gmra.mxu0 %v4615
        %v4753 = vpop.f32.mrf.mxu0
        %v4754 = vadd.f32 %v4665, %v4753
        %4755 = vmatmul.f32.gmra.mxu0 %v4616
        %v4756 = vpop.f32.mrf.mxu0
        %v4757 = vadd.f32 %v4665, %v4756
        %4758 = vmatmul.f32.gmra.mxu0 %v4617
        %v4759 = vpop.f32.mrf.mxu0
        %v4760 = vadd.f32 %v4665, %v4759
        %4761 = vmatmul.f32.gmra.mxu0 %v4618
        %v4762 = vpop.f32.mrf.mxu0
        %v4763 = vadd.f32 %v4665, %v4762
        %4764 = vmatmul.f32.gmra.mxu0 %v4619
        %v4765 = vpop.f32.mrf.mxu0
        %v4766 = vadd.f32 %v4665, %v4765
        %4767 = vmatmul.f32.gmra.mxu0 %v4620
        %v4768 = vpop.f32.mrf.mxu0
        %v4769 = vadd.f32 %v4665, %v4768
        %4770 = vmatmul.f32.gmra.mxu0 %v4621
        %v4771 = vpop.f32.mrf.mxu0
        %v4772 = vadd.f32 %v4665, %v4771
        %4773 = vmatmul.f32.gmra.mxu0 %v4622
        %v4774 = vpop.f32.mrf.mxu0
        %v4775 = vadd.f32 %v4665, %v4774
        %4776 = vmatmul.f32.gmra.mxu0 %v4623
        %v4777 = vpop.f32.mrf.mxu0
        %v4778 = vadd.f32 %v4665, %v4777
        %4779 = vmatmul.f32.gmra.mxu0 %v4624
        %v4780 = vpop.f32.mrf.mxu0
        %v4781 = vadd.f32 %v4665, %v4780
        %4782 = vmatmul.f32.gmra.mxu0 %v4625
        %v4783 = vpop.f32.mrf.mxu0
        %v4784 = vadd.f32 %v4665, %v4783
        %4785 = vmatmul.f32.gmra.mxu0 %v4626
        %v4786 = vpop.f32.mrf.mxu0
        %v4787 = vadd.f32 %v4665, %v4786
        %4788 = vmatmul.f32.gmra.mxu0 %v4627
        %v4789 = vpop.f32.mrf.mxu0
        %v4790 = vadd.f32 %v4665, %v4789
        %4791 = vmatmul.f32.gmra.mxu0 %v4628
        %v4792 = vpop.f32.mrf.mxu0
        %v4793 = vadd.f32 %v4665, %v4792
        %4794 = vmatmul.f32.gmra.mxu0 %v4629
        %v4795 = vpop.f32.mrf.mxu0
        %v4796 = vadd.f32 %v4665, %v4795
        %4797 = vdwg.mxu0
        %v4798 = vmax.f32 %v4686, 0.0
        %v4799 = vmax.f32 %v4751, 0.0
        %v4800 = vmax.f32 %v4689, 0.0
        %v4801 = vmax.f32 %v4754, 0.0
        %v4802 = vmax.f32 %v4692, 0.0
        %v4803 = vmax.f32 %v4757, 0.0
        %v4804 = vmax.f32 %v4695, 0.0
        %v4805 = vmax.f32 %v4760, 0.0
        %v4806 = vmax.f32 %v4698, 0.0
        %v4807 = vmax.f32 %v4763, 0.0
        %v4808 = vmax.f32 %v4701, 0.0
        %v4809 = vmax.f32 %v4766, 0.0
        %v4810 = vmax.f32 %v4704, 0.0
        %v4811 = vmax.f32 %v4769, 0.0
        %v4812 = vmax.f32 %v4707, 0.0
        %v4813 = vmax.f32 %v4772, 0.0
        %v4814 = vmax.f32 %v4710, 0.0
        %v4815 = vmax.f32 %v4775, 0.0
        %v4816 = vmax.f32 %v4713, 0.0
        %v4817 = vmax.f32 %v4778, 0.0
        %v4818 = vmax.f32 %v4716, 0.0
        %v4819 = vmax.f32 %v4781, 0.0
        %v4820 = vmax.f32 %v4719, 0.0
        %v4821 = vmax.f32 %v4784, 0.0
        %v4822 = vmax.f32 %v4722, 0.0
        %v4823 = vmax.f32 %v4787, 0.0
        %v4824 = vmax.f32 %v4725, 0.0
        %v4825 = vmax.f32 %v4790, 0.0
        %v4826 = vmax.f32 %v4728, 0.0
        %v4827 = vmax.f32 %v4793, 0.0
        %v4828 = vmax.f32 %v4731, 0.0
        %v4829 = vmax.f32 %v4796, 0.0
        %v4830 = vld [vmem:[#allocation18] sm:$0xff]
        %v4831 = vld [vmem:[#allocation18 + $0x8] sm:$0xff]
        %v4832 = vld [vmem:[#allocation18 + $0x10] sm:$0xff]
        %v4833 = vld [vmem:[#allocation18 + $0x18] sm:$0xff]
        %v4834 = vld [vmem:[#allocation18 + $0x20] sm:$0xff]
        %v4835 = vld [vmem:[#allocation18 + $0x28] sm:$0xff]
        %v4836 = vld [vmem:[#allocation18 + $0x30] sm:$0xff]
        %v4837 = vld [vmem:[#allocation18 + $0x38] sm:$0xff]
        %v4838 = vld [vmem:[#allocation18 + $0x40] sm:$0xff]
        %v4839 = vld [vmem:[#allocation18 + $0x48] sm:$0xff]
        %v4840 = vld [vmem:[#allocation18 + $0x50] sm:$0xff]
        %v4841 = vld [vmem:[#allocation18 + $0x58] sm:$0xff]
        %v4842 = vld [vmem:[#allocation18 + $0x60] sm:$0xff]
        %v4843 = vld [vmem:[#allocation18 + $0x68] sm:$0xff]
        %v4844 = vld [vmem:[#allocation18 + $0x70] sm:$0xff]
        %v4845 = vld [vmem:[#allocation18 + $0x78] sm:$0xff]
        %v4846 = vld [vmem:[#allocation18 + $0x80] sm:$0xff]
        %v4847 = vld [vmem:[#allocation18 + $0x88] sm:$0xff]
        %v4848 = vld [vmem:[#allocation18 + $0x90] sm:$0xff]
        %v4849 = vld [vmem:[#allocation18 + $0x98] sm:$0xff]
        %v4850 = vld [vmem:[#allocation18 + $0xa0] sm:$0xff]
        %v4851 = vld [vmem:[#allocation18 + $0xa8] sm:$0xff]
        %v4852 = vld [vmem:[#allocation18 + $0xb0] sm:$0xff]
        %v4853 = vld [vmem:[#allocation18 + $0xb8] sm:$0xff]
        %v4854 = vld [vmem:[#allocation18 + $0xc0] sm:$0xff]
        %v4855 = vld [vmem:[#allocation18 + $0xc8] sm:$0xff]
        %v4856 = vld [vmem:[#allocation18 + $0xd0] sm:$0xff]
        %v4857 = vld [vmem:[#allocation18 + $0xd8] sm:$0xff]
        %v4858 = vld [vmem:[#allocation18 + $0xe0] sm:$0xff]
        %v4859 = vld [vmem:[#allocation18 + $0xe8] sm:$0xff]
        %v4860 = vld [vmem:[#allocation18 + $0xf0] sm:$0xff]
        %v4861 = vld [vmem:[#allocation18 + $0xf8] sm:$0xff]
        %v4862 = vld [vmem:[%s16] sm:$0x1]
        %v4864 = vperm.slane %v4862, 0
        %4866 = vmatpush.msra.mxu0 %v4845
        %4867 = vmatpush.msra.mxu0 %v4844
        %4868 = vmatpush.msra.mxu0 %v4843
        %4869 = vmatpush.msra.mxu0 %v4842
        %4870 = vmatpush.msra.mxu0 %v4841
        %4871 = vmatpush.msra.mxu0 %v4840
        %4872 = vmatpush.msra.mxu0 %v4839
        %4873 = vmatpush.msra.mxu0 %v4838
        %4874 = vmatpush.msra.mxu0 %v4837
        %4875 = vmatpush.msra.mxu0 %v4836
        %4876 = vmatpush.msra.mxu0 %v4835
        %4877 = vmatpush.msra.mxu0 %v4834
        %4878 = vmatpush.msra.mxu0 %v4833
        %4879 = vmatpush.msra.mxu0 %v4832
        %4880 = vmatpush.msra.mxu0 %v4831
        %4881 = vmatpush.msra.mxu0 %v4830
        %4882 = vmatmul.f32.gmra.mxu0 %v4798
        %v4883 = vpop.f32.mrf.mxu0
        %v4884 = vadd.f32 %v4864, %v4883
        %4885 = vmatmul.f32.gmra.mxu0 %v4800
        %v4886 = vpop.f32.mrf.mxu0
        %v4887 = vadd.f32 %v4864, %v4886
        %4888 = vmatmul.f32.gmra.mxu0 %v4802
        %v4889 = vpop.f32.mrf.mxu0
        %v4890 = vadd.f32 %v4864, %v4889
        %4891 = vmatmul.f32.gmra.mxu0 %v4804
        %v4892 = vpop.f32.mrf.mxu0
        %v4893 = vadd.f32 %v4864, %v4892
        %4894 = vmatmul.f32.gmra.mxu0 %v4806
        %v4895 = vpop.f32.mrf.mxu0
        %v4896 = vadd.f32 %v4864, %v4895
        %4897 = vmatmul.f32.gmra.mxu0 %v4808
        %v4898 = vpop.f32.mrf.mxu0
        %v4899 = vadd.f32 %v4864, %v4898
        %4900 = vmatmul.f32.gmra.mxu0 %v4810
        %v4901 = vpop.f32.mrf.mxu0
        %v4902 = vadd.f32 %v4864, %v4901
        %4903 = vmatmul.f32.gmra.mxu0 %v4812
        %v4904 = vpop.f32.mrf.mxu0
        %v4905 = vadd.f32 %v4864, %v4904
        %4906 = vmatmul.f32.gmra.mxu0 %v4814
        %v4907 = vpop.f32.mrf.mxu0
        %v4908 = vadd.f32 %v4864, %v4907
        %4909 = vmatmul.f32.gmra.mxu0 %v4816
        %v4910 = vpop.f32.mrf.mxu0
        %v4911 = vadd.f32 %v4864, %v4910
        %4912 = vmatmul.f32.gmra.mxu0 %v4818
        %v4913 = vpop.f32.mrf.mxu0
        %v4914 = vadd.f32 %v4864, %v4913
        %4915 = vmatmul.f32.gmra.mxu0 %v4820
        %v4916 = vpop.f32.mrf.mxu0
        %v4917 = vadd.f32 %v4864, %v4916
        %4918 = vmatmul.f32.gmra.mxu0 %v4822
        %v4919 = vpop.f32.mrf.mxu0
        %v4920 = vadd.f32 %v4864, %v4919
        %4921 = vmatmul.f32.gmra.mxu0 %v4824
        %v4922 = vpop.f32.mrf.mxu0
        %v4923 = vadd.f32 %v4864, %v4922
        %4924 = vmatmul.f32.gmra.mxu0 %v4826
        %v4925 = vpop.f32.mrf.mxu0
        %v4926 = vadd.f32 %v4864, %v4925
        %4927 = vmatmul.f32.gmra.mxu0 %v4828
        %v4928 = vpop.f32.mrf.mxu0
        %v4929 = vadd.f32 %v4864, %v4928
        %4930 = vdwg.mxu0
        %4931 = vmatpush.msra.mxu0 %v4861
        %4932 = vmatpush.msra.mxu0 %v4860
        %4933 = vmatpush.msra.mxu0 %v4859
        %4934 = vmatpush.msra.mxu0 %v4858
        %4935 = vmatpush.msra.mxu0 %v4857
        %4936 = vmatpush.msra.mxu0 %v4856
        %4937 = vmatpush.msra.mxu0 %v4855
        %4938 = vmatpush.msra.mxu0 %v4854
        %4939 = vmatpush.msra.mxu0 %v4853
        %4940 = vmatpush.msra.mxu0 %v4852
        %4941 = vmatpush.msra.mxu0 %v4851
        %4942 = vmatpush.msra.mxu0 %v4850
        %4943 = vmatpush.msra.mxu0 %v4849
        %4944 = vmatpush.msra.mxu0 %v4848
        %4945 = vmatpush.msra.mxu0 %v4847
        %4946 = vmatpush.msra.mxu0 %v4846
        %4947 = vmatmul.f32.gmra.mxu0 %v4799
        %v4948 = vpop.f32.mrf.mxu0
        %v4949 = vadd.f32 %v4884, %v4948
        %4950 = vmatmul.f32.gmra.mxu0 %v4801
        %v4951 = vpop.f32.mrf.mxu0
        %v4952 = vadd.f32 %v4887, %v4951
        %4953 = vmatmul.f32.gmra.mxu0 %v4803
        %v4954 = vpop.f32.mrf.mxu0
        %v4955 = vadd.f32 %v4890, %v4954
        %4956 = vmatmul.f32.gmra.mxu0 %v4805
        %v4957 = vpop.f32.mrf.mxu0
        %v4958 = vadd.f32 %v4893, %v4957
        %4959 = vmatmul.f32.gmra.mxu0 %v4807
        %v4960 = vpop.f32.mrf.mxu0
        %v4961 = vadd.f32 %v4896, %v4960
        %4962 = vmatmul.f32.gmra.mxu0 %v4809
        %v4963 = vpop.f32.mrf.mxu0
        %v4964 = vadd.f32 %v4899, %v4963
        %4965 = vmatmul.f32.gmra.mxu0 %v4811
        %v4966 = vpop.f32.mrf.mxu0
        %v4967 = vadd.f32 %v4902, %v4966
        %4968 = vmatmul.f32.gmra.mxu0 %v4813
        %v4969 = vpop.f32.mrf.mxu0
        %v4970 = vadd.f32 %v4905, %v4969
        %4971 = vmatmul.f32.gmra.mxu0 %v4815
        %v4972 = vpop.f32.mrf.mxu0
        %v4973 = vadd.f32 %v4908, %v4972
        %4974 = vmatmul.f32.gmra.mxu0 %v4817
        %v4975 = vpop.f32.mrf.mxu0
        %v4976 = vadd.f32 %v4911, %v4975
        %4977 = vmatmul.f32.gmra.mxu0 %v4819
        %v4978 = vpop.f32.mrf.mxu0
        %v4979 = vadd.f32 %v4914, %v4978
        %4980 = vmatmul.f32.gmra.mxu0 %v4821
        %v4981 = vpop.f32.mrf.mxu0
        %v4982 = vadd.f32 %v4917, %v4981
        %4983 = vmatmul.f32.gmra.mxu0 %v4823
        %v4984 = vpop.f32.mrf.mxu0
        %v4985 = vadd.f32 %v4920, %v4984
        %4986 = vmatmul.f32.gmra.mxu0 %v4825
        %v4987 = vpop.f32.mrf.mxu0
        %v4988 = vadd.f32 %v4923, %v4987
        %4989 = vmatmul.f32.gmra.mxu0 %v4827
        %v4990 = vpop.f32.mrf.mxu0
        %v4991 = vadd.f32 %v4926, %v4990
        %4992 = vmatmul.f32.gmra.mxu0 %v4829
        %v4993 = vpop.f32.mrf.mxu0
        %v4994 = vadd.f32 %v4929, %v4993
        %4995 = vdwg.mxu0
        %v4996 = vadd.f32 %v4614, %v4949
        %v4997 = vadd.f32 %v4615, %v4952
        %v4998 = vadd.f32 %v4616, %v4955
        %v4999 = vadd.f32 %v4617, %v4958
        %v5000 = vadd.f32 %v4618, %v4961
        %v5001 = vadd.f32 %v4619, %v4964
        %v5002 = vadd.f32 %v4620, %v4967
        %v5003 = vadd.f32 %v4621, %v4970
        %v5004 = vadd.f32 %v4622, %v4973
        %v5005 = vadd.f32 %v4623, %v4976
        %v5006 = vadd.f32 %v4624, %v4979
        %v5007 = vadd.f32 %v4625, %v4982
        %v5008 = vadd.f32 %v4626, %v4985
        %v5009 = vadd.f32 %v4627, %v4988
        %v5010 = vadd.f32 %v4628, %v4991
        %v5011 = vadd.f32 %v4629, %v4994
        %5012 = vadd.xlane.f32.xlu0 %v4996
        %v5013 = vpop.xlane.xlu0 %5012
        %5014 = vadd.xlane.f32.xlu0 %v4997
        %v5015 = vpop.xlane.xlu0 %5014
        %5016 = vadd.xlane.f32.xlu0 %v4998
        %v5017 = vpop.xlane.xlu0 %5016
        %5018 = vadd.xlane.f32.xlu0 %v4999
        %v5019 = vpop.xlane.xlu0 %5018
        %5020 = vadd.xlane.f32.xlu0 %v5000
        %v5021 = vpop.xlane.xlu0 %5020
        %5022 = vadd.xlane.f32.xlu0 %v5001
        %v5023 = vpop.xlane.xlu0 %5022
        %5024 = vadd.xlane.f32.xlu0 %v5002
        %v5025 = vpop.xlane.xlu0 %5024
        %5026 = vadd.xlane.f32.xlu0 %v5003
        %v5027 = vpop.xlane.xlu0 %5026
        %5028 = vadd.xlane.f32.xlu0 %v5004
        %v5029 = vpop.xlane.xlu0 %5028
        %5030 = vadd.xlane.f32.xlu0 %v5005
        %v5031 = vpop.xlane.xlu0 %5030
        %5032 = vadd.xlane.f32.xlu0 %v5006
        %v5033 = vpop.xlane.xlu0 %5032
        %5034 = vadd.xlane.f32.xlu0 %v5007
        %v5035 = vpop.xlane.xlu0 %5034
        %5036 = vadd.xlane.f32.xlu0 %v5008
        %v5037 = vpop.xlane.xlu0 %5036
        %5038 = vadd.xlane.f32.xlu0 %v5009
        %v5039 = vpop.xlane.xlu0 %5038
        %5040 = vadd.xlane.f32.xlu0 %v5010
        %v5041 = vpop.xlane.xlu0 %5040
        %5042 = vadd.xlane.f32.xlu0 %v5011
        %v5043 = vpop.xlane.xlu0 %5042
        %v5044 = vmul.f32 %v5013, %v4301
        %v5045 = vmul.f32 %v5015, %v4301
        %v5046 = vmul.f32 %v5017, %v4301
        %v5047 = vmul.f32 %v5019, %v4301
        %v5048 = vmul.f32 %v5021, %v4301
        %v5049 = vmul.f32 %v5023, %v4301
        %v5050 = vmul.f32 %v5025, %v4301
        %v5051 = vmul.f32 %v5027, %v4301
        %v5052 = vmul.f32 %v5029, %v4301
        %v5053 = vmul.f32 %v5031, %v4301
        %v5054 = vmul.f32 %v5033, %v4301
        %v5055 = vmul.f32 %v5035, %v4301
        %v5056 = vmul.f32 %v5037, %v4301
        %v5057 = vmul.f32 %v5039, %v4301
        %v5058 = vmul.f32 %v5041, %v4301
        %v5059 = vmul.f32 %v5043, %v4301
        %v5060 = vsub.f32 %v4996, %v5044
        %v5061 = vsub.f32 %v4997, %v5045
        %v5062 = vsub.f32 %v4998, %v5046
        %v5063 = vsub.f32 %v4999, %v5047
        %v5064 = vsub.f32 %v5000, %v5048
        %v5065 = vsub.f32 %v5001, %v5049
        %v5066 = vsub.f32 %v5002, %v5050
        %v5067 = vsub.f32 %v5003, %v5051
        %v5068 = vsub.f32 %v5004, %v5052
        %v5069 = vsub.f32 %v5005, %v5053
        %v5070 = vsub.f32 %v5006, %v5054
        %v5071 = vsub.f32 %v5007, %v5055
        %v5072 = vsub.f32 %v5008, %v5056
        %v5073 = vsub.f32 %v5009, %v5057
        %v5074 = vsub.f32 %v5010, %v5058
        %v5075 = vsub.f32 %v5011, %v5059
        %v5076 = vmul.f32 %v5060, %v5060
        %v5077 = vmul.f32 %v5061, %v5061
        %v5078 = vmul.f32 %v5062, %v5062
        %v5079 = vmul.f32 %v5063, %v5063
        %v5080 = vmul.f32 %v5064, %v5064
        %v5081 = vmul.f32 %v5065, %v5065
        %v5082 = vmul.f32 %v5066, %v5066
        %v5083 = vmul.f32 %v5067, %v5067
        %v5084 = vmul.f32 %v5068, %v5068
        %v5085 = vmul.f32 %v5069, %v5069
        %v5086 = vmul.f32 %v5070, %v5070
        %v5087 = vmul.f32 %v5071, %v5071
        %v5088 = vmul.f32 %v5072, %v5072
        %v5089 = vmul.f32 %v5073, %v5073
        %v5090 = vmul.f32 %v5074, %v5074
        %v5091 = vmul.f32 %v5075, %v5075
        %5092 = vadd.xlane.f32.xlu0 %v5076
        %v5093 = vpop.xlane.xlu0 %5092
        %5094 = vadd.xlane.f32.xlu0 %v5077
        %v5095 = vpop.xlane.xlu0 %5094
        %5096 = vadd.xlane.f32.xlu0 %v5078
        %v5097 = vpop.xlane.xlu0 %5096
        %5098 = vadd.xlane.f32.xlu0 %v5079
        %v5099 = vpop.xlane.xlu0 %5098
        %5100 = vadd.xlane.f32.xlu0 %v5080
        %v5101 = vpop.xlane.xlu0 %5100
        %5102 = vadd.xlane.f32.xlu0 %v5081
        %v5103 = vpop.xlane.xlu0 %5102
        %5104 = vadd.xlane.f32.xlu0 %v5082
        %v5105 = vpop.xlane.xlu0 %5104
        %5106 = vadd.xlane.f32.xlu0 %v5083
        %v5107 = vpop.xlane.xlu0 %5106
        %5108 = vadd.xlane.f32.xlu0 %v5084
        %v5109 = vpop.xlane.xlu0 %5108
        %5110 = vadd.xlane.f32.xlu0 %v5085
        %v5111 = vpop.xlane.xlu0 %5110
        %5112 = vadd.xlane.f32.xlu0 %v5086
        %v5113 = vpop.xlane.xlu0 %5112
        %5114 = vadd.xlane.f32.xlu0 %v5087
        %v5115 = vpop.xlane.xlu0 %5114
        %5116 = vadd.xlane.f32.xlu0 %v5088
        %v5117 = vpop.xlane.xlu0 %5116
        %5118 = vadd.xlane.f32.xlu0 %v5089
        %v5119 = vpop.xlane.xlu0 %5118
        %5120 = vadd.xlane.f32.xlu0 %v5090
        %v5121 = vpop.xlane.xlu0 %5120
        %5122 = vadd.xlane.f32.xlu0 %v5091
        %v5123 = vpop.xlane.xlu0 %5122
        %v5124 = vmul.f32 %v5093, %v4301
        %v5125 = vmul.f32 %v5095, %v4301
        %v5126 = vmul.f32 %v5097, %v4301
        %v5127 = vmul.f32 %v5099, %v4301
        %v5128 = vmul.f32 %v5101, %v4301
        %v5129 = vmul.f32 %v5103, %v4301
        %v5130 = vmul.f32 %v5105, %v4301
        %v5131 = vmul.f32 %v5107, %v4301
        %v5132 = vmul.f32 %v5109, %v4301
        %v5133 = vmul.f32 %v5111, %v4301
        %v5134 = vmul.f32 %v5113, %v4301
        %v5135 = vmul.f32 %v5115, %v4301
        %v5136 = vmul.f32 %v5117, %v4301
        %v5137 = vmul.f32 %v5119, %v4301
        %v5138 = vmul.f32 %v5121, %v4301
        %v5139 = vmul.f32 %v5123, %v4301
        %v5140 = vadd.f32 %v5124, 1e-05
        %v5141 = vadd.f32 %v5125, 1e-05
        %v5142 = vadd.f32 %v5126, 1e-05
        %v5143 = vadd.f32 %v5127, 1e-05
        %v5144 = vadd.f32 %v5128, 1e-05
        %v5145 = vadd.f32 %v5129, 1e-05
        %v5146 = vadd.f32 %v5130, 1e-05
        %v5147 = vadd.f32 %v5131, 1e-05
        %v5148 = vadd.f32 %v5132, 1e-05
        %v5149 = vadd.f32 %v5133, 1e-05
        %v5150 = vadd.f32 %v5134, 1e-05
        %v5151 = vadd.f32 %v5135, 1e-05
        %v5152 = vadd.f32 %v5136, 1e-05
        %v5153 = vadd.f32 %v5137, 1e-05
        %v5154 = vadd.f32 %v5138, 1e-05
        %v5155 = vadd.f32 %v5139, 1e-05
        %v5156 = vrsqrt.pop %v5140
        %v5157 = vmul.f32 %v5156, %v5140
        %v5158 = vmul.f32 %v5157, %v5156
        %v5159 = vmul.f32 0.5, %v5158
        %v5160 = vsub.f32 1.5, %v5159
        %v5161 = vmul.f32 %v5156, %v5160
        %vm5162 = vweird.f32 %v5140
        %vm5163 = vweird.f32 %v5156
        %vm5164 = vmor %vm5162, %vm5163
        %v5165 = vsel %vm5164, %v5156, %v5161
        %v5166 = vrsqrt.pop %v5141
        %v5167 = vmul.f32 %v5166, %v5141
        %v5168 = vmul.f32 %v5167, %v5166
        %v5169 = vmul.f32 0.5, %v5168
        %v5170 = vsub.f32 1.5, %v5169
        %v5171 = vmul.f32 %v5166, %v5170
        %vm5172 = vweird.f32 %v5141
        %vm5173 = vweird.f32 %v5166
        %vm5174 = vmor %vm5172, %vm5173
        %v5175 = vsel %vm5174, %v5166, %v5171
        %v5176 = vrsqrt.pop %v5142
        %v5177 = vmul.f32 %v5176, %v5142
        %v5178 = vmul.f32 %v5177, %v5176
        %v5179 = vmul.f32 0.5, %v5178
        %v5180 = vsub.f32 1.5, %v5179
        %v5181 = vmul.f32 %v5176, %v5180
        %vm5182 = vweird.f32 %v5142
        %vm5183 = vweird.f32 %v5176
        %vm5184 = vmor %vm5182, %vm5183
        %v5185 = vsel %vm5184, %v5176, %v5181
        %v5186 = vrsqrt.pop %v5143
        %v5187 = vmul.f32 %v5186, %v5143
        %v5188 = vmul.f32 %v5187, %v5186
        %v5189 = vmul.f32 0.5, %v5188
        %v5190 = vsub.f32 1.5, %v5189
        %v5191 = vmul.f32 %v5186, %v5190
        %vm5192 = vweird.f32 %v5143
        %vm5193 = vweird.f32 %v5186
        %vm5194 = vmor %vm5192, %vm5193
        %v5195 = vsel %vm5194, %v5186, %v5191
        %v5196 = vrsqrt.pop %v5144
        %v5197 = vmul.f32 %v5196, %v5144
        %v5198 = vmul.f32 %v5197, %v5196
        %v5199 = vmul.f32 0.5, %v5198
        %v5200 = vsub.f32 1.5, %v5199
        %v5201 = vmul.f32 %v5196, %v5200
        %vm5202 = vweird.f32 %v5144
        %vm5203 = vweird.f32 %v5196
        %vm5204 = vmor %vm5202, %vm5203
        %v5205 = vsel %vm5204, %v5196, %v5201
        %v5206 = vrsqrt.pop %v5145
        %v5207 = vmul.f32 %v5206, %v5145
        %v5208 = vmul.f32 %v5207, %v5206
        %v5209 = vmul.f32 0.5, %v5208
        %v5210 = vsub.f32 1.5, %v5209
        %v5211 = vmul.f32 %v5206, %v5210
        %vm5212 = vweird.f32 %v5145
        %vm5213 = vweird.f32 %v5206
        %vm5214 = vmor %vm5212, %vm5213
        %v5215 = vsel %vm5214, %v5206, %v5211
        %v5216 = vrsqrt.pop %v5146
        %v5217 = vmul.f32 %v5216, %v5146
        %v5218 = vmul.f32 %v5217, %v5216
        %v5219 = vmul.f32 0.5, %v5218
        %v5220 = vsub.f32 1.5, %v5219
        %v5221 = vmul.f32 %v5216, %v5220
        %vm5222 = vweird.f32 %v5146
        %vm5223 = vweird.f32 %v5216
        %vm5224 = vmor %vm5222, %vm5223
        %v5225 = vsel %vm5224, %v5216, %v5221
        %v5226 = vrsqrt.pop %v5147
        %v5227 = vmul.f32 %v5226, %v5147
        %v5228 = vmul.f32 %v5227, %v5226
        %v5229 = vmul.f32 0.5, %v5228
        %v5230 = vsub.f32 1.5, %v5229
        %v5231 = vmul.f32 %v5226, %v5230
        %vm5232 = vweird.f32 %v5147
        %vm5233 = vweird.f32 %v5226
        %vm5234 = vmor %vm5232, %vm5233
        %v5235 = vsel %vm5234, %v5226, %v5231
        %v5236 = vrsqrt.pop %v5148
        %v5237 = vmul.f32 %v5236, %v5148
        %v5238 = vmul.f32 %v5237, %v5236
        %v5239 = vmul.f32 0.5, %v5238
        %v5240 = vsub.f32 1.5, %v5239
        %v5241 = vmul.f32 %v5236, %v5240
        %vm5242 = vweird.f32 %v5148
        %vm5243 = vweird.f32 %v5236
        %vm5244 = vmor %vm5242, %vm5243
        %v5245 = vsel %vm5244, %v5236, %v5241
        %v5246 = vrsqrt.pop %v5149
        %v5247 = vmul.f32 %v5246, %v5149
        %v5248 = vmul.f32 %v5247, %v5246
        %v5249 = vmul.f32 0.5, %v5248
        %v5250 = vsub.f32 1.5, %v5249
        %v5251 = vmul.f32 %v5246, %v5250
        %vm5252 = vweird.f32 %v5149
        %vm5253 = vweird.f32 %v5246
        %vm5254 = vmor %vm5252, %vm5253
        %v5255 = vsel %vm5254, %v5246, %v5251
        %v5256 = vrsqrt.pop %v5150
        %v5257 = vmul.f32 %v5256, %v5150
        %v5258 = vmul.f32 %v5257, %v5256
        %v5259 = vmul.f32 0.5, %v5258
        %v5260 = vsub.f32 1.5, %v5259
        %v5261 = vmul.f32 %v5256, %v5260
        %vm5262 = vweird.f32 %v5150
        %vm5263 = vweird.f32 %v5256
        %vm5264 = vmor %vm5262, %vm5263
        %v5265 = vsel %vm5264, %v5256, %v5261
        %v5266 = vrsqrt.pop %v5151
        %v5267 = vmul.f32 %v5266, %v5151
        %v5268 = vmul.f32 %v5267, %v5266
        %v5269 = vmul.f32 0.5, %v5268
        %v5270 = vsub.f32 1.5, %v5269
        %v5271 = vmul.f32 %v5266, %v5270
        %vm5272 = vweird.f32 %v5151
        %vm5273 = vweird.f32 %v5266
        %vm5274 = vmor %vm5272, %vm5273
        %v5275 = vsel %vm5274, %v5266, %v5271
        %v5276 = vrsqrt.pop %v5152
        %v5277 = vmul.f32 %v5276, %v5152
        %v5278 = vmul.f32 %v5277, %v5276
        %v5279 = vmul.f32 0.5, %v5278
        %v5280 = vsub.f32 1.5, %v5279
        %v5281 = vmul.f32 %v5276, %v5280
        %vm5282 = vweird.f32 %v5152
        %vm5283 = vweird.f32 %v5276
        %vm5284 = vmor %vm5282, %vm5283
        %v5285 = vsel %vm5284, %v5276, %v5281
        %v5286 = vrsqrt.pop %v5153
        %v5287 = vmul.f32 %v5286, %v5153
        %v5288 = vmul.f32 %v5287, %v5286
        %v5289 = vmul.f32 0.5, %v5288
        %v5290 = vsub.f32 1.5, %v5289
        %v5291 = vmul.f32 %v5286, %v5290
        %vm5292 = vweird.f32 %v5153
        %vm5293 = vweird.f32 %v5286
        %vm5294 = vmor %vm5292, %vm5293
        %v5295 = vsel %vm5294, %v5286, %v5291
        %v5296 = vrsqrt.pop %v5154
        %v5297 = vmul.f32 %v5296, %v5154
        %v5298 = vmul.f32 %v5297, %v5296
        %v5299 = vmul.f32 0.5, %v5298
        %v5300 = vsub.f32 1.5, %v5299
        %v5301 = vmul.f32 %v5296, %v5300
        %vm5302 = vweird.f32 %v5154
        %vm5303 = vweird.f32 %v5296
        %vm5304 = vmor %vm5302, %vm5303
        %v5305 = vsel %vm5304, %v5296, %v5301
        %v5306 = vrsqrt.pop %v5155
        %v5307 = vmul.f32 %v5306, %v5155
        %v5308 = vmul.f32 %v5307, %v5306
        %v5309 = vmul.f32 0.5, %v5308
        %v5310 = vsub.f32 1.5, %v5309
        %v5311 = vmul.f32 %v5306, %v5310
        %vm5312 = vweird.f32 %v5155
        %vm5313 = vweird.f32 %v5306
        %vm5314 = vmor %vm5312, %vm5313
        %v5315 = vsel %vm5314, %v5306, %v5311
        %v5316 = vmul.f32 %v5060, %v5165
        %v5317 = vmul.f32 %v5061, %v5175
        %v5318 = vmul.f32 %v5062, %v5185
        %v5319 = vmul.f32 %v5063, %v5195
        %v5320 = vmul.f32 %v5064, %v5205
        %v5321 = vmul.f32 %v5065, %v5215
        %v5322 = vmul.f32 %v5066, %v5225
        %v5323 = vmul.f32 %v5067, %v5235
        %v5324 = vmul.f32 %v5068, %v5245
        %v5325 = vmul.f32 %v5069, %v5255
        %v5326 = vmul.f32 %v5070, %v5265
        %v5327 = vmul.f32 %v5071, %v5275
        %v5328 = vmul.f32 %v5072, %v5285
        %v5329 = vmul.f32 %v5073, %v5295
        %v5330 = vmul.f32 %v5074, %v5305
        %v5331 = vmul.f32 %v5075, %v5315
        %v5332 = vld [vmem:[%s17] sm:$0x1]
        %v5334 = vperm.slane %v5332, 0
        %v5336 = vmul.f32 %v5316, %v5334
        %v5337 = vmul.f32 %v5317, %v5334
        %v5338 = vmul.f32 %v5318, %v5334
        %v5339 = vmul.f32 %v5319, %v5334
        %v5340 = vmul.f32 %v5320, %v5334
        %v5341 = vmul.f32 %v5321, %v5334
        %v5342 = vmul.f32 %v5322, %v5334
        %v5343 = vmul.f32 %v5323, %v5334
        %v5344 = vmul.f32 %v5324, %v5334
        %v5345 = vmul.f32 %v5325, %v5334
        %v5346 = vmul.f32 %v5326, %v5334
        %v5347 = vmul.f32 %v5327, %v5334
        %v5348 = vmul.f32 %v5328, %v5334
        %v5349 = vmul.f32 %v5329, %v5334
        %v5350 = vmul.f32 %v5330, %v5334
        %v5351 = vmul.f32 %v5331, %v5334
        %v5352 = vld [vmem:[%s18] sm:$0x1]
        %v5354 = vperm.slane %v5352, 0
        %v5356 = vadd.f32 %v5336, %v5354
        %v5357 = vadd.f32 %v5337, %v5354
        %v5358 = vadd.f32 %v5338, %v5354
        %v5359 = vadd.f32 %v5339, %v5354
        %v5360 = vadd.f32 %v5340, %v5354
        %v5361 = vadd.f32 %v5341, %v5354
        %v5362 = vadd.f32 %v5342, %v5354
        %v5363 = vadd.f32 %v5343, %v5354
        %v5364 = vadd.f32 %v5344, %v5354
        %v5365 = vadd.f32 %v5345, %v5354
        %v5366 = vadd.f32 %v5346, %v5354
        %v5367 = vadd.f32 %v5347, %v5354
        %v5368 = vadd.f32 %v5348, %v5354
        %v5369 = vadd.f32 %v5349, %v5354
        %v5370 = vadd.f32 %v5350, %v5354
        %v5371 = vadd.f32 %v5351, %v5354
        %5372 = vst [vmem:[%s820] sm:$0xff] %v5356
        %5373 = vst [vmem:[%s820 + $0x8] sm:$0xff] %v5357
        %5374 = vst [vmem:[%s820 + $0x10] sm:$0xff] %v5358
        %5375 = vst [vmem:[%s820 + $0x18] sm:$0xff] %v5359
        %5376 = vst [vmem:[%s820 + $0x20] sm:$0xff] %v5360
        %5377 = vst [vmem:[%s820 + $0x28] sm:$0xff] %v5361
        %5378 = vst [vmem:[%s820 + $0x30] sm:$0xff] %v5362
        %5379 = vst [vmem:[%s820 + $0x38] sm:$0xff] %v5363
        %5380 = vst [vmem:[%s820 + $0x40] sm:$0xff] %v5364
        %5381 = vst [vmem:[%s820 + $0x48] sm:$0xff] %v5365
        %5382 = vst [vmem:[%s820 + $0x50] sm:$0xff] %v5366
        %5383 = vst [vmem:[%s820 + $0x58] sm:$0xff] %v5367
        %5384 = vst [vmem:[%s820 + $0x60] sm:$0xff] %v5368
        %5385 = vst [vmem:[%s820 + $0x68] sm:$0xff] %v5369
        %5386 = vst [vmem:[%s820 + $0x70] sm:$0xff] %v5370
        %5387 = vst [vmem:[%s820 + $0x78] sm:$0xff] %v5371
        %s5388 = sand.u32 %s480, 1
        %s5389 = scalar_lea.sflag [#allocation6], %s5388
        %s5390 = sand.u32 %s480, 1
        %s5391 = smul.addr %s5390, 128
        %s5392 = scalar_lea.vmem [#allocation19], %s5391
        // Predicated region
        $region137: #{tpu_custom_call.1} parent=95 // pred_check
          %p5393 = pneg %p490
        $region138: #{tpu_custom_call.1} parent=95 // pred_check_branch
          %5395 = sbr.rel (%p5393) target = $region140
        $region139: #{tpu_custom_call.1} parent=95 // pred_region
          %s5396 = smul.u32 16, %s47
          %5398 = vsyncadd %s5389, 0
          %s5399 = smul.addr %s46, 16
          %s5400 = sadd.s32 %s5396, %s5399
          %s5401 = smul.addr %s5400, 8
          %s5402 = scalar_lea.hbm %s19, %s5401
          %s5403 = sshll.u32 %s5392, 4
          %s5404 = int_to_ptr.vmem [resolvable:$true] %s5403
          %s5405 = sshll.u32 %s5402, 4
          %s5406 = int_to_ptr.hbm [resolvable:$true] %s5405
          %5411 = dma.vmem_to_hbm [thread:$0]  %s5404, 2048, %s5406, %s5389, 128, 128, 8
        $region140: #{tpu_custom_call.1} parent=95 // pred_fallthru
          _
      $region96: #{tpu_custom_call.1} parent=5 // pred_fallthru
        _
      %p5412 = scmp.le.s32.totalorder 2, %s37
      // Predicated region
      $region141: #{tpu_custom_call.1} parent=5 // pred_check
        %p5413 = pneg %p5412
      $region142: #{tpu_custom_call.1} parent=5 // pred_check_branch
        %5415 = sbr.rel (%p5413) target = $region144
      $region143: #{tpu_custom_call.1} parent=5 // pred_region
        %s5416 = ssub.s32 %s37, 2
        // Predicated region
        $region145: #{tpu_custom_call.1} parent=143 // pred_check
          %p5417 = pneg %p496
        $region146: #{tpu_custom_call.1} parent=143 // pred_check_branch
          %5419 = sbr.rel (%p5417) target = $region148
        $region147: #{tpu_custom_call.1} parent=143 // pred_region
          %s5420 = sand.u32 %s481, 1
          %s5421 = scalar_lea.sflag [#allocation6], %s5420
          %s5422 = sand.u32 %s481, 1
          %s5423 = smul.addr %s5422, 128
          %s5424 = scalar_lea.vmem [#allocation19], %s5423
          %5426 = dma.done %s5421, 2048
        $region148: #{tpu_custom_call.1} parent=143 // pred_fallthru
          _
      $region144: #{tpu_custom_call.1} parent=5 // pred_fallthru
        _
    $region6: #{tpu_custom_call.1} parent=1 // loop_footer
      %s41 = sadd.s32 1, %s37
    $region7: #{tpu_custom_call.1} parent=1 // loop_footer_branch
      %36 = sbr.rel target = $region3
    $region8: #{tpu_custom_call.1} parent=1 // loop_exit
      _
    %5427 = vsyncpa [#allocation5], 1
    %s5428 = scalar_lea.sflag [#allocation5], 1
    %5429 = vsyncpa %s5428, 1
    %5430 = vsyncpa [#allocation8], 1
    %s5431 = scalar_lea.sflag [#allocation8], 1
    %5432 = vsyncpa %s5431, 1
    %5433 = vsyncpa [#allocation11], 1
    %5434 = vsyncpa [#allocation14], 1
    %5435 = vsyncpa [#allocation17], 1
    %5436 = vsyncpa [#allocation6], 1
    %s5437 = scalar_lea.sflag [#allocation6], 1
    %5438 = vsyncpa %s5437, 1

</llo_original>
